<compile_context>
chip_gen: v7x
topology: tpu7x:2x2x1
jax: 0.10.0
libtpu: 0.0.40
codegen_flags: <defaults>
</compile_context>

<pallas_src>
import functools

import numpy as np
import jax
import jax.numpy as jnp
from jax import lax
from jax.experimental import pallas as pl
from jax.experimental.pallas import tpu as pltpu


def _soft_trine(v):
    # torch.where(x >= 0, |x - 2*floor((x+1)/2)|, x / (1 + |x|))
    pos = jnp.abs(v - 2.0 * jnp.floor((v + 1.0) * 0.5))
    d = 1.0 + jnp.abs(v)
    r = pl.reciprocal(d, approx=True)      # EUP slot (free w.r.t. the VALU)
    r = r * (2.0 - d * r)                  # one Newton-Raphson step -> ~f32 accuracy
    return jnp.where(v >= 0, pos, v * r)


def _resnet_st_kernel(x_ref, w1s_ref, wstk_ref, bstk_ref, wout_ref, o_ref, *,
                      chunk, unroll):
    dot = functools.partial(jnp.dot, preferred_element_type=jnp.float32)
    m = wstk_ref.shape[1]
    tile_n = x_ref.shape[1]
    num_chunks = tile_n // chunk

    def body(c, carry):
        off = pl.multiple_of(c * chunk, chunk)
        x = x_ref[:, pl.ds(off, chunk)]                    # (dim+1, C), batch on lanes

        # One MXU push: rows [:m] = Ix^T @ x (skip term), rows [m:] = W1 @ x + b1.
        sw = dot(w1s_ref[...], x)                          # (2m, C)
        s = sw[:m, :]
        y = _soft_trine(sw[m:, :])                                   # fc1 (+bias fused)
        y = _soft_trine(dot(wstk_ref[0], y) + bstk_ref[0])           # fc2
        y = y + s
        s = y
        y = _soft_trine(dot(wstk_ref[1], y) + bstk_ref[1])           # fc3
        y = _soft_trine(dot(wstk_ref[2], y) + bstk_ref[2])           # fc4
        y = y + s
        s = y
        y = _soft_trine(dot(wstk_ref[3], y) + bstk_ref[3])           # fc5
        y = _soft_trine(dot(wstk_ref[4], y) + bstk_ref[4])           # fc6
        y = y + s

        # outlayer (no bias): unmasked lane-dense (1, C) store.
        o_ref[:, pl.ds(off, chunk)] = dot(wout_ref[...], y).astype(o_ref.dtype)
        return carry

    lax.fori_loop(0, num_chunks, body, 0,
                  unroll=max(1, min(unroll, num_chunks)))


def init_params(key, m, dim=2):
    """Deterministic init mirroring nn.Linear default U(-1/sqrt(fan_in), +).

    Weights kept in torch layout (out_features, in_features); biases as (out, 1).
    """
    def linear(k, fan_in, fan_out, bias=True):
        kw, kb = jax.random.split(k)
        bound = 1.0 / np.sqrt(fan_in)
        w = jax.random.uniform(kw, (fan_out, fan_in), jnp.float32, -bound, bound)
        b = (jax.random.uniform(kb, (fan_out, 1), jnp.float32, -bound, bound)
             if bias else None)
        return w, b

    keys = jax.random.split(key, 7)
    return {
        "fc1": linear(keys[0], dim, m),
        "fc2": linear(keys[1], m, m),
        "fc3": linear(keys[2], m, m),
        "fc4": linear(keys[3], m, m),
        "fc5": linear(keys[4], m, m),
        "fc6": linear(keys[5], m, m),
        "out": linear(keys[6], m, 1, bias=False)[0],   # (1, m), no bias
    }


def _round_up(v, mult):
    return ((v + mult - 1) // mult) * mult


def resnet_st_base_forward(params, x, boundary_control_type="none",
                           base_function=None, tile_n=16384, chunk=256, unroll=4):
    """Forward pass of ResNet_ST_base. x: (N, dim) float32. Returns (N,) (or None)."""
    x = jnp.asarray(x, jnp.float32)
    N, dim = x.shape
    w1, b1 = params["fc1"]
    m = w1.shape[0]

    # --- pack weights --------------------------------------------------------
    # Fused fc1 block: [ Ix^T | 0 ; W1 | b1 ] @ [ x ; 1 ].
    ix_t = jnp.zeros((m, dim), jnp.float32).at[0, 0].set(1.0).at[1, 1].set(1.0)
    w1s = jnp.concatenate(
        [jnp.concatenate([ix_t, jnp.zeros((m, 1), jnp.float32)], axis=1),
         jnp.concatenate([w1, b1], axis=1)], axis=0)                  # (2m, dim+1)
    wstk = jnp.stack([params["fc2"][0], params["fc3"][0], params["fc4"][0],
                      params["fc5"][0], params["fc6"][0]], axis=0)    # (5, m, m)
    bstk = jnp.stack([params["fc2"][1], params["fc3"][1], params["fc4"][1],
                      params["fc5"][1], params["fc6"][1]], axis=0)    # (5, m, 1)
    wout = params["out"]                                              # (1, m)

    # --- tiling ---------------------------------------------------------------
    chunk = _round_up(max(128, int(chunk)), 128)
    n_ceil = _round_up(N, chunk)
    tile_n = _round_up(max(chunk, min(int(tile_n), n_ceil)), chunk)
    n_pad = _round_up(N, tile_n)
    grid = (n_pad // tile_n,)
    num_chunks = tile_n // chunk

    # Transpose, zero-pad the batch onto the lane axis, append the ones (bias) row.
    xt = jnp.zeros((dim + 1, n_pad), jnp.float32)
    xt = xt.at[:dim, :N].set(x.T)
    xt = xt.at[dim, :].set(1.0)

    # --- VMEM budget / compiler params ----------------------------------------
    m_pad = _round_up(m, 8)
    weight_bytes = 4 * int(w1s.size + wstk.size + bstk.size + wout.size)
    est = (2 * 4 * 8 * tile_n              # double-buffered x tile (rows pad to 8)
           + 2 * 4 * 8 * tile_n            # double-buffered out tile
           + 2 * weight_bytes              # resident weights (+ unused 2nd buffers)
           + 4 * 12 * m_pad * chunk * max(1, min(unroll, num_chunks)))  # loop temps
    vmem_limit = int(min(max(2 * est, 32 * 1024 * 1024), 48 * 1024 * 1024))

    cost = pl.CostEstimate(
        flops=int(2 * n_pad * (2 * m * (dim + 1) + 5 * m * m + m)),
        transcendentals=int(6 * m * n_pad),     # one EUP reciprocal per activation elt
        bytes_accessed=int(4 * (dim + 2) * n_pad + weight_bytes))

    const2 = lambda i: (0, 0)
    const3 = lambda i: (0, 0, 0)
    kernel = functools.partial(_resnet_st_kernel, chunk=chunk, unroll=unroll)

    y2d = pl.pallas_call(
        kernel,
        out_shape=jax.ShapeDtypeStruct((1, n_pad), jnp.float32),
        grid=grid,
        in_specs=[pl.BlockSpec((dim + 1, tile_n), lambda i: (0, i)),
                  pl.BlockSpec(w1s.shape, const2),     # resident, never re-DMA'd
                  pl.BlockSpec(wstk.shape, const3),
                  pl.BlockSpec(bstk.shape, const3),
                  pl.BlockSpec(wout.shape, const2)],
        out_specs=pl.BlockSpec((1, tile_n), lambda i: (0, i)),
        compiler_params=pltpu.CompilerParams(
            # TODO(synk): on v7x switch to pltpu.CORE_PARALLEL if xprof shows one
            # TensorCore idle; "parallel" is kept since it is valid on every
            # generation (v5e/v6e have a single TensorCore).
            dimension_semantics=("parallel",),
            vmem_limit_bytes=vmem_limit),
        cost_estimate=cost,
    )(xt, w1s, wstk, bstk, wout)
    y = y2d[0, :N]                                                    # y.squeeze(1)

    x1 = x[:, 0]
    x2 = x[:, 1]
    if base_function is None:
        if boundary_control_type == "none":
            return y
        elif boundary_control_type == "net_u":
            # NOTE: intentionally reproduces the reference's precedence:
            # (x1**2 + x2**2) ** 1 / 2  ==  (x1**2 + x2**2) / 2
            r = (x1 ** 2 + x2 ** 2) ** 1 / 2
            base = jnp.where(x1 > -0.5, 0.0, 1.0)
            return (np.pi / 2 - jnp.arctan(-x1 / x2)) * jnp.sin(np.pi / 2 * r) * y + base
        elif boundary_control_type == "net_v":
            return (-np.pi / 2 - jnp.arctan(-x1 / x2)) * y
        # TODO(synk): boundary_control_type='cube' with base_function=None falls
        # through every branch in the reference and returns None; nothing to compute.
        return None
    elif boundary_control_type == "net_u":
        r = (x1 ** 2 + x2 ** 2) ** 1 / 2
        return ((np.pi / 2 - jnp.arctan(-x1 / x2)) * jnp.sin(np.pi / 2 * r) * y
                + base_function(x))
    return None


def _reference_forward(params, x):
    """Pure-JAX reference of the 'none' path (exact division), for a self-check."""
    def st(v):
        return jnp.where(v >= 0, jnp.abs(v - 2 * jnp.floor((v + 1) / 2)),
                         v / (1 + jnp.abs(v)))

    w1, b1 = params["fc1"]
    m, dim = w1.shape
    ix = jnp.zeros((dim, m), jnp.float32).at[0, 0].set(1.0).at[1, 1].set(1.0)
    s = x @ ix
    y = st(x @ w1.T + b1.T)
    y = st(y @ params["fc2"][0].T + params["fc2"][1].T)
    y = y + s
    s = y
    y = st(y @ params["fc3"][0].T + params["fc3"][1].T)
    y = st(y @ params["fc4"][0].T + params["fc4"][1].T)
    y = y + s
    s = y
    y = st(y @ params["fc5"][0].T + params["fc5"][1].T)
    y = st(y @ params["fc6"][0].T + params["fc6"][1].T)
    y = y + s
    return (y @ params["out"].T)[:, 0]


if __name__ == "__main__":
    m, dim, N = 32, 2, 300                       # small demo shapes; N not a tile multiple
    key = jax.random.PRNGKey(0)
    kp, kx = jax.random.split(key)

    params = init_params(kp, m, dim)
    x = jax.random.uniform(kx, (N, dim), jnp.float32, -1.0, 1.0)

    # tile_n=256, chunk=128 -> 2 grid steps x 2 inner chunks (exercises pipelining,
    # the unrolled inner lane-chunk loop, and the zero-padded last tile).
    y = jax.block_until_ready(
        resnet_st_base_forward(params, x, boundary_control_type="none",
                               tile_n=256, chunk=128, unroll=2))

    y_ref = _reference_forward(params, x)
    # Tight tolerance: the approx reciprocal is Newton-Raphson refined, so only
    # MXU-vs-XLA f32 matmul decomposition differences remain.
    np.testing.assert_allclose(np.asarray(y), np.asarray(y_ref), rtol=5e-4, atol=5e-4)

    # exercise the net_u / net_v boundary-controlled variants too
    yu = jax.block_until_ready(
        resnet_st_base_forward(params, x, "net_u", tile_n=256, chunk=128, unroll=2))
    yv = jax.block_until_ready(
        resnet_st_base_forward(params, x, "net_v", tile_n=256, chunk=128, unroll=2))
    assert y.shape == (N,) and yu.shape == (N,) and yv.shape == (N,)
    assert np.all(np.isfinite(np.asarray(y)))

    print("KERNEL_OK")
</pallas_src>

<mosaic_0001>
module attributes {stable_mosaic.version = 11 : i64} {
  func.func @_resnet_st_kernel(%arg0: i32, %arg1: memref<3x256xf32, #tpu.memory_space<vmem>>, %arg2: memref<64x3xf32, #tpu.memory_space<vmem>>, %arg3: memref<5x32x32xf32, #tpu.memory_space<vmem>>, %arg4: memref<5x32x1xf32, #tpu.memory_space<vmem>>, %arg5: memref<1x32xf32, #tpu.memory_space<vmem>>, %arg6: memref<1x256xf32, #tpu.memory_space<vmem>>) attributes {dimension_semantics = [#tpu.dimension_semantics<parallel>], iteration_bounds = array<i64: 2>, scalar_prefetch = 0 : i64, scratch_operands = 0 : i64, tpu.core_type = #tpu.core_type<tc>, window_params = [{transform_indices = @transform_0, window_bounds = array<i64: 3, 256>}, {pipeline_mode = #tpu.pipeline_mode<synchronous>, transform_indices = @transform_1, window_bounds = array<i64: 64, 3>}, {pipeline_mode = #tpu.pipeline_mode<synchronous>, transform_indices = @transform_2, window_bounds = array<i64: 5, 32, 32>}, {pipeline_mode = #tpu.pipeline_mode<synchronous>, transform_indices = @transform_3, window_bounds = array<i64: 5, 32, 1>}, {pipeline_mode = #tpu.pipeline_mode<synchronous>, transform_indices = @transform_4, window_bounds = array<i64: 1, 32>}, {transform_indices = @transform_5, window_bounds = array<i64: 1, 256>}]} {
    %c0_i32 = arith.constant 0 : i32
    %c128_i32 = arith.constant 128 : i32
    %0 = arith.muli %c0_i32, %c128_i32 : i32
    %1 = tpu.assume_multiple %0, 128 : i32
    %c0 = arith.constant 0 : index
    %2 = arith.index_cast %1 : i32 to index
    %3 = vector.load %arg1[%c0, %2] : memref<3x256xf32, #tpu.memory_space<vmem>>, vector<3x128xf32>
    %c0_0 = arith.constant 0 : index
    %c0_1 = arith.constant 0 : index
    %4 = vector.load %arg2[%c0_0, %c0_1] : memref<64x3xf32, #tpu.memory_space<vmem>>, vector<64x3xf32>
    %cst = arith.constant dense<0.000000e+00> : vector<64x128xf32>
    %5 = tpu.matmul %4, %3, %cst {dimension_numbers = #tpu.dot_dimension_numbers<[1], [0], [0], [1], [0, 0, 1, 1], [], []>} : vector<64x3xf32>, vector<3x128xf32>, vector<64x128xf32> -> vector<64x128xf32>
    %6 = vector.extract_strided_slice %5 {offsets = [0, 0], sizes = [32, 128], strides = [1, 1]} : vector<64x128xf32> to vector<32x128xf32>
    %7 = vector.extract_strided_slice %5 {offsets = [32, 0], sizes = [32, 128], strides = [1, 1]} : vector<64x128xf32> to vector<32x128xf32>
    %cst_2 = arith.constant 1.000000e+00 : f32
    %8 = vector.broadcast %cst_2 : f32 to vector<32x128xf32>
    %9 = arith.addf %7, %8 : vector<32x128xf32>
    %cst_3 = arith.constant 5.000000e-01 : f32
    %10 = vector.broadcast %cst_3 : f32 to vector<32x128xf32>
    %11 = arith.mulf %9, %10 : vector<32x128xf32>
    %12 = math.floor %11 : vector<32x128xf32>
    %cst_4 = arith.constant 2.000000e+00 : f32
    %13 = vector.broadcast %cst_4 : f32 to vector<32x128xf32>
    %14 = arith.mulf %13, %12 : vector<32x128xf32>
    %15 = arith.subf %7, %14 : vector<32x128xf32>
    %16 = math.absf %15 : vector<32x128xf32>
    %17 = math.absf %7 : vector<32x128xf32>
    %cst_5 = arith.constant 1.000000e+00 : f32
    %18 = vector.broadcast %cst_5 : f32 to vector<32x128xf32>
    %19 = arith.addf %18, %17 : vector<32x128xf32>
    %20 = tpu.reciprocal %19 {approx = true} : vector<32x128xf32> -> vector<32x128xf32>
    %21 = arith.mulf %19, %20 : vector<32x128xf32>
    %cst_6 = arith.constant 2.000000e+00 : f32
    %22 = vector.broadcast %cst_6 : f32 to vector<32x128xf32>
    %23 = arith.subf %22, %21 : vector<32x128xf32>
    %24 = arith.mulf %20, %23 : vector<32x128xf32>
    %cst_7 = arith.constant 0.000000e+00 : f32
    %25 = vector.broadcast %cst_7 : f32 to vector<32x128xf32>
    %26 = arith.cmpf oge, %7, %25 : vector<32x128xf32>
    %27 = arith.mulf %7, %24 : vector<32x128xf32>
    %28 = arith.select %26, %16, %27 : vector<32x128xi1>, vector<32x128xf32>
    %c0_8 = arith.constant 0 : index
    %c0_9 = arith.constant 0 : index
    %c0_10 = arith.constant 0 : index
    %29 = vector.load %arg3[%c0_8, %c0_9, %c0_10] : memref<5x32x32xf32, #tpu.memory_space<vmem>>, vector<1x32x32xf32>
    %30 = vector.shape_cast %29 : vector<1x32x32xf32> to vector<32x32xf32>
    %cst_11 = arith.constant dense<0.000000e+00> : vector<32x128xf32>
    %31 = tpu.matmul %30, %28, %cst_11 {dimension_numbers = #tpu.dot_dimension_numbers<[1], [0], [0], [1], [0, 0, 1, 1], [], []>} : vector<32x32xf32>, vector<32x128xf32>, vector<32x128xf32> -> vector<32x128xf32>
    %c0_12 = arith.constant 0 : index
    %c0_13 = arith.constant 0 : index
    %c0_14 = arith.constant 0 : index
    %32 = vector.load %arg4[%c0_12, %c0_13, %c0_14] : memref<5x32x1xf32, #tpu.memory_space<vmem>>, vector<1x32x1xf32>
    %33 = vector.shape_cast %32 : vector<1x32x1xf32> to vector<32x1xf32>
    %34 = vector.broadcast %33 : vector<32x1xf32> to vector<32x128xf32>
    %35 = arith.addf %31, %34 : vector<32x128xf32>
    %cst_15 = arith.constant 1.000000e+00 : f32
    %36 = vector.broadcast %cst_15 : f32 to vector<32x128xf32>
    %37 = arith.addf %35, %36 : vector<32x128xf32>
    %cst_16 = arith.constant 5.000000e-01 : f32
    %38 = vector.broadcast %cst_16 : f32 to vector<32x128xf32>
    %39 = arith.mulf %37, %38 : vector<32x128xf32>
    %40 = math.floor %39 : vector<32x128xf32>
    %cst_17 = arith.constant 2.000000e+00 : f32
    %41 = vector.broadcast %cst_17 : f32 to vector<32x128xf32>
    %42 = arith.mulf %41, %40 : vector<32x128xf32>
    %43 = arith.subf %35, %42 : vector<32x128xf32>
    %44 = math.absf %43 : vector<32x128xf32>
    %45 = math.absf %35 : vector<32x128xf32>
    %cst_18 = arith.constant 1.000000e+00 : f32
    %46 = vector.broadcast %cst_18 : f32 to vector<32x128xf32>
    %47 = arith.addf %46, %45 : vector<32x128xf32>
    %48 = tpu.reciprocal %47 {approx = true} : vector<32x128xf32> -> vector<32x128xf32>
    %49 = arith.mulf %47, %48 : vector<32x128xf32>
    %cst_19 = arith.constant 2.000000e+00 : f32
    %50 = vector.broadcast %cst_19 : f32 to vector<32x128xf32>
    %51 = arith.subf %50, %49 : vector<32x128xf32>
    %52 = arith.mulf %48, %51 : vector<32x128xf32>
    %cst_20 = arith.constant 0.000000e+00 : f32
    %53 = vector.broadcast %cst_20 : f32 to vector<32x128xf32>
    %54 = arith.cmpf oge, %35, %53 : vector<32x128xf32>
    %55 = arith.mulf %35, %52 : vector<32x128xf32>
    %56 = arith.select %54, %44, %55 : vector<32x128xi1>, vector<32x128xf32>
    %57 = arith.addf %56, %6 : vector<32x128xf32>
    %c1 = arith.constant 1 : index
    %c0_21 = arith.constant 0 : index
    %c0_22 = arith.constant 0 : index
    %58 = vector.load %arg3[%c1, %c0_21, %c0_22] : memref<5x32x32xf32, #tpu.memory_space<vmem>>, vector<1x32x32xf32>
    %59 = vector.shape_cast %58 : vector<1x32x32xf32> to vector<32x32xf32>
    %cst_23 = arith.constant dense<0.000000e+00> : vector<32x128xf32>
    %60 = tpu.matmul %59, %57, %cst_23 {dimension_numbers = #tpu.dot_dimension_numbers<[1], [0], [0], [1], [0, 0, 1, 1], [], []>} : vector<32x32xf32>, vector<32x128xf32>, vector<32x128xf32> -> vector<32x128xf32>
    %c1_24 = arith.constant 1 : index
    %c0_25 = arith.constant 0 : index
    %c0_26 = arith.constant 0 : index
    %61 = vector.load %arg4[%c1_24, %c0_25, %c0_26] : memref<5x32x1xf32, #tpu.memory_space<vmem>>, vector<1x32x1xf32>
    %62 = vector.shape_cast %61 : vector<1x32x1xf32> to vector<32x1xf32>
    %63 = vector.broadcast %62 : vector<32x1xf32> to vector<32x128xf32>
    %64 = arith.addf %60, %63 : vector<32x128xf32>
    %cst_27 = arith.constant 1.000000e+00 : f32
    %65 = vector.broadcast %cst_27 : f32 to vector<32x128xf32>
    %66 = arith.addf %64, %65 : vector<32x128xf32>
    %cst_28 = arith.constant 5.000000e-01 : f32
    %67 = vector.broadcast %cst_28 : f32 to vector<32x128xf32>
    %68 = arith.mulf %66, %67 : vector<32x128xf32>
    %69 = math.floor %68 : vector<32x128xf32>
    %cst_29 = arith.constant 2.000000e+00 : f32
    %70 = vector.broadcast %cst_29 : f32 to vector<32x128xf32>
    %71 = arith.mulf %70, %69 : vector<32x128xf32>
    %72 = arith.subf %64, %71 : vector<32x128xf32>
    %73 = math.absf %72 : vector<32x128xf32>
    %74 = math.absf %64 : vector<32x128xf32>
    %cst_30 = arith.constant 1.000000e+00 : f32
    %75 = vector.broadcast %cst_30 : f32 to vector<32x128xf32>
    %76 = arith.addf %75, %74 : vector<32x128xf32>
    %77 = tpu.reciprocal %76 {approx = true} : vector<32x128xf32> -> vector<32x128xf32>
    %78 = arith.mulf %76, %77 : vector<32x128xf32>
    %cst_31 = arith.constant 2.000000e+00 : f32
    %79 = vector.broadcast %cst_31 : f32 to vector<32x128xf32>
    %80 = arith.subf %79, %78 : vector<32x128xf32>
    %81 = arith.mulf %77, %80 : vector<32x128xf32>
    %cst_32 = arith.constant 0.000000e+00 : f32
    %82 = vector.broadcast %cst_32 : f32 to vector<32x128xf32>
    %83 = arith.cmpf oge, %64, %82 : vector<32x128xf32>
    %84 = arith.mulf %64, %81 : vector<32x128xf32>
    %85 = arith.select %83, %73, %84 : vector<32x128xi1>, vector<32x128xf32>
    %c2 = arith.constant 2 : index
    %c0_33 = arith.constant 0 : index
    %c0_34 = arith.constant 0 : index
    %86 = vector.load %arg3[%c2, %c0_33, %c0_34] : memref<5x32x32xf32, #tpu.memory_space<vmem>>, vector<1x32x32xf32>
    %87 = vector.shape_cast %86 : vector<1x32x32xf32> to vector<32x32xf32>
    %cst_35 = arith.constant dense<0.000000e+00> : vector<32x128xf32>
    %88 = tpu.matmul %87, %85, %cst_35 {dimension_numbers = #tpu.dot_dimension_numbers<[1], [0], [0], [1], [0, 0, 1, 1], [], []>} : vector<32x32xf32>, vector<32x128xf32>, vector<32x128xf32> -> vector<32x128xf32>
    %c2_36 = arith.constant 2 : index
    %c0_37 = arith.constant 0 : index
    %c0_38 = arith.constant 0 : index
    %89 = vector.load %arg4[%c2_36, %c0_37, %c0_38] : memref<5x32x1xf32, #tpu.memory_space<vmem>>, vector<1x32x1xf32>
    %90 = vector.shape_cast %89 : vector<1x32x1xf32> to vector<32x1xf32>
    %91 = vector.broadcast %90 : vector<32x1xf32> to vector<32x128xf32>
    %92 = arith.addf %88, %91 : vector<32x128xf32>
    %cst_39 = arith.constant 1.000000e+00 : f32
    %93 = vector.broadcast %cst_39 : f32 to vector<32x128xf32>
    %94 = arith.addf %92, %93 : vector<32x128xf32>
    %cst_40 = arith.constant 5.000000e-01 : f32
    %95 = vector.broadcast %cst_40 : f32 to vector<32x128xf32>
    %96 = arith.mulf %94, %95 : vector<32x128xf32>
    %97 = math.floor %96 : vector<32x128xf32>
    %cst_41 = arith.constant 2.000000e+00 : f32
    %98 = vector.broadcast %cst_41 : f32 to vector<32x128xf32>
    %99 = arith.mulf %98, %97 : vector<32x128xf32>
    %100 = arith.subf %92, %99 : vector<32x128xf32>
    %101 = math.absf %100 : vector<32x128xf32>
    %102 = math.absf %92 : vector<32x128xf32>
    %cst_42 = arith.constant 1.000000e+00 : f32
    %103 = vector.broadcast %cst_42 : f32 to vector<32x128xf32>
    %104 = arith.addf %103, %102 : vector<32x128xf32>
    %105 = tpu.reciprocal %104 {approx = true} : vector<32x128xf32> -> vector<32x128xf32>
    %106 = arith.mulf %104, %105 : vector<32x128xf32>
    %cst_43 = arith.constant 2.000000e+00 : f32
    %107 = vector.broadcast %cst_43 : f32 to vector<32x128xf32>
    %108 = arith.subf %107, %106 : vector<32x128xf32>
    %109 = arith.mulf %105, %108 : vector<32x128xf32>
    %cst_44 = arith.constant 0.000000e+00 : f32
    %110 = vector.broadcast %cst_44 : f32 to vector<32x128xf32>
    %111 = arith.cmpf oge, %92, %110 : vector<32x128xf32>
    %112 = arith.mulf %92, %109 : vector<32x128xf32>
    %113 = arith.select %111, %101, %112 : vector<32x128xi1>, vector<32x128xf32>
    %114 = arith.addf %113, %57 : vector<32x128xf32>
    %c3 = arith.constant 3 : index
    %c0_45 = arith.constant 0 : index
    %c0_46 = arith.constant 0 : index
    %115 = vector.load %arg3[%c3, %c0_45, %c0_46] : memref<5x32x32xf32, #tpu.memory_space<vmem>>, vector<1x32x32xf32>
    %116 = vector.shape_cast %115 : vector<1x32x32xf32> to vector<32x32xf32>
    %cst_47 = arith.constant dense<0.000000e+00> : vector<32x128xf32>
    %117 = tpu.matmul %116, %114, %cst_47 {dimension_numbers = #tpu.dot_dimension_numbers<[1], [0], [0], [1], [0, 0, 1, 1], [], []>} : vector<32x32xf32>, vector<32x128xf32>, vector<32x128xf32> -> vector<32x128xf32>
    %c3_48 = arith.constant 3 : index
    %c0_49 = arith.constant 0 : index
    %c0_50 = arith.constant 0 : index
    %118 = vector.load %arg4[%c3_48, %c0_49, %c0_50] : memref<5x32x1xf32, #tpu.memory_space<vmem>>, vector<1x32x1xf32>
    %119 = vector.shape_cast %118 : vector<1x32x1xf32> to vector<32x1xf32>
    %120 = vector.broadcast %119 : vector<32x1xf32> to vector<32x128xf32>
    %121 = arith.addf %117, %120 : vector<32x128xf32>
    %cst_51 = arith.constant 1.000000e+00 : f32
    %122 = vector.broadcast %cst_51 : f32 to vector<32x128xf32>
    %123 = arith.addf %121, %122 : vector<32x128xf32>
    %cst_52 = arith.constant 5.000000e-01 : f32
    %124 = vector.broadcast %cst_52 : f32 to vector<32x128xf32>
    %125 = arith.mulf %123, %124 : vector<32x128xf32>
    %126 = math.floor %125 : vector<32x128xf32>
    %cst_53 = arith.constant 2.000000e+00 : f32
    %127 = vector.broadcast %cst_53 : f32 to vector<32x128xf32>
    %128 = arith.mulf %127, %126 : vector<32x128xf32>
    %129 = arith.subf %121, %128 : vector<32x128xf32>
    %130 = math.absf %129 : vector<32x128xf32>
    %131 = math.absf %121 : vector<32x128xf32>
    %cst_54 = arith.constant 1.000000e+00 : f32
    %132 = vector.broadcast %cst_54 : f32 to vector<32x128xf32>
    %133 = arith.addf %132, %131 : vector<32x128xf32>
    %134 = tpu.reciprocal %133 {approx = true} : vector<32x128xf32> -> vector<32x128xf32>
    %135 = arith.mulf %133, %134 : vector<32x128xf32>
    %cst_55 = arith.constant 2.000000e+00 : f32
    %136 = vector.broadcast %cst_55 : f32 to vector<32x128xf32>
    %137 = arith.subf %136, %135 : vector<32x128xf32>
    %138 = arith.mulf %134, %137 : vector<32x128xf32>
    %cst_56 = arith.constant 0.000000e+00 : f32
    %139 = vector.broadcast %cst_56 : f32 to vector<32x128xf32>
    %140 = arith.cmpf oge, %121, %139 : vector<32x128xf32>
    %141 = arith.mulf %121, %138 : vector<32x128xf32>
    %142 = arith.select %140, %130, %141 : vector<32x128xi1>, vector<32x128xf32>
    %c4 = arith.constant 4 : index
    %c0_57 = arith.constant 0 : index
    %c0_58 = arith.constant 0 : index
    %143 = vector.load %arg3[%c4, %c0_57, %c0_58] : memref<5x32x32xf32, #tpu.memory_space<vmem>>, vector<1x32x32xf32>
    %144 = vector.shape_cast %143 : vector<1x32x32xf32> to vector<32x32xf32>
    %cst_59 = arith.constant dense<0.000000e+00> : vector<32x128xf32>
    %145 = tpu.matmul %144, %142, %cst_59 {dimension_numbers = #tpu.dot_dimension_numbers<[1], [0], [0], [1], [0, 0, 1, 1], [], []>} : vector<32x32xf32>, vector<32x128xf32>, vector<32x128xf32> -> vector<32x128xf32>
    %c4_60 = arith.constant 4 : index
    %c0_61 = arith.constant 0 : index
    %c0_62 = arith.constant 0 : index
    %146 = vector.load %arg4[%c4_60, %c0_61, %c0_62] : memref<5x32x1xf32, #tpu.memory_space<vmem>>, vector<1x32x1xf32>
    %147 = vector.shape_cast %146 : vector<1x32x1xf32> to vector<32x1xf32>
    %148 = vector.broadcast %147 : vector<32x1xf32> to vector<32x128xf32>
    %149 = arith.addf %145, %148 : vector<32x128xf32>
    %cst_63 = arith.constant 1.000000e+00 : f32
    %150 = vector.broadcast %cst_63 : f32 to vector<32x128xf32>
    %151 = arith.addf %149, %150 : vector<32x128xf32>
    %cst_64 = arith.constant 5.000000e-01 : f32
    %152 = vector.broadcast %cst_64 : f32 to vector<32x128xf32>
    %153 = arith.mulf %151, %152 : vector<32x128xf32>
    %154 = math.floor %153 : vector<32x128xf32>
    %cst_65 = arith.constant 2.000000e+00 : f32
    %155 = vector.broadcast %cst_65 : f32 to vector<32x128xf32>
    %156 = arith.mulf %155, %154 : vector<32x128xf32>
    %157 = arith.subf %149, %156 : vector<32x128xf32>
    %158 = math.absf %157 : vector<32x128xf32>
    %159 = math.absf %149 : vector<32x128xf32>
    %cst_66 = arith.constant 1.000000e+00 : f32
    %160 = vector.broadcast %cst_66 : f32 to vector<32x128xf32>
    %161 = arith.addf %160, %159 : vector<32x128xf32>
    %162 = tpu.reciprocal %161 {approx = true} : vector<32x128xf32> -> vector<32x128xf32>
    %163 = arith.mulf %161, %162 : vector<32x128xf32>
    %cst_67 = arith.constant 2.000000e+00 : f32
    %164 = vector.broadcast %cst_67 : f32 to vector<32x128xf32>
    %165 = arith.subf %164, %163 : vector<32x128xf32>
    %166 = arith.mulf %162, %165 : vector<32x128xf32>
    %cst_68 = arith.constant 0.000000e+00 : f32
    %167 = vector.broadcast %cst_68 : f32 to vector<32x128xf32>
    %168 = arith.cmpf oge, %149, %167 : vector<32x128xf32>
    %169 = arith.mulf %149, %166 : vector<32x128xf32>
    %170 = arith.select %168, %158, %169 : vector<32x128xi1>, vector<32x128xf32>
    %171 = arith.addf %170, %114 : vector<32x128xf32>
    %c0_69 = arith.constant 0 : index
    %c0_70 = arith.constant 0 : index
    %172 = vector.load %arg5[%c0_69, %c0_70] : memref<1x32xf32, #tpu.memory_space<vmem>>, vector<1x32xf32>
    %cst_71 = arith.constant dense<0.000000e+00> : vector<1x128xf32>
    %173 = tpu.matmul %172, %171, %cst_71 {dimension_numbers = #tpu.dot_dimension_numbers<[1], [0], [0], [1], [0, 0, 1, 1], [], []>} : vector<1x32xf32>, vector<32x128xf32>, vector<1x128xf32> -> vector<1x128xf32>
    %c0_72 = arith.constant 0 : index
    %174 = arith.index_cast %1 : i32 to index
    %175 = vector.load %arg6[%c0_72, %174] : memref<1x256xf32, #tpu.memory_space<vmem>>, vector<1x128xf32>
    tpu.vector_store %arg6[%c0_72, %174], %173 {strides = array<i32>} : memref<1x256xf32, #tpu.memory_space<vmem>>, vector<1x128xf32>,
    %c1_i32 = arith.constant 1 : i32
    %c128_i32_73 = arith.constant 128 : i32
    %176 = arith.muli %c1_i32, %c128_i32_73 : i32
    %177 = tpu.assume_multiple %176, 128 : i32
    %c0_74 = arith.constant 0 : index
    %178 = arith.index_cast %177 : i32 to index
    %179 = vector.load %arg1[%c0_74, %178] : memref<3x256xf32, #tpu.memory_space<vmem>>, vector<3x128xf32>
    %c0_75 = arith.constant 0 : index
    %c0_76 = arith.constant 0 : index
    %180 = vector.load %arg2[%c0_75, %c0_76] : memref<64x3xf32, #tpu.memory_space<vmem>>, vector<64x3xf32>
    %cst_77 = arith.constant dense<0.000000e+00> : vector<64x128xf32>
    %181 = tpu.matmul %180, %179, %cst_77 {dimension_numbers = #tpu.dot_dimension_numbers<[1], [0], [0], [1], [0, 0, 1, 1], [], []>} : vector<64x3xf32>, vector<3x128xf32>, vector<64x128xf32> -> vector<64x128xf32>
    %182 = vector.extract_strided_slice %181 {offsets = [0, 0], sizes = [32, 128], strides = [1, 1]} : vector<64x128xf32> to vector<32x128xf32>
    %183 = vector.extract_strided_slice %181 {offsets = [32, 0], sizes = [32, 128], strides = [1, 1]} : vector<64x128xf32> to vector<32x128xf32>
    %cst_78 = arith.constant 1.000000e+00 : f32
    %184 = vector.broadcast %cst_78 : f32 to vector<32x128xf32>
    %185 = arith.addf %183, %184 : vector<32x128xf32>
    %cst_79 = arith.constant 5.000000e-01 : f32
    %186 = vector.broadcast %cst_79 : f32 to vector<32x128xf32>
    %187 = arith.mulf %185, %186 : vector<32x128xf32>
    %188 = math.floor %187 : vector<32x128xf32>
    %cst_80 = arith.constant 2.000000e+00 : f32
    %189 = vector.broadcast %cst_80 : f32 to vector<32x128xf32>
    %190 = arith.mulf %189, %188 : vector<32x128xf32>
    %191 = arith.subf %183, %190 : vector<32x128xf32>
    %192 = math.absf %191 : vector<32x128xf32>
    %193 = math.absf %183 : vector<32x128xf32>
    %cst_81 = arith.constant 1.000000e+00 : f32
    %194 = vector.broadcast %cst_81 : f32 to vector<32x128xf32>
    %195 = arith.addf %194, %193 : vector<32x128xf32>
    %196 = tpu.reciprocal %195 {approx = true} : vector<32x128xf32> -> vector<32x128xf32>
    %197 = arith.mulf %195, %196 : vector<32x128xf32>
    %cst_82 = arith.constant 2.000000e+00 : f32
    %198 = vector.broadcast %cst_82 : f32 to vector<32x128xf32>
    %199 = arith.subf %198, %197 : vector<32x128xf32>
    %200 = arith.mulf %196, %199 : vector<32x128xf32>
    %cst_83 = arith.constant 0.000000e+00 : f32
    %201 = vector.broadcast %cst_83 : f32 to vector<32x128xf32>
    %202 = arith.cmpf oge, %183, %201 : vector<32x128xf32>
    %203 = arith.mulf %183, %200 : vector<32x128xf32>
    %204 = arith.select %202, %192, %203 : vector<32x128xi1>, vector<32x128xf32>
    %c0_84 = arith.constant 0 : index
    %c0_85 = arith.constant 0 : index
    %c0_86 = arith.constant 0 : index
    %205 = vector.load %arg3[%c0_84, %c0_85, %c0_86] : memref<5x32x32xf32, #tpu.memory_space<vmem>>, vector<1x32x32xf32>
    %206 = vector.shape_cast %205 : vector<1x32x32xf32> to vector<32x32xf32>
    %cst_87 = arith.constant dense<0.000000e+00> : vector<32x128xf32>
    %207 = tpu.matmul %206, %204, %cst_87 {dimension_numbers = #tpu.dot_dimension_numbers<[1], [0], [0], [1], [0, 0, 1, 1], [], []>} : vector<32x32xf32>, vector<32x128xf32>, vector<32x128xf32> -> vector<32x128xf32>
    %c0_88 = arith.constant 0 : index
    %c0_89 = arith.constant 0 : index
    %c0_90 = arith.constant 0 : index
    %208 = vector.load %arg4[%c0_88, %c0_89, %c0_90] : memref<5x32x1xf32, #tpu.memory_space<vmem>>, vector<1x32x1xf32>
    %209 = vector.shape_cast %208 : vector<1x32x1xf32> to vector<32x1xf32>
    %210 = vector.broadcast %209 : vector<32x1xf32> to vector<32x128xf32>
    %211 = arith.addf %207, %210 : vector<32x128xf32>
    %cst_91 = arith.constant 1.000000e+00 : f32
    %212 = vector.broadcast %cst_91 : f32 to vector<32x128xf32>
    %213 = arith.addf %211, %212 : vector<32x128xf32>
    %cst_92 = arith.constant 5.000000e-01 : f32
    %214 = vector.broadcast %cst_92 : f32 to vector<32x128xf32>
    %215 = arith.mulf %213, %214 : vector<32x128xf32>
    %216 = math.floor %215 : vector<32x128xf32>
    %cst_93 = arith.constant 2.000000e+00 : f32
    %217 = vector.broadcast %cst_93 : f32 to vector<32x128xf32>
    %218 = arith.mulf %217, %216 : vector<32x128xf32>
    %219 = arith.subf %211, %218 : vector<32x128xf32>
    %220 = math.absf %219 : vector<32x128xf32>
    %221 = math.absf %211 : vector<32x128xf32>
    %cst_94 = arith.constant 1.000000e+00 : f32
    %222 = vector.broadcast %cst_94 : f32 to vector<32x128xf32>
    %223 = arith.addf %222, %221 : vector<32x128xf32>
    %224 = tpu.reciprocal %223 {approx = true} : vector<32x128xf32> -> vector<32x128xf32>
    %225 = arith.mulf %223, %224 : vector<32x128xf32>
    %cst_95 = arith.constant 2.000000e+00 : f32
    %226 = vector.broadcast %cst_95 : f32 to vector<32x128xf32>
    %227 = arith.subf %226, %225 : vector<32x128xf32>
    %228 = arith.mulf %224, %227 : vector<32x128xf32>
    %cst_96 = arith.constant 0.000000e+00 : f32
    %229 = vector.broadcast %cst_96 : f32 to vector<32x128xf32>
    %230 = arith.cmpf oge, %211, %229 : vector<32x128xf32>
    %231 = arith.mulf %211, %228 : vector<32x128xf32>
    %232 = arith.select %230, %220, %231 : vector<32x128xi1>, vector<32x128xf32>
    %233 = arith.addf %232, %182 : vector<32x128xf32>
    %c1_97 = arith.constant 1 : index
    %c0_98 = arith.constant 0 : index
    %c0_99 = arith.constant 0 : index
    %234 = vector.load %arg3[%c1_97, %c0_98, %c0_99] : memref<5x32x32xf32, #tpu.memory_space<vmem>>, vector<1x32x32xf32>
    %235 = vector.shape_cast %234 : vector<1x32x32xf32> to vector<32x32xf32>
    %cst_100 = arith.constant dense<0.000000e+00> : vector<32x128xf32>
    %236 = tpu.matmul %235, %233, %cst_100 {dimension_numbers = #tpu.dot_dimension_numbers<[1], [0], [0], [1], [0, 0, 1, 1], [], []>} : vector<32x32xf32>, vector<32x128xf32>, vector<32x128xf32> -> vector<32x128xf32>
    %c1_101 = arith.constant 1 : index
    %c0_102 = arith.constant 0 : index
    %c0_103 = arith.constant 0 : index
    %237 = vector.load %arg4[%c1_101, %c0_102, %c0_103] : memref<5x32x1xf32, #tpu.memory_space<vmem>>, vector<1x32x1xf32>
    %238 = vector.shape_cast %237 : vector<1x32x1xf32> to vector<32x1xf32>
    %239 = vector.broadcast %238 : vector<32x1xf32> to vector<32x128xf32>
    %240 = arith.addf %236, %239 : vector<32x128xf32>
    %cst_104 = arith.constant 1.000000e+00 : f32
    %241 = vector.broadcast %cst_104 : f32 to vector<32x128xf32>
    %242 = arith.addf %240, %241 : vector<32x128xf32>
    %cst_105 = arith.constant 5.000000e-01 : f32
    %243 = vector.broadcast %cst_105 : f32 to vector<32x128xf32>
    %244 = arith.mulf %242, %243 : vector<32x128xf32>
    %245 = math.floor %244 : vector<32x128xf32>
    %cst_106 = arith.constant 2.000000e+00 : f32
    %246 = vector.broadcast %cst_106 : f32 to vector<32x128xf32>
    %247 = arith.mulf %246, %245 : vector<32x128xf32>
    %248 = arith.subf %240, %247 : vector<32x128xf32>
    %249 = math.absf %248 : vector<32x128xf32>
    %250 = math.absf %240 : vector<32x128xf32>
    %cst_107 = arith.constant 1.000000e+00 : f32
    %251 = vector.broadcast %cst_107 : f32 to vector<32x128xf32>
    %252 = arith.addf %251, %250 : vector<32x128xf32>
    %253 = tpu.reciprocal %252 {approx = true} : vector<32x128xf32> -> vector<32x128xf32>
    %254 = arith.mulf %252, %253 : vector<32x128xf32>
    %cst_108 = arith.constant 2.000000e+00 : f32
    %255 = vector.broadcast %cst_108 : f32 to vector<32x128xf32>
    %256 = arith.subf %255, %254 : vector<32x128xf32>
    %257 = arith.mulf %253, %256 : vector<32x128xf32>
    %cst_109 = arith.constant 0.000000e+00 : f32
    %258 = vector.broadcast %cst_109 : f32 to vector<32x128xf32>
    %259 = arith.cmpf oge, %240, %258 : vector<32x128xf32>
    %260 = arith.mulf %240, %257 : vector<32x128xf32>
    %261 = arith.select %259, %249, %260 : vector<32x128xi1>, vector<32x128xf32>
    %c2_110 = arith.constant 2 : index
    %c0_111 = arith.constant 0 : index
    %c0_112 = arith.constant 0 : index
    %262 = vector.load %arg3[%c2_110, %c0_111, %c0_112] : memref<5x32x32xf32, #tpu.memory_space<vmem>>, vector<1x32x32xf32>
    %263 = vector.shape_cast %262 : vector<1x32x32xf32> to vector<32x32xf32>
    %cst_113 = arith.constant dense<0.000000e+00> : vector<32x128xf32>
    %264 = tpu.matmul %263, %261, %cst_113 {dimension_numbers = #tpu.dot_dimension_numbers<[1], [0], [0], [1], [0, 0, 1, 1], [], []>} : vector<32x32xf32>, vector<32x128xf32>, vector<32x128xf32> -> vector<32x128xf32>
    %c2_114 = arith.constant 2 : index
    %c0_115 = arith.constant 0 : index
    %c0_116 = arith.constant 0 : index
    %265 = vector.load %arg4[%c2_114, %c0_115, %c0_116] : memref<5x32x1xf32, #tpu.memory_space<vmem>>, vector<1x32x1xf32>
    %266 = vector.shape_cast %265 : vector<1x32x1xf32> to vector<32x1xf32>
    %267 = vector.broadcast %266 : vector<32x1xf32> to vector<32x128xf32>
    %268 = arith.addf %264, %267 : vector<32x128xf32>
    %cst_117 = arith.constant 1.000000e+00 : f32
    %269 = vector.broadcast %cst_117 : f32 to vector<32x128xf32>
    %270 = arith.addf %268, %269 : vector<32x128xf32>
    %cst_118 = arith.constant 5.000000e-01 : f32
    %271 = vector.broadcast %cst_118 : f32 to vector<32x128xf32>
    %272 = arith.mulf %270, %271 : vector<32x128xf32>
    %273 = math.floor %272 : vector<32x128xf32>
    %cst_119 = arith.constant 2.000000e+00 : f32
    %274 = vector.broadcast %cst_119 : f32 to vector<32x128xf32>
    %275 = arith.mulf %274, %273 : vector<32x128xf32>
    %276 = arith.subf %268, %275 : vector<32x128xf32>
    %277 = math.absf %276 : vector<32x128xf32>
    %278 = math.absf %268 : vector<32x128xf32>
    %cst_120 = arith.constant 1.000000e+00 : f32
    %279 = vector.broadcast %cst_120 : f32 to vector<32x128xf32>
    %280 = arith.addf %279, %278 : vector<32x128xf32>
    %281 = tpu.reciprocal %280 {approx = true} : vector<32x128xf32> -> vector<32x128xf32>
    %282 = arith.mulf %280, %281 : vector<32x128xf32>
    %cst_121 = arith.constant 2.000000e+00 : f32
    %283 = vector.broadcast %cst_121 : f32 to vector<32x128xf32>
    %284 = arith.subf %283, %282 : vector<32x128xf32>
    %285 = arith.mulf %281, %284 : vector<32x128xf32>
    %cst_122 = arith.constant 0.000000e+00 : f32
    %286 = vector.broadcast %cst_122 : f32 to vector<32x128xf32>
    %287 = arith.cmpf oge, %268, %286 : vector<32x128xf32>
    %288 = arith.mulf %268, %285 : vector<32x128xf32>
    %289 = arith.select %287, %277, %288 : vector<32x128xi1>, vector<32x128xf32>
    %290 = arith.addf %289, %233 : vector<32x128xf32>
    %c3_123 = arith.constant 3 : index
    %c0_124 = arith.constant 0 : index
    %c0_125 = arith.constant 0 : index
    %291 = vector.load %arg3[%c3_123, %c0_124, %c0_125] : memref<5x32x32xf32, #tpu.memory_space<vmem>>, vector<1x32x32xf32>
    %292 = vector.shape_cast %291 : vector<1x32x32xf32> to vector<32x32xf32>
    %cst_126 = arith.constant dense<0.000000e+00> : vector<32x128xf32>
    %293 = tpu.matmul %292, %290, %cst_126 {dimension_numbers = #tpu.dot_dimension_numbers<[1], [0], [0], [1], [0, 0, 1, 1], [], []>} : vector<32x32xf32>, vector<32x128xf32>, vector<32x128xf32> -> vector<32x128xf32>
    %c3_127 = arith.constant 3 : index
    %c0_128 = arith.constant 0 : index
    %c0_129 = arith.constant 0 : index
    %294 = vector.load %arg4[%c3_127, %c0_128, %c0_129] : memref<5x32x1xf32, #tpu.memory_space<vmem>>, vector<1x32x1xf32>
    %295 = vector.shape_cast %294 : vector<1x32x1xf32> to vector<32x1xf32>
    %296 = vector.broadcast %295 : vector<32x1xf32> to vector<32x128xf32>
    %297 = arith.addf %293, %296 : vector<32x128xf32>
    %cst_130 = arith.constant 1.000000e+00 : f32
    %298 = vector.broadcast %cst_130 : f32 to vector<32x128xf32>
    %299 = arith.addf %297, %298 : vector<32x128xf32>
    %cst_131 = arith.constant 5.000000e-01 : f32
    %300 = vector.broadcast %cst_131 : f32 to vector<32x128xf32>
    %301 = arith.mulf %299, %300 : vector<32x128xf32>
    %302 = math.floor %301 : vector<32x128xf32>
    %cst_132 = arith.constant 2.000000e+00 : f32
    %303 = vector.broadcast %cst_132 : f32 to vector<32x128xf32>
    %304 = arith.mulf %303, %302 : vector<32x128xf32>
    %305 = arith.subf %297, %304 : vector<32x128xf32>
    %306 = math.absf %305 : vector<32x128xf32>
    %307 = math.absf %297 : vector<32x128xf32>
    %cst_133 = arith.constant 1.000000e+00 : f32
    %308 = vector.broadcast %cst_133 : f32 to vector<32x128xf32>
    %309 = arith.addf %308, %307 : vector<32x128xf32>
    %310 = tpu.reciprocal %309 {approx = true} : vector<32x128xf32> -> vector<32x128xf32>
    %311 = arith.mulf %309, %310 : vector<32x128xf32>
    %cst_134 = arith.constant 2.000000e+00 : f32
    %312 = vector.broadcast %cst_134 : f32 to vector<32x128xf32>
    %313 = arith.subf %312, %311 : vector<32x128xf32>
    %314 = arith.mulf %310, %313 : vector<32x128xf32>
    %cst_135 = arith.constant 0.000000e+00 : f32
    %315 = vector.broadcast %cst_135 : f32 to vector<32x128xf32>
    %316 = arith.cmpf oge, %297, %315 : vector<32x128xf32>
    %317 = arith.mulf %297, %314 : vector<32x128xf32>
    %318 = arith.select %316, %306, %317 : vector<32x128xi1>, vector<32x128xf32>
    %c4_136 = arith.constant 4 : index
    %c0_137 = arith.constant 0 : index
    %c0_138 = arith.constant 0 : index
    %319 = vector.load %arg3[%c4_136, %c0_137, %c0_138] : memref<5x32x32xf32, #tpu.memory_space<vmem>>, vector<1x32x32xf32>
    %320 = vector.shape_cast %319 : vector<1x32x32xf32> to vector<32x32xf32>
    %cst_139 = arith.constant dense<0.000000e+00> : vector<32x128xf32>
    %321 = tpu.matmul %320, %318, %cst_139 {dimension_numbers = #tpu.dot_dimension_numbers<[1], [0], [0], [1], [0, 0, 1, 1], [], []>} : vector<32x32xf32>, vector<32x128xf32>, vector<32x128xf32> -> vector<32x128xf32>
    %c4_140 = arith.constant 4 : index
    %c0_141 = arith.constant 0 : index
    %c0_142 = arith.constant 0 : index
    %322 = vector.load %arg4[%c4_140, %c0_141, %c0_142] : memref<5x32x1xf32, #tpu.memory_space<vmem>>, vector<1x32x1xf32>
    %323 = vector.shape_cast %322 : vector<1x32x1xf32> to vector<32x1xf32>
    %324 = vector.broadcast %323 : vector<32x1xf32> to vector<32x128xf32>
    %325 = arith.addf %321, %324 : vector<32x128xf32>
    %cst_143 = arith.constant 1.000000e+00 : f32
    %326 = vector.broadcast %cst_143 : f32 to vector<32x128xf32>
    %327 = arith.addf %325, %326 : vector<32x128xf32>
    %cst_144 = arith.constant 5.000000e-01 : f32
    %328 = vector.broadcast %cst_144 : f32 to vector<32x128xf32>
    %329 = arith.mulf %327, %328 : vector<32x128xf32>
    %330 = math.floor %329 : vector<32x128xf32>
    %cst_145 = arith.constant 2.000000e+00 : f32
    %331 = vector.broadcast %cst_145 : f32 to vector<32x128xf32>
    %332 = arith.mulf %331, %330 : vector<32x128xf32>
    %333 = arith.subf %325, %332 : vector<32x128xf32>
    %334 = math.absf %333 : vector<32x128xf32>
    %335 = math.absf %325 : vector<32x128xf32>
    %cst_146 = arith.constant 1.000000e+00 : f32
    %336 = vector.broadcast %cst_146 : f32 to vector<32x128xf32>
    %337 = arith.addf %336, %335 : vector<32x128xf32>
    %338 = tpu.reciprocal %337 {approx = true} : vector<32x128xf32> -> vector<32x128xf32>
    %339 = arith.mulf %337, %338 : vector<32x128xf32>
    %cst_147 = arith.constant 2.000000e+00 : f32
    %340 = vector.broadcast %cst_147 : f32 to vector<32x128xf32>
    %341 = arith.subf %340, %339 : vector<32x128xf32>
    %342 = arith.mulf %338, %341 : vector<32x128xf32>
    %cst_148 = arith.constant 0.000000e+00 : f32
    %343 = vector.broadcast %cst_148 : f32 to vector<32x128xf32>
    %344 = arith.cmpf oge, %325, %343 : vector<32x128xf32>
    %345 = arith.mulf %325, %342 : vector<32x128xf32>
    %346 = arith.select %344, %334, %345 : vector<32x128xi1>, vector<32x128xf32>
    %347 = arith.addf %346, %290 : vector<32x128xf32>
    %c0_149 = arith.constant 0 : index
    %c0_150 = arith.constant 0 : index
    %348 = vector.load %arg5[%c0_149, %c0_150] : memref<1x32xf32, #tpu.memory_space<vmem>>, vector<1x32xf32>
    %cst_151 = arith.constant dense<0.000000e+00> : vector<1x128xf32>
    %349 = tpu.matmul %348, %347, %cst_151 {dimension_numbers = #tpu.dot_dimension_numbers<[1], [0], [0], [1], [0, 0, 1, 1], [], []>} : vector<1x32xf32>, vector<32x128xf32>, vector<1x128xf32> -> vector<1x128xf32>
    %c0_152 = arith.constant 0 : index
    %350 = arith.index_cast %177 : i32 to index
    %351 = vector.load %arg6[%c0_152, %350] : memref<1x256xf32, #tpu.memory_space<vmem>>, vector<1x128xf32>
    tpu.vector_store %arg6[%c0_152, %350], %349 {strides = array<i32>} : memref<1x256xf32, #tpu.memory_space<vmem>>, vector<1x128xf32>,
    %c2_i32 = arith.constant 2 : i32
    return
  }
  func.func @transform_0(%arg0: i32) -> (i32, i32) {
    %c0_i32 = arith.constant 0 : i32
    %c0_i32_0 = arith.constant 0 : i32
    return %c0_i32, %arg0 : i32, i32
  }
  func.func @transform_1(%arg0: i32) -> (i32, i32) {
    %c0_i32 = arith.constant 0 : i32
    %c0_i32_0 = arith.constant 0 : i32
    %c0_i32_1 = arith.constant 0 : i32
    return %c0_i32, %c0_i32_0 : i32, i32
  }
  func.func @transform_2(%arg0: i32) -> (i32, i32, i32) {
    %c0_i32 = arith.constant 0 : i32
    %c0_i32_0 = arith.constant 0 : i32
    %c0_i32_1 = arith.constant 0 : i32
    %c0_i32_2 = arith.constant 0 : i32
    return %c0_i32, %c0_i32_0, %c0_i32_1 : i32, i32, i32
  }
  func.func @transform_3(%arg0: i32) -> (i32, i32, i32) {
    %c0_i32 = arith.constant 0 : i32
    %c0_i32_0 = arith.constant 0 : i32
    %c0_i32_1 = arith.constant 0 : i32
    %c0_i32_2 = arith.constant 0 : i32
    return %c0_i32, %c0_i32_0, %c0_i32_1 : i32, i32, i32
  }
  func.func @transform_4(%arg0: i32) -> (i32, i32) {
    %c0_i32 = arith.constant 0 : i32
    %c0_i32_0 = arith.constant 0 : i32
    %c0_i32_1 = arith.constant 0 : i32
    return %c0_i32, %c0_i32_0 : i32, i32
  }
  func.func @transform_5(%arg0: i32) -> (i32, i32) {
    %c0_i32 = arith.constant 0 : i32
    %c0_i32_0 = arith.constant 0 : i32
    return %c0_i32, %arg0 : i32, i32
  }
}

</mosaic_0001>

<llo_original>
// kernel: tpu_custom_call.1
$region0: #{tpu_custom_call.1}
  #allocation0 [shape = 'u32[]', space=smem, size = 0x4, offset = 0x4, fixed_abs, tag = 'smem constant byte address 0x4 - core index']
  #allocation1 [shape = 'u32[144,128]{1,0:T(1,128)}', space=vmem, size = 0x12000, scoped, tag = 'internal scratch']
  %s0 = inlined_call_operand.vmem [shape: f32[3,512], index: 0, kind: input, shape index: {}]
  %s1 = inlined_call_operand.vmem [shape: f32[64,3], index: 1, kind: input, shape index: {}]
  %s2 = inlined_call_operand.vmem [shape: f32[5,32,32], index: 2, kind: input, shape index: {}]
  %s3 = inlined_call_operand.vmem [shape: f32[5,32,1], index: 3, kind: input, shape index: {}]
  %s4 = inlined_call_operand.vmem [shape: f32[1,32], index: 4, kind: input, shape index: {}]
  %s5 = inlined_call_operand.hbm [shape: f32[1,512], index: 5, kind: output, shape index: {}]
  %s6 = sld [smem:[#allocation0]]
  $region53: #{tpu_custom_call.1} parent=0
    _
  %s8 = ssub.s32 1, %s6
  %s9 = scalar_select 0, %s8, %s6
  $region1: #{tpu_custom_call.1} parent=0
    #allocation2 [shape = 'u8[2048]{0}', space=vmem, size = 0x800, scoped, tag = 'output window, operand 0']
    #allocation3 [shape = 's32[2]{0}', space=sflag, size = 0x8, scoped, tag = 'scoped memory for tpu_custom_call.1']
    %10 = vsyncpa [#allocation3], 0
    %s11 = scalar_lea.sflag [#allocation3], 1
    %12 = vsyncpa %s11, 0
    loop: start=0, step=1, limit=4
    $region2: #{tpu_custom_call.1} parent=1 // loop_pre_header
      _
    $region3: #{tpu_custom_call.1} parent=1 // loop_header
      %s14 = sphi 0, %s18
      %p15 = scmp.ge.s32.totalorder %s14, 4
      %s24 = sphi 0, %s26
      %s27 = sphi 0, %s24
      %s28 = sphi 0, %s27
      %s44 = sphi 0, %s28
      %s48 = sphi 0, %s48
      %s50 = sphi 0, %s48
      %s51 = sphi 0, %s50
      %s65 = sphi 0, %s51
      %s69 = sphi 0, %s69
      %s71 = sphi 0, %s69
      %s72 = sphi 0, %s71
      %s86 = sphi 0, %s72
      %s90 = sphi 0, %s90
      %s92 = sphi 0, %s90
      %s93 = sphi 0, %s92
      %s107 = sphi 0, %s93
      %s111 = sphi 0, %s111
      %s113 = sphi 0, %s111
      %s114 = sphi 0, %s113
      %s128 = sphi 0, %s114
      %s134 = sphi 0, %s136
      %s137 = sphi 0, %s134
      %s138 = sphi 0, %s137
      %s154 = sphi 0, %s138
    $region4: #{tpu_custom_call.1} parent=1 // loop_header_branch
      %17 = sbr.rel (%p15) target = $region8
    $region5: #{tpu_custom_call.1} parent=1 // loop_body
      %s19 = ssub.s32 %s14, 1
      %s20 = ssub.s32 %s14, 2
      %s21 = sadd.s32 %s14, 1
      %s22 = ssub.s32 %s14, %s21
      %p23 = scmp.eq.s32.totalorder %s22, 0
      %s25 = sadd.s32 %s24, 1
      %s26 = scalar_select %p23, %s24, %s25
      %p29 = pneg %p23
      %p30 = scmp.eq.s32.totalorder %s14, 1
      %p31 = por %p29, %p30
      %p32 = scmp.ne.s32.totalorder %s24, %s27
      %p33 = scmp.eq.s32.totalorder %s14, 0
      %p34 = por %p32, %p33
      %p35 = scmp.ne.s32.totalorder %s24, %s27
      %p36 = scmp.eq.s32.totalorder %s19, 1
      %p37 = por %p35, %p36
      %p38 = scmp.ne.s32.totalorder %s27, %s28
      %p39 = scmp.eq.s32.totalorder %s19, 0
      %p40 = por %p38, %p39
      %p41 = scmp.ne.s32.totalorder %s27, %s28
      %p42 = scmp.eq.s32.totalorder %s20, 1
      %p43 = por %p41, %p42
      %p45 = scmp.ne.s32.totalorder %s28, %s44
      %p46 = scmp.eq.s32.totalorder %s20, 0
      %p47 = por %p45, %p46
      %s49 = sadd.s32 %s48, 1
      %p52 = scmp.eq.s32.totalorder %s14, 1
      %p53 = scmp.ne.s32.totalorder %s48, %s50
      %p54 = scmp.eq.s32.totalorder %s14, 0
      %p55 = por %p53, %p54
      %p56 = scmp.ne.s32.totalorder %s48, %s50
      %p57 = scmp.eq.s32.totalorder %s19, 1
      %p58 = por %p56, %p57
      %p59 = scmp.ne.s32.totalorder %s50, %s51
      %p60 = scmp.eq.s32.totalorder %s19, 0
      %p61 = por %p59, %p60
      %p62 = scmp.ne.s32.totalorder %s50, %s51
      %p63 = scmp.eq.s32.totalorder %s20, 1
      %p64 = por %p62, %p63
      %p66 = scmp.ne.s32.totalorder %s51, %s65
      %p67 = scmp.eq.s32.totalorder %s20, 0
      %p68 = por %p66, %p67
      %s70 = sadd.s32 %s69, 1
      %p73 = scmp.eq.s32.totalorder %s14, 1
      %p74 = scmp.ne.s32.totalorder %s69, %s71
      %p75 = scmp.eq.s32.totalorder %s14, 0
      %p76 = por %p74, %p75
      %p77 = scmp.ne.s32.totalorder %s69, %s71
      %p78 = scmp.eq.s32.totalorder %s19, 1
      %p79 = por %p77, %p78
      %p80 = scmp.ne.s32.totalorder %s71, %s72
      %p81 = scmp.eq.s32.totalorder %s19, 0
      %p82 = por %p80, %p81
      %p83 = scmp.ne.s32.totalorder %s71, %s72
      %p84 = scmp.eq.s32.totalorder %s20, 1
      %p85 = por %p83, %p84
      %p87 = scmp.ne.s32.totalorder %s72, %s86
      %p88 = scmp.eq.s32.totalorder %s20, 0
      %p89 = por %p87, %p88
      %s91 = sadd.s32 %s90, 1
      %p94 = scmp.eq.s32.totalorder %s14, 1
      %p95 = scmp.ne.s32.totalorder %s90, %s92
      %p96 = scmp.eq.s32.totalorder %s14, 0
      %p97 = por %p95, %p96
      %p98 = scmp.ne.s32.totalorder %s90, %s92
      %p99 = scmp.eq.s32.totalorder %s19, 1
      %p100 = por %p98, %p99
      %p101 = scmp.ne.s32.totalorder %s92, %s93
      %p102 = scmp.eq.s32.totalorder %s19, 0
      %p103 = por %p101, %p102
      %p104 = scmp.ne.s32.totalorder %s92, %s93
      %p105 = scmp.eq.s32.totalorder %s20, 1
      %p106 = por %p104, %p105
      %p108 = scmp.ne.s32.totalorder %s93, %s107
      %p109 = scmp.eq.s32.totalorder %s20, 0
      %p110 = por %p108, %p109
      %s112 = sadd.s32 %s111, 1
      %p115 = scmp.eq.s32.totalorder %s14, 1
      %p116 = scmp.ne.s32.totalorder %s111, %s113
      %p117 = scmp.eq.s32.totalorder %s14, 0
      %p118 = por %p116, %p117
      %p119 = scmp.ne.s32.totalorder %s111, %s113
      %p120 = scmp.eq.s32.totalorder %s19, 1
      %p121 = por %p119, %p120
      %p122 = scmp.ne.s32.totalorder %s113, %s114
      %p123 = scmp.eq.s32.totalorder %s19, 0
      %p124 = por %p122, %p123
      %p125 = scmp.ne.s32.totalorder %s113, %s114
      %p126 = scmp.eq.s32.totalorder %s20, 1
      %p127 = por %p125, %p126
      %p129 = scmp.ne.s32.totalorder %s114, %s128
      %p130 = scmp.eq.s32.totalorder %s20, 0
      %p131 = por %p129, %p130
      %s132 = ssub.s32 %s14, %s21
      %p133 = scmp.eq.s32.totalorder %s132, 0
      %s135 = sadd.s32 %s134, 1
      %s136 = scalar_select %p133, %s134, %s135
      %p139 = pneg %p133
      %p140 = scmp.eq.s32.totalorder %s14, 1
      %p141 = por %p139, %p140
      %p142 = scmp.ne.s32.totalorder %s134, %s137
      %p143 = scmp.eq.s32.totalorder %s14, 0
      %p144 = por %p142, %p143
      %p145 = scmp.ne.s32.totalorder %s134, %s137
      %p146 = scmp.eq.s32.totalorder %s19, 1
      %p147 = por %p145, %p146
      %p148 = scmp.ne.s32.totalorder %s137, %s138
      %p149 = scmp.eq.s32.totalorder %s19, 0
      %p150 = por %p148, %p149
      %p151 = scmp.ne.s32.totalorder %s137, %s138
      %p152 = scmp.eq.s32.totalorder %s20, 1
      %p153 = por %p151, %p152
      %p155 = scmp.ne.s32.totalorder %s138, %s154
      %p156 = scmp.eq.s32.totalorder %s20, 0
      %p157 = por %p155, %p156
      %p158 = scmp.le.s32.totalorder 1, %s14
      %p159 = scmp.lt.s32.totalorder %s14, 3
      %p160 = pnand %p158, %p159
      %p161 = pneg %p160
      // Predicated region
      $region9: #{tpu_custom_call.1} parent=5 // pred_check
        _
      $region10: #{tpu_custom_call.1} parent=5 // pred_check_branch
        %163 = sbr.rel (%p160) target = $region12
      $region11: #{tpu_custom_call.1} parent=5 // pred_region
        %s164 = ssub.s32 %s14, 1
        // Predicated region
        $region13: #{tpu_custom_call.1} parent=11 // pred_check
          %p165 = pneg %p61
        $region14: #{tpu_custom_call.1} parent=11 // pred_check_branch
          %167 = sbr.rel (%p165) target = $region16
        $region15: #{tpu_custom_call.1} parent=11 // pred_region
          _
        $region16: #{tpu_custom_call.1} parent=11 // pred_fallthru
          _
        // Predicated region
        $region17: #{tpu_custom_call.1} parent=11 // pred_check
          %p168 = pneg %p82
        $region18: #{tpu_custom_call.1} parent=11 // pred_check_branch
          %170 = sbr.rel (%p168) target = $region20
        $region19: #{tpu_custom_call.1} parent=11 // pred_region
          _
        $region20: #{tpu_custom_call.1} parent=11 // pred_fallthru
          _
        // Predicated region
        $region21: #{tpu_custom_call.1} parent=11 // pred_check
          %p171 = pneg %p103
        $region22: #{tpu_custom_call.1} parent=11 // pred_check_branch
          %173 = sbr.rel (%p171) target = $region24
        $region23: #{tpu_custom_call.1} parent=11 // pred_region
          _
        $region24: #{tpu_custom_call.1} parent=11 // pred_fallthru
          _
        // Predicated region
        $region25: #{tpu_custom_call.1} parent=11 // pred_check
          %p174 = pneg %p124
        $region26: #{tpu_custom_call.1} parent=11 // pred_check_branch
          %176 = sbr.rel (%p174) target = $region28
        $region27: #{tpu_custom_call.1} parent=11 // pred_region
          _
        $region28: #{tpu_custom_call.1} parent=11 // pred_fallthru
          _
      $region12: #{tpu_custom_call.1} parent=5 // pred_fallthru
        _
      %p177 = scmp.lt.s32.totalorder %s14, 2
      // Predicated region
      $region29: #{tpu_custom_call.1} parent=5 // pred_check
        %p178 = pneg %p177
      $region30: #{tpu_custom_call.1} parent=5 // pred_check_branch
        %180 = sbr.rel (%p178) target = $region32
      $region31: #{tpu_custom_call.1} parent=5 // pred_region
        // Predicated region
        $region33: #{tpu_custom_call.1} parent=31 // pred_check
          %p181 = pneg %p34
        $region34: #{tpu_custom_call.1} parent=31 // pred_check_branch
          %183 = sbr.rel (%p181) target = $region36
        $region35: #{tpu_custom_call.1} parent=31 // pred_region
          %s184 = smul.u32 2, %s14
          %p185 = scmp.lt.s32.totalorder %s184, 3
          %s186 = scalar_select %p185, %s184, 3
          %s187 = smul.addr %s186, 4
          %s188 = scalar_lea.vmem %s0, %s187
          %s189 = smul.u32 2, %s14
        $region36: #{tpu_custom_call.1} parent=31 // pred_fallthru
          _
      $region32: #{tpu_custom_call.1} parent=5 // pred_fallthru
        _
      %p190 = scmp.le.s32.totalorder 1, %s14
      %p191 = scmp.lt.s32.totalorder %s14, 3
      %p192 = pnand %p190, %p191
      %p193 = pneg %p192
      // Predicated region
      $region37: #{tpu_custom_call.1} parent=5 // pred_check
        _
      $region38: #{tpu_custom_call.1} parent=5 // pred_check_branch
        %195 = sbr.rel (%p192) target = $region40
      $region39: #{tpu_custom_call.1} parent=5 // pred_region
        %s196 = ssub.s32 %s14, 1
        %s197 = smul.u32 2, %s19
        %p198 = scmp.lt.s32.totalorder %s197, 3
        %s199 = scalar_select %p198, %s197, 3
        %s200 = smul.addr %s199, 4
        %s201 = scalar_lea.vmem %s0, %s200
        %p202 = pneg %p40
        %p203 = pneg %p37
        %p204 = pneg %p61
        %p205 = pneg %p58
        %p206 = pneg %p82
        %p207 = pneg %p79
        %p208 = pneg %p103
        %p209 = pneg %p100
        %p210 = pneg %p124
        %p211 = pneg %p121
        %p212 = pneg %p150
        %p213 = pneg %p147
        %s214 = sand.u32 %s137, 1
        %s215 = scalar_lea.sflag [#allocation3], %s214
        %s216 = sand.u32 %s137, 1
        %s217 = smul.addr %s216, 2
        %s218 = scalar_lea.vmem [#allocation2], %s217
        %s219 = smul.u32 2, %s19
        %p220 = scmp.lt.s32.totalorder %s219, 3
        %s221 = scalar_select %p220, %s219, 3
        %s222 = smul.addr %s221, 4
        %s223 = scalar_lea.vmem %s0, %s222
        %s224 = smul.u32 2, %s19
        %s225 = smul.u32 2, %s19
        %v226 = vld [vmem:[%s223] sm:$0x7]
        %v227 = vld [vmem:[%s1] sm:$0xff]
        %v228 = vld [vmem:[%s1 + $0x8] sm:$0xff]
        %v229 = vld [vmem:[%s1 + $0x10] sm:$0xff]
        %v230 = vld [vmem:[%s1 + $0x18] sm:$0xff]
        %v231 = vld [vmem:[%s1 + $0x20] sm:$0xff]
        %v232 = vld [vmem:[%s1 + $0x28] sm:$0xff]
        %v233 = vld [vmem:[%s1 + $0x30] sm:$0xff]
        %v234 = vld [vmem:[%s1 + $0x38] sm:$0xff]
        %vm235 = vcmask 23552
        %v237 = vsel %vm235, %v227, 0
        %v240 = vsel %vm235, %v228, 0
        %v243 = vsel %vm235, %v229, 0
        %v246 = vsel %vm235, %v230, 0
        %v249 = vsel %vm235, %v231, 0
        %v252 = vsel %vm235, %v232, 0
        %v255 = vsel %vm235, %v233, 0
        %v258 = vsel %vm235, %v234, 0
        %vm260 = vcmask 1042432
        %v262 = vsel %vm260, %v226, 0
        %264 = vmatprep.subr.mxu0 0.0
        %265 = vmatpush1.msra.mxu0 %v262
        %266 = vmatprep.subr.mxu0 0.0
        %267 = vmatpush1.msra.mxu0 0.0
        %268 = vmatprep.subr.mxu0 0.0
        %269 = vmatpush1.msra.mxu0 0.0
        %270 = vmatprep.subr.mxu0 0.0
        %271 = vmatpush1.msra.mxu0 0.0
        %272 = vmatprep.subr.mxu0 0.0
        %273 = vmatpush1.msra.mxu0 0.0
        %274 = vmatprep.subr.mxu0 0.0
        %275 = vmatpush1.msra.mxu0 0.0
        %276 = vmatprep.subr.mxu0 0.0
        %277 = vmatpush1.msra.mxu0 0.0
        %278 = vmatprep.subr.mxu0 0.0
        %279 = vmatpush1.msra.mxu0 0.0
        %280 = vmatprep.subr.mxu0 0.0
        %281 = vmatpush1.msra.mxu0 0.0
        %282 = vmatprep.subr.mxu0 0.0
        %283 = vmatpush1.msra.mxu0 0.0
        %284 = vmatprep.subr.mxu0 0.0
        %285 = vmatpush1.msra.mxu0 0.0
        %286 = vmatprep.subr.mxu0 0.0
        %287 = vmatpush1.msra.mxu0 0.0
        %288 = vmatprep.subr.mxu0 0.0
        %289 = vmatpush1.msra.mxu0 0.0
        %290 = vmatprep.subr.mxu0 0.0
        %291 = vmatpush1.msra.mxu0 0.0
        %292 = vmatprep.subr.mxu0 0.0
        %293 = vmatpush1.msra.mxu0 0.0
        %294 = vmatprep.subr.mxu0 0.0
        %295 = vmatpush1.msra.mxu0 0.0
        %296 = vmatprep.subr.mxu0 0.0
        %297 = vmatpush1.msra.mxu0 0.0
        %298 = vmatprep.subr.mxu0 0.0
        %299 = vmatpush1.msra.mxu0 0.0
        %300 = vmatprep.subr.mxu0 0.0
        %301 = vmatpush1.msra.mxu0 0.0
        %302 = vmatprep.subr.mxu0 0.0
        %303 = vmatpush1.msra.mxu0 0.0
        %304 = vmatprep.subr.mxu0 0.0
        %305 = vmatpush1.msra.mxu0 0.0
        %306 = vmatprep.subr.mxu0 0.0
        %307 = vmatpush1.msra.mxu0 0.0
        %308 = vmatprep.subr.mxu0 0.0
        %309 = vmatpush1.msra.mxu0 0.0
        %310 = vmatprep.subr.mxu0 0.0
        %311 = vmatpush1.msra.mxu0 0.0
        %312 = vmatprep.subr.mxu0 0.0
        %313 = vmatpush1.msra.mxu0 0.0
        %314 = vmatprep.subr.mxu0 0.0
        %315 = vmatpush1.msra.mxu0 0.0
        %316 = vmatprep.subr.mxu0 0.0
        %317 = vmatpush1.msra.mxu0 0.0
        %318 = vmatprep.subr.mxu0 0.0
        %319 = vmatpush1.msra.mxu0 0.0
        %320 = vmatprep.subr.mxu0 0.0
        %321 = vmatpush1.msra.mxu0 0.0
        %322 = vmatprep.subr.mxu0 0.0
        %323 = vmatpush1.msra.mxu0 0.0
        %324 = vmatprep.subr.mxu0 0.0
        %325 = vmatpush1.msra.mxu0 0.0
        %326 = vmatprep.subr.mxu0 0.0
        %327 = vmatpush1.msra.mxu0 0.0
        %328 = vmatprep.mubr.f32.mxu0 0.0
        %329 = vmatmul.mubr.f32.gmra.mrb[0].mxu0 %v237
        %v330 = vpop.f32.mrb[0].mxu0
        %v331 = vadd.f32 0.0, %v330
        %v332 = vpop.f32.mrb[0].mxu0
        %333 = vmatprep.mubr.f32.mxu0 0.0
        %334 = vmatmul.mubr.f32.gmra.mrb[0].mxu0 %v240
        %v335 = vpop.f32.mrb[0].mxu0
        %v336 = vadd.f32 0.0, %v335
        %v337 = vpop.f32.mrb[0].mxu0
        %338 = vmatprep.mubr.f32.mxu0 0.0
        %339 = vmatmul.mubr.f32.gmra.mrb[0].mxu0 %v243
        %v340 = vpop.f32.mrb[0].mxu0
        %v341 = vadd.f32 0.0, %v340
        %v342 = vpop.f32.mrb[0].mxu0
        %343 = vmatprep.mubr.f32.mxu0 0.0
        %344 = vmatmul.mubr.f32.gmra.mrb[0].mxu0 %v246
        %v345 = vpop.f32.mrb[0].mxu0
        %v346 = vadd.f32 0.0, %v345
        %v347 = vpop.f32.mrb[0].mxu0
        %348 = vmatprep.mubr.f32.mxu0 0.0
        %349 = vmatmul.mubr.f32.gmra.mrb[0].mxu0 %v249
        %v350 = vpop.f32.mrb[0].mxu0
        %v351 = vadd.f32 0.0, %v350
        %v352 = vpop.f32.mrb[0].mxu0
        %353 = vmatprep.mubr.f32.mxu0 0.0
        %354 = vmatmul.mubr.f32.gmra.mrb[0].mxu0 %v252
        %v355 = vpop.f32.mrb[0].mxu0
        %v356 = vadd.f32 0.0, %v355
        %v357 = vpop.f32.mrb[0].mxu0
        %358 = vmatprep.mubr.f32.mxu0 0.0
        %359 = vmatmul.mubr.f32.gmra.mrb[0].mxu0 %v255
        %v360 = vpop.f32.mrb[0].mxu0
        %v361 = vadd.f32 0.0, %v360
        %v362 = vpop.f32.mrb[0].mxu0
        %363 = vmatprep.mubr.f32.mxu0 0.0
        %364 = vmatmul.mubr.f32.gmra.mrb[0].mxu0 %v258
        %v365 = vpop.f32.mrb[0].mxu0
        %v366 = vadd.f32 0.0, %v365
        %v367 = vpop.f32.mrb[0].mxu0
        %368 = vdwg.mxu0
        %v369 = vadd.f32 %v351, 1.0
        %v370 = vadd.f32 %v356, 1.0
        %v371 = vadd.f32 %v361, 1.0
        %v372 = vadd.f32 %v366, 1.0
        %v373 = vmul.f32 %v369, 0.5
        %v374 = vmul.f32 %v370, 0.5
        %v375 = vmul.f32 %v371, 0.5
        %v376 = vmul.f32 %v372, 0.5
        %v377 = vfloor.f32 %v373
        %v378 = vfloor.f32 %v374
        %v379 = vfloor.f32 %v375
        %v380 = vfloor.f32 %v376
        %v381 = vmul.f32 %v377, 2.0
        %v382 = vmul.f32 %v378, 2.0
        %v383 = vmul.f32 %v379, 2.0
        %v384 = vmul.f32 %v380, 2.0
        %v385 = vsub.f32 %v351, %v381
        %v386 = vsub.f32 %v356, %v382
        %v387 = vsub.f32 %v361, %v383
        %v388 = vsub.f32 %v366, %v384
        %v389 = vand.u32 2147483647, %v385
        %v390 = vand.u32 2147483647, %v386
        %v391 = vand.u32 2147483647, %v387
        %v392 = vand.u32 2147483647, %v388
        %v393 = vand.u32 2147483647, %v351
        %v394 = vand.u32 2147483647, %v356
        %v395 = vand.u32 2147483647, %v361
        %v396 = vand.u32 2147483647, %v366
        %v397 = vadd.f32 %v393, 1.0
        %v398 = vadd.f32 %v394, 1.0
        %v399 = vadd.f32 %v395, 1.0
        %v400 = vadd.f32 %v396, 1.0
        %v401 = vrcp.pop %v397
        %v402 = vrcp.pop %v398
        %v403 = vrcp.pop %v399
        %v404 = vrcp.pop %v400
        %v405 = vmul.f32 %v397, %v401
        %v406 = vmul.f32 %v398, %v402
        %v407 = vmul.f32 %v399, %v403
        %v408 = vmul.f32 %v400, %v404
        %v409 = vsub.f32 2.0, %v405
        %v410 = vsub.f32 2.0, %v406
        %v411 = vsub.f32 2.0, %v407
        %v412 = vsub.f32 2.0, %v408
        %v413 = vmul.f32 %v401, %v409
        %v414 = vmul.f32 %v402, %v410
        %v415 = vmul.f32 %v403, %v411
        %v416 = vmul.f32 %v404, %v412
        %vm417 = vcmp.ge.f32.partialorder %v351, 0.0
        %vm418 = vcmp.ge.f32.partialorder %v356, 0.0
        %vm419 = vcmp.ge.f32.partialorder %v361, 0.0
        %vm420 = vcmp.ge.f32.partialorder %v366, 0.0
        %v421 = vmul.f32 %v351, %v413
        %v422 = vmul.f32 %v356, %v414
        %v423 = vmul.f32 %v361, %v415
        %v424 = vmul.f32 %v366, %v416
        %v425 = vsel %vm417, %v389, %v421
        %v426 = vsel %vm418, %v390, %v422
        %v427 = vsel %vm419, %v391, %v423
        %v428 = vsel %vm420, %v392, %v424
        %v429 = vld [vmem:[%s2] sm:$0xff]
        %v430 = vld [vmem:[%s2 + $0x8] sm:$0xff]
        %v431 = vld [vmem:[%s2 + $0x10] sm:$0xff]
        %v432 = vld [vmem:[%s2 + $0x18] sm:$0xff]
        %v433 = vld [vmem:[%s3] sm:$0xff]
        %v434 = vld [vmem:[%s3 + $0x8] sm:$0xff]
        %v435 = vld [vmem:[%s3 + $0x10] sm:$0xff]
        %v436 = vld [vmem:[%s3 + $0x18] sm:$0xff]
        %438 = vset.pattern.permute.xlu0 0
        %439 = vperm.xlu0 %438, %v433
        %v440 = vpop.permute.xlu0 %439
        %443 = vset.pattern.permute.xlu0 0
        %444 = vperm.xlu0 %443, %v434
        %v445 = vpop.permute.xlu0 %444
        %448 = vset.pattern.permute.xlu0 0
        %449 = vperm.xlu0 %448, %v435
        %v450 = vpop.permute.xlu0 %449
        %453 = vset.pattern.permute.xlu0 0
        %454 = vperm.xlu0 %453, %v436
        %v455 = vpop.permute.xlu0 %454
        %vm457 = vcmask 261120
        %v459 = vsel %vm457, %v429, 0
        %v462 = vsel %vm457, %v430, 0
        %v465 = vsel %vm457, %v431, 0
        %v468 = vsel %vm457, %v432, 0
        %470 = vmatprep.subr.mxu0 0.0
        %471 = vmatpush1.msra.mxu0 %v425
        %472 = vmatprep.subr.mxu0 0.0
        %473 = vmatpush1.msra.mxu0 %v426
        %474 = vmatprep.subr.mxu0 0.0
        %475 = vmatpush1.msra.mxu0 %v427
        %476 = vmatprep.subr.mxu0 0.0
        %477 = vmatpush1.msra.mxu0 %v428
        %478 = vmatprep.subr.mxu0 0.0
        %479 = vmatpush1.msra.mxu0 0.0
        %480 = vmatprep.subr.mxu0 0.0
        %481 = vmatpush1.msra.mxu0 0.0
        %482 = vmatprep.subr.mxu0 0.0
        %483 = vmatpush1.msra.mxu0 0.0
        %484 = vmatprep.subr.mxu0 0.0
        %485 = vmatpush1.msra.mxu0 0.0
        %486 = vmatprep.subr.mxu0 0.0
        %487 = vmatpush1.msra.mxu0 0.0
        %488 = vmatprep.subr.mxu0 0.0
        %489 = vmatpush1.msra.mxu0 0.0
        %490 = vmatprep.subr.mxu0 0.0
        %491 = vmatpush1.msra.mxu0 0.0
        %492 = vmatprep.subr.mxu0 0.0
        %493 = vmatpush1.msra.mxu0 0.0
        %494 = vmatprep.subr.mxu0 0.0
        %495 = vmatpush1.msra.mxu0 0.0
        %496 = vmatprep.subr.mxu0 0.0
        %497 = vmatpush1.msra.mxu0 0.0
        %498 = vmatprep.subr.mxu0 0.0
        %499 = vmatpush1.msra.mxu0 0.0
        %500 = vmatprep.subr.mxu0 0.0
        %501 = vmatpush1.msra.mxu0 0.0
        %502 = vmatprep.subr.mxu0 0.0
        %503 = vmatpush1.msra.mxu0 0.0
        %504 = vmatprep.subr.mxu0 0.0
        %505 = vmatpush1.msra.mxu0 0.0
        %506 = vmatprep.subr.mxu0 0.0
        %507 = vmatpush1.msra.mxu0 0.0
        %508 = vmatprep.subr.mxu0 0.0
        %509 = vmatpush1.msra.mxu0 0.0
        %510 = vmatprep.subr.mxu0 0.0
        %511 = vmatpush1.msra.mxu0 0.0
        %512 = vmatprep.subr.mxu0 0.0
        %513 = vmatpush1.msra.mxu0 0.0
        %514 = vmatprep.subr.mxu0 0.0
        %515 = vmatpush1.msra.mxu0 0.0
        %516 = vmatprep.subr.mxu0 0.0
        %517 = vmatpush1.msra.mxu0 0.0
        %518 = vmatprep.subr.mxu0 0.0
        %519 = vmatpush1.msra.mxu0 0.0
        %520 = vmatprep.subr.mxu0 0.0
        %521 = vmatpush1.msra.mxu0 0.0
        %522 = vmatprep.subr.mxu0 0.0
        %523 = vmatpush1.msra.mxu0 0.0
        %524 = vmatprep.subr.mxu0 0.0
        %525 = vmatpush1.msra.mxu0 0.0
        %526 = vmatprep.subr.mxu0 0.0
        %527 = vmatpush1.msra.mxu0 0.0
        %528 = vmatprep.subr.mxu0 0.0
        %529 = vmatpush1.msra.mxu0 0.0
        %530 = vmatprep.subr.mxu0 0.0
        %531 = vmatpush1.msra.mxu0 0.0
        %532 = vmatprep.subr.mxu0 0.0
        %533 = vmatpush1.msra.mxu0 0.0
        %534 = vmatprep.mubr.f32.mxu0 0.0
        %535 = vmatmul.mubr.f32.gmra.mrb[0].mxu0 %v459
        %v536 = vpop.f32.mrb[0].mxu0
        %v537 = vadd.f32 %v440, %v536
        %v538 = vpop.f32.mrb[0].mxu0
        %539 = vmatprep.mubr.f32.mxu0 0.0
        %540 = vmatmul.mubr.f32.gmra.mrb[0].mxu0 %v462
        %v541 = vpop.f32.mrb[0].mxu0
        %v542 = vadd.f32 %v445, %v541
        %v543 = vpop.f32.mrb[0].mxu0
        %544 = vmatprep.mubr.f32.mxu0 0.0
        %545 = vmatmul.mubr.f32.gmra.mrb[0].mxu0 %v465
        %v546 = vpop.f32.mrb[0].mxu0
        %v547 = vadd.f32 %v450, %v546
        %v548 = vpop.f32.mrb[0].mxu0
        %549 = vmatprep.mubr.f32.mxu0 0.0
        %550 = vmatmul.mubr.f32.gmra.mrb[0].mxu0 %v468
        %v551 = vpop.f32.mrb[0].mxu0
        %v552 = vadd.f32 %v455, %v551
        %v553 = vpop.f32.mrb[0].mxu0
        %554 = vdwg.mxu0
        %v555 = vadd.f32 %v537, 1.0
        %v556 = vadd.f32 %v542, 1.0
        %v557 = vadd.f32 %v547, 1.0
        %v558 = vadd.f32 %v552, 1.0
        %v559 = vmul.f32 %v555, 0.5
        %v560 = vmul.f32 %v556, 0.5
        %v561 = vmul.f32 %v557, 0.5
        %v562 = vmul.f32 %v558, 0.5
        %v563 = vfloor.f32 %v559
        %v564 = vfloor.f32 %v560
        %v565 = vfloor.f32 %v561
        %v566 = vfloor.f32 %v562
        %v567 = vmul.f32 %v563, 2.0
        %v568 = vmul.f32 %v564, 2.0
        %v569 = vmul.f32 %v565, 2.0
        %v570 = vmul.f32 %v566, 2.0
        %v571 = vsub.f32 %v537, %v567
        %v572 = vsub.f32 %v542, %v568
        %v573 = vsub.f32 %v547, %v569
        %v574 = vsub.f32 %v552, %v570
        %v575 = vand.u32 2147483647, %v571
        %v576 = vand.u32 2147483647, %v572
        %v577 = vand.u32 2147483647, %v573
        %v578 = vand.u32 2147483647, %v574
        %v579 = vand.u32 2147483647, %v537
        %v580 = vand.u32 2147483647, %v542
        %v581 = vand.u32 2147483647, %v547
        %v582 = vand.u32 2147483647, %v552
        %v583 = vadd.f32 %v579, 1.0
        %v584 = vadd.f32 %v580, 1.0
        %v585 = vadd.f32 %v581, 1.0
        %v586 = vadd.f32 %v582, 1.0
        %v587 = vrcp.pop %v583
        %v588 = vrcp.pop %v584
        %v589 = vrcp.pop %v585
        %v590 = vrcp.pop %v586
        %v591 = vmul.f32 %v583, %v587
        %v592 = vmul.f32 %v584, %v588
        %v593 = vmul.f32 %v585, %v589
        %v594 = vmul.f32 %v586, %v590
        %v595 = vsub.f32 2.0, %v591
        %v596 = vsub.f32 2.0, %v592
        %v597 = vsub.f32 2.0, %v593
        %v598 = vsub.f32 2.0, %v594
        %v599 = vmul.f32 %v587, %v595
        %v600 = vmul.f32 %v588, %v596
        %v601 = vmul.f32 %v589, %v597
        %v602 = vmul.f32 %v590, %v598
        %vm603 = vcmp.ge.f32.partialorder %v537, 0.0
        %vm604 = vcmp.ge.f32.partialorder %v542, 0.0
        %vm605 = vcmp.ge.f32.partialorder %v547, 0.0
        %vm606 = vcmp.ge.f32.partialorder %v552, 0.0
        %v607 = vmul.f32 %v537, %v599
        %v608 = vmul.f32 %v542, %v600
        %v609 = vmul.f32 %v547, %v601
        %v610 = vmul.f32 %v552, %v602
        %v611 = vsel %vm603, %v575, %v607
        %v612 = vsel %vm604, %v576, %v608
        %v613 = vsel %vm605, %v577, %v609
        %v614 = vsel %vm606, %v578, %v610
        %v615 = vadd.f32 %v611, %v331
        %v616 = vadd.f32 %v612, %v336
        %v617 = vadd.f32 %v613, %v341
        %v618 = vadd.f32 %v614, %v346
        %s619 = scalar_lea.vmem %s2, 32
        %v620 = vld [vmem:[%s619] sm:$0xff]
        %v621 = vld [vmem:[%s619 + $0x8] sm:$0xff]
        %v622 = vld [vmem:[%s619 + $0x10] sm:$0xff]
        %v623 = vld [vmem:[%s619 + $0x18] sm:$0xff]
        %s624 = scalar_lea.vmem %s3, 32
        %v625 = vld [vmem:[%s624] sm:$0xff]
        %v626 = vld [vmem:[%s624 + $0x8] sm:$0xff]
        %v627 = vld [vmem:[%s624 + $0x10] sm:$0xff]
        %v628 = vld [vmem:[%s624 + $0x18] sm:$0xff]
        %630 = vset.pattern.permute.xlu0 0
        %631 = vperm.xlu0 %630, %v625
        %v632 = vpop.permute.xlu0 %631
        %635 = vset.pattern.permute.xlu0 0
        %636 = vperm.xlu0 %635, %v626
        %v637 = vpop.permute.xlu0 %636
        %640 = vset.pattern.permute.xlu0 0
        %641 = vperm.xlu0 %640, %v627
        %v642 = vpop.permute.xlu0 %641
        %645 = vset.pattern.permute.xlu0 0
        %646 = vperm.xlu0 %645, %v628
        %v647 = vpop.permute.xlu0 %646
        %v650 = vsel %vm457, %v620, 0
        %v653 = vsel %vm457, %v621, 0
        %v656 = vsel %vm457, %v622, 0
        %v659 = vsel %vm457, %v623, 0
        %661 = vmatprep.subr.mxu0 0.0
        %662 = vmatpush1.msra.mxu0 %v615
        %663 = vmatprep.subr.mxu0 0.0
        %664 = vmatpush1.msra.mxu0 %v616
        %665 = vmatprep.subr.mxu0 0.0
        %666 = vmatpush1.msra.mxu0 %v617
        %667 = vmatprep.subr.mxu0 0.0
        %668 = vmatpush1.msra.mxu0 %v618
        %669 = vmatprep.subr.mxu0 0.0
        %670 = vmatpush1.msra.mxu0 0.0
        %671 = vmatprep.subr.mxu0 0.0
        %672 = vmatpush1.msra.mxu0 0.0
        %673 = vmatprep.subr.mxu0 0.0
        %674 = vmatpush1.msra.mxu0 0.0
        %675 = vmatprep.subr.mxu0 0.0
        %676 = vmatpush1.msra.mxu0 0.0
        %677 = vmatprep.subr.mxu0 0.0
        %678 = vmatpush1.msra.mxu0 0.0
        %679 = vmatprep.subr.mxu0 0.0
        %680 = vmatpush1.msra.mxu0 0.0
        %681 = vmatprep.subr.mxu0 0.0
        %682 = vmatpush1.msra.mxu0 0.0
        %683 = vmatprep.subr.mxu0 0.0
        %684 = vmatpush1.msra.mxu0 0.0
        %685 = vmatprep.subr.mxu0 0.0
        %686 = vmatpush1.msra.mxu0 0.0
        %687 = vmatprep.subr.mxu0 0.0
        %688 = vmatpush1.msra.mxu0 0.0
        %689 = vmatprep.subr.mxu0 0.0
        %690 = vmatpush1.msra.mxu0 0.0
        %691 = vmatprep.subr.mxu0 0.0
        %692 = vmatpush1.msra.mxu0 0.0
        %693 = vmatprep.subr.mxu0 0.0
        %694 = vmatpush1.msra.mxu0 0.0
        %695 = vmatprep.subr.mxu0 0.0
        %696 = vmatpush1.msra.mxu0 0.0
        %697 = vmatprep.subr.mxu0 0.0
        %698 = vmatpush1.msra.mxu0 0.0
        %699 = vmatprep.subr.mxu0 0.0
        %700 = vmatpush1.msra.mxu0 0.0
        %701 = vmatprep.subr.mxu0 0.0
        %702 = vmatpush1.msra.mxu0 0.0
        %703 = vmatprep.subr.mxu0 0.0
        %704 = vmatpush1.msra.mxu0 0.0
        %705 = vmatprep.subr.mxu0 0.0
        %706 = vmatpush1.msra.mxu0 0.0
        %707 = vmatprep.subr.mxu0 0.0
        %708 = vmatpush1.msra.mxu0 0.0
        %709 = vmatprep.subr.mxu0 0.0
        %710 = vmatpush1.msra.mxu0 0.0
        %711 = vmatprep.subr.mxu0 0.0
        %712 = vmatpush1.msra.mxu0 0.0
        %713 = vmatprep.subr.mxu0 0.0
        %714 = vmatpush1.msra.mxu0 0.0
        %715 = vmatprep.subr.mxu0 0.0
        %716 = vmatpush1.msra.mxu0 0.0
        %717 = vmatprep.subr.mxu0 0.0
        %718 = vmatpush1.msra.mxu0 0.0
        %719 = vmatprep.subr.mxu0 0.0
        %720 = vmatpush1.msra.mxu0 0.0
        %721 = vmatprep.subr.mxu0 0.0
        %722 = vmatpush1.msra.mxu0 0.0
        %723 = vmatprep.subr.mxu0 0.0
        %724 = vmatpush1.msra.mxu0 0.0
        %725 = vmatprep.mubr.f32.mxu0 0.0
        %726 = vmatmul.mubr.f32.gmra.mrb[0].mxu0 %v650
        %v727 = vpop.f32.mrb[0].mxu0
        %v728 = vadd.f32 %v632, %v727
        %v729 = vpop.f32.mrb[0].mxu0
        %730 = vmatprep.mubr.f32.mxu0 0.0
        %731 = vmatmul.mubr.f32.gmra.mrb[0].mxu0 %v653
        %v732 = vpop.f32.mrb[0].mxu0
        %v733 = vadd.f32 %v637, %v732
        %v734 = vpop.f32.mrb[0].mxu0
        %735 = vmatprep.mubr.f32.mxu0 0.0
        %736 = vmatmul.mubr.f32.gmra.mrb[0].mxu0 %v656
        %v737 = vpop.f32.mrb[0].mxu0
        %v738 = vadd.f32 %v642, %v737
        %v739 = vpop.f32.mrb[0].mxu0
        %740 = vmatprep.mubr.f32.mxu0 0.0
        %741 = vmatmul.mubr.f32.gmra.mrb[0].mxu0 %v659
        %v742 = vpop.f32.mrb[0].mxu0
        %v743 = vadd.f32 %v647, %v742
        %v744 = vpop.f32.mrb[0].mxu0
        %745 = vdwg.mxu0
        %v746 = vadd.f32 %v728, 1.0
        %v747 = vadd.f32 %v733, 1.0
        %v748 = vadd.f32 %v738, 1.0
        %v749 = vadd.f32 %v743, 1.0
        %v750 = vmul.f32 %v746, 0.5
        %v751 = vmul.f32 %v747, 0.5
        %v752 = vmul.f32 %v748, 0.5
        %v753 = vmul.f32 %v749, 0.5
        %v754 = vfloor.f32 %v750
        %v755 = vfloor.f32 %v751
        %v756 = vfloor.f32 %v752
        %v757 = vfloor.f32 %v753
        %v758 = vmul.f32 %v754, 2.0
        %v759 = vmul.f32 %v755, 2.0
        %v760 = vmul.f32 %v756, 2.0
        %v761 = vmul.f32 %v757, 2.0
        %v762 = vsub.f32 %v728, %v758
        %v763 = vsub.f32 %v733, %v759
        %v764 = vsub.f32 %v738, %v760
        %v765 = vsub.f32 %v743, %v761
        %v766 = vand.u32 2147483647, %v762
        %v767 = vand.u32 2147483647, %v763
        %v768 = vand.u32 2147483647, %v764
        %v769 = vand.u32 2147483647, %v765
        %v770 = vand.u32 2147483647, %v728
        %v771 = vand.u32 2147483647, %v733
        %v772 = vand.u32 2147483647, %v738
        %v773 = vand.u32 2147483647, %v743
        %v774 = vadd.f32 %v770, 1.0
        %v775 = vadd.f32 %v771, 1.0
        %v776 = vadd.f32 %v772, 1.0
        %v777 = vadd.f32 %v773, 1.0
        %v778 = vrcp.pop %v774
        %v779 = vrcp.pop %v775
        %v780 = vrcp.pop %v776
        %v781 = vrcp.pop %v777
        %v782 = vmul.f32 %v774, %v778
        %v783 = vmul.f32 %v775, %v779
        %v784 = vmul.f32 %v776, %v780
        %v785 = vmul.f32 %v777, %v781
        %v786 = vsub.f32 2.0, %v782
        %v787 = vsub.f32 2.0, %v783
        %v788 = vsub.f32 2.0, %v784
        %v789 = vsub.f32 2.0, %v785
        %v790 = vmul.f32 %v778, %v786
        %v791 = vmul.f32 %v779, %v787
        %v792 = vmul.f32 %v780, %v788
        %v793 = vmul.f32 %v781, %v789
        %vm794 = vcmp.ge.f32.partialorder %v728, 0.0
        %vm795 = vcmp.ge.f32.partialorder %v733, 0.0
        %vm796 = vcmp.ge.f32.partialorder %v738, 0.0
        %vm797 = vcmp.ge.f32.partialorder %v743, 0.0
        %v798 = vmul.f32 %v728, %v790
        %v799 = vmul.f32 %v733, %v791
        %v800 = vmul.f32 %v738, %v792
        %v801 = vmul.f32 %v743, %v793
        %v802 = vsel %vm794, %v766, %v798
        %v803 = vsel %vm795, %v767, %v799
        %v804 = vsel %vm796, %v768, %v800
        %v805 = vsel %vm797, %v769, %v801
        %s806 = scalar_lea.vmem %s2, 64
        %v807 = vld [vmem:[%s806] sm:$0xff]
        %v808 = vld [vmem:[%s806 + $0x8] sm:$0xff]
        %v809 = vld [vmem:[%s806 + $0x10] sm:$0xff]
        %v810 = vld [vmem:[%s806 + $0x18] sm:$0xff]
        %s811 = scalar_lea.vmem %s3, 64
        %v812 = vld [vmem:[%s811] sm:$0xff]
        %v813 = vld [vmem:[%s811 + $0x8] sm:$0xff]
        %v814 = vld [vmem:[%s811 + $0x10] sm:$0xff]
        %v815 = vld [vmem:[%s811 + $0x18] sm:$0xff]
        %817 = vset.pattern.permute.xlu0 0
        %818 = vperm.xlu0 %817, %v812
        %v819 = vpop.permute.xlu0 %818
        %822 = vset.pattern.permute.xlu0 0
        %823 = vperm.xlu0 %822, %v813
        %v824 = vpop.permute.xlu0 %823
        %827 = vset.pattern.permute.xlu0 0
        %828 = vperm.xlu0 %827, %v814
        %v829 = vpop.permute.xlu0 %828
        %832 = vset.pattern.permute.xlu0 0
        %833 = vperm.xlu0 %832, %v815
        %v834 = vpop.permute.xlu0 %833
        %v837 = vsel %vm457, %v807, 0
        %v840 = vsel %vm457, %v808, 0
        %v843 = vsel %vm457, %v809, 0
        %v846 = vsel %vm457, %v810, 0
        %848 = vmatprep.subr.mxu0 0.0
        %849 = vmatpush1.msra.mxu0 %v802
        %850 = vmatprep.subr.mxu0 0.0
        %851 = vmatpush1.msra.mxu0 %v803
        %852 = vmatprep.subr.mxu0 0.0
        %853 = vmatpush1.msra.mxu0 %v804
        %854 = vmatprep.subr.mxu0 0.0
        %855 = vmatpush1.msra.mxu0 %v805
        %856 = vmatprep.subr.mxu0 0.0
        %857 = vmatpush1.msra.mxu0 0.0
        %858 = vmatprep.subr.mxu0 0.0
        %859 = vmatpush1.msra.mxu0 0.0
        %860 = vmatprep.subr.mxu0 0.0
        %861 = vmatpush1.msra.mxu0 0.0
        %862 = vmatprep.subr.mxu0 0.0
        %863 = vmatpush1.msra.mxu0 0.0
        %864 = vmatprep.subr.mxu0 0.0
        %865 = vmatpush1.msra.mxu0 0.0
        %866 = vmatprep.subr.mxu0 0.0
        %867 = vmatpush1.msra.mxu0 0.0
        %868 = vmatprep.subr.mxu0 0.0
        %869 = vmatpush1.msra.mxu0 0.0
        %870 = vmatprep.subr.mxu0 0.0
        %871 = vmatpush1.msra.mxu0 0.0
        %872 = vmatprep.subr.mxu0 0.0
        %873 = vmatpush1.msra.mxu0 0.0
        %874 = vmatprep.subr.mxu0 0.0
        %875 = vmatpush1.msra.mxu0 0.0
        %876 = vmatprep.subr.mxu0 0.0
        %877 = vmatpush1.msra.mxu0 0.0
        %878 = vmatprep.subr.mxu0 0.0
        %879 = vmatpush1.msra.mxu0 0.0
        %880 = vmatprep.subr.mxu0 0.0
        %881 = vmatpush1.msra.mxu0 0.0
        %882 = vmatprep.subr.mxu0 0.0
        %883 = vmatpush1.msra.mxu0 0.0
        %884 = vmatprep.subr.mxu0 0.0
        %885 = vmatpush1.msra.mxu0 0.0
        %886 = vmatprep.subr.mxu0 0.0
        %887 = vmatpush1.msra.mxu0 0.0
        %888 = vmatprep.subr.mxu0 0.0
        %889 = vmatpush1.msra.mxu0 0.0
        %890 = vmatprep.subr.mxu0 0.0
        %891 = vmatpush1.msra.mxu0 0.0
        %892 = vmatprep.subr.mxu0 0.0
        %893 = vmatpush1.msra.mxu0 0.0
        %894 = vmatprep.subr.mxu0 0.0
        %895 = vmatpush1.msra.mxu0 0.0
        %896 = vmatprep.subr.mxu0 0.0
        %897 = vmatpush1.msra.mxu0 0.0
        %898 = vmatprep.subr.mxu0 0.0
        %899 = vmatpush1.msra.mxu0 0.0
        %900 = vmatprep.subr.mxu0 0.0
        %901 = vmatpush1.msra.mxu0 0.0
        %902 = vmatprep.subr.mxu0 0.0
        %903 = vmatpush1.msra.mxu0 0.0
        %904 = vmatprep.subr.mxu0 0.0
        %905 = vmatpush1.msra.mxu0 0.0
        %906 = vmatprep.subr.mxu0 0.0
        %907 = vmatpush1.msra.mxu0 0.0
        %908 = vmatprep.subr.mxu0 0.0
        %909 = vmatpush1.msra.mxu0 0.0
        %910 = vmatprep.subr.mxu0 0.0
        %911 = vmatpush1.msra.mxu0 0.0
        %912 = vmatprep.mubr.f32.mxu0 0.0
        %913 = vmatmul.mubr.f32.gmra.mrb[0].mxu0 %v837
        %v914 = vpop.f32.mrb[0].mxu0
        %v915 = vadd.f32 %v819, %v914
        %v916 = vpop.f32.mrb[0].mxu0
        %917 = vmatprep.mubr.f32.mxu0 0.0
        %918 = vmatmul.mubr.f32.gmra.mrb[0].mxu0 %v840
        %v919 = vpop.f32.mrb[0].mxu0
        %v920 = vadd.f32 %v824, %v919
        %v921 = vpop.f32.mrb[0].mxu0
        %922 = vmatprep.mubr.f32.mxu0 0.0
        %923 = vmatmul.mubr.f32.gmra.mrb[0].mxu0 %v843
        %v924 = vpop.f32.mrb[0].mxu0
        %v925 = vadd.f32 %v829, %v924
        %v926 = vpop.f32.mrb[0].mxu0
        %927 = vmatprep.mubr.f32.mxu0 0.0
        %928 = vmatmul.mubr.f32.gmra.mrb[0].mxu0 %v846
        %v929 = vpop.f32.mrb[0].mxu0
        %v930 = vadd.f32 %v834, %v929
        %v931 = vpop.f32.mrb[0].mxu0
        %932 = vdwg.mxu0
        %v933 = vadd.f32 %v915, 1.0
        %v934 = vadd.f32 %v920, 1.0
        %v935 = vadd.f32 %v925, 1.0
        %v936 = vadd.f32 %v930, 1.0
        %v937 = vmul.f32 %v933, 0.5
        %v938 = vmul.f32 %v934, 0.5
        %v939 = vmul.f32 %v935, 0.5
        %v940 = vmul.f32 %v936, 0.5
        %v941 = vfloor.f32 %v937
        %v942 = vfloor.f32 %v938
        %v943 = vfloor.f32 %v939
        %v944 = vfloor.f32 %v940
        %v945 = vmul.f32 %v941, 2.0
        %v946 = vmul.f32 %v942, 2.0
        %v947 = vmul.f32 %v943, 2.0
        %v948 = vmul.f32 %v944, 2.0
        %v949 = vsub.f32 %v915, %v945
        %v950 = vsub.f32 %v920, %v946
        %v951 = vsub.f32 %v925, %v947
        %v952 = vsub.f32 %v930, %v948
        %v953 = vand.u32 2147483647, %v949
        %v954 = vand.u32 2147483647, %v950
        %v955 = vand.u32 2147483647, %v951
        %v956 = vand.u32 2147483647, %v952
        %v957 = vand.u32 2147483647, %v915
        %v958 = vand.u32 2147483647, %v920
        %v959 = vand.u32 2147483647, %v925
        %v960 = vand.u32 2147483647, %v930
        %v961 = vadd.f32 %v957, 1.0
        %v962 = vadd.f32 %v958, 1.0
        %v963 = vadd.f32 %v959, 1.0
        %v964 = vadd.f32 %v960, 1.0
        %v965 = vrcp.pop %v961
        %v966 = vrcp.pop %v962
        %v967 = vrcp.pop %v963
        %v968 = vrcp.pop %v964
        %v969 = vmul.f32 %v961, %v965
        %v970 = vmul.f32 %v962, %v966
        %v971 = vmul.f32 %v963, %v967
        %v972 = vmul.f32 %v964, %v968
        %v973 = vsub.f32 2.0, %v969
        %v974 = vsub.f32 2.0, %v970
        %v975 = vsub.f32 2.0, %v971
        %v976 = vsub.f32 2.0, %v972
        %v977 = vmul.f32 %v965, %v973
        %v978 = vmul.f32 %v966, %v974
        %v979 = vmul.f32 %v967, %v975
        %v980 = vmul.f32 %v968, %v976
        %vm981 = vcmp.ge.f32.partialorder %v915, 0.0
        %vm982 = vcmp.ge.f32.partialorder %v920, 0.0
        %vm983 = vcmp.ge.f32.partialorder %v925, 0.0
        %vm984 = vcmp.ge.f32.partialorder %v930, 0.0
        %v985 = vmul.f32 %v915, %v977
        %v986 = vmul.f32 %v920, %v978
        %v987 = vmul.f32 %v925, %v979
        %v988 = vmul.f32 %v930, %v980
        %v989 = vsel %vm981, %v953, %v985
        %v990 = vsel %vm982, %v954, %v986
        %v991 = vsel %vm983, %v955, %v987
        %v992 = vsel %vm984, %v956, %v988
        %v993 = vadd.f32 %v989, %v615
        %v994 = vadd.f32 %v990, %v616
        %v995 = vadd.f32 %v991, %v617
        %v996 = vadd.f32 %v992, %v618
        %s997 = scalar_lea.vmem %s2, 96
        %v998 = vld [vmem:[%s997] sm:$0xff]
        %v999 = vld [vmem:[%s997 + $0x8] sm:$0xff]
        %v1000 = vld [vmem:[%s997 + $0x10] sm:$0xff]
        %v1001 = vld [vmem:[%s997 + $0x18] sm:$0xff]
        %s1002 = scalar_lea.vmem %s3, 96
        %v1003 = vld [vmem:[%s1002] sm:$0xff]
        %v1004 = vld [vmem:[%s1002 + $0x8] sm:$0xff]
        %v1005 = vld [vmem:[%s1002 + $0x10] sm:$0xff]
        %v1006 = vld [vmem:[%s1002 + $0x18] sm:$0xff]
        %1008 = vset.pattern.permute.xlu0 0
        %1009 = vperm.xlu0 %1008, %v1003
        %v1010 = vpop.permute.xlu0 %1009
        %1013 = vset.pattern.permute.xlu0 0
        %1014 = vperm.xlu0 %1013, %v1004
        %v1015 = vpop.permute.xlu0 %1014
        %1018 = vset.pattern.permute.xlu0 0
        %1019 = vperm.xlu0 %1018, %v1005
        %v1020 = vpop.permute.xlu0 %1019
        %1023 = vset.pattern.permute.xlu0 0
        %1024 = vperm.xlu0 %1023, %v1006
        %v1025 = vpop.permute.xlu0 %1024
        %v1028 = vsel %vm457, %v998, 0
        %v1031 = vsel %vm457, %v999, 0
        %v1034 = vsel %vm457, %v1000, 0
        %v1037 = vsel %vm457, %v1001, 0
        %1039 = vmatprep.subr.mxu0 0.0
        %1040 = vmatpush1.msra.mxu0 %v993
        %1041 = vmatprep.subr.mxu0 0.0
        %1042 = vmatpush1.msra.mxu0 %v994
        %1043 = vmatprep.subr.mxu0 0.0
        %1044 = vmatpush1.msra.mxu0 %v995
        %1045 = vmatprep.subr.mxu0 0.0
        %1046 = vmatpush1.msra.mxu0 %v996
        %1047 = vmatprep.subr.mxu0 0.0
        %1048 = vmatpush1.msra.mxu0 0.0
        %1049 = vmatprep.subr.mxu0 0.0
        %1050 = vmatpush1.msra.mxu0 0.0
        %1051 = vmatprep.subr.mxu0 0.0
        %1052 = vmatpush1.msra.mxu0 0.0
        %1053 = vmatprep.subr.mxu0 0.0
        %1054 = vmatpush1.msra.mxu0 0.0
        %1055 = vmatprep.subr.mxu0 0.0
        %1056 = vmatpush1.msra.mxu0 0.0
        %1057 = vmatprep.subr.mxu0 0.0
        %1058 = vmatpush1.msra.mxu0 0.0
        %1059 = vmatprep.subr.mxu0 0.0
        %1060 = vmatpush1.msra.mxu0 0.0
        %1061 = vmatprep.subr.mxu0 0.0
        %1062 = vmatpush1.msra.mxu0 0.0
        %1063 = vmatprep.subr.mxu0 0.0
        %1064 = vmatpush1.msra.mxu0 0.0
        %1065 = vmatprep.subr.mxu0 0.0
        %1066 = vmatpush1.msra.mxu0 0.0
        %1067 = vmatprep.subr.mxu0 0.0
        %1068 = vmatpush1.msra.mxu0 0.0
        %1069 = vmatprep.subr.mxu0 0.0
        %1070 = vmatpush1.msra.mxu0 0.0
        %1071 = vmatprep.subr.mxu0 0.0
        %1072 = vmatpush1.msra.mxu0 0.0
        %1073 = vmatprep.subr.mxu0 0.0
        %1074 = vmatpush1.msra.mxu0 0.0
        %1075 = vmatprep.subr.mxu0 0.0
        %1076 = vmatpush1.msra.mxu0 0.0
        %1077 = vmatprep.subr.mxu0 0.0
        %1078 = vmatpush1.msra.mxu0 0.0
        %1079 = vmatprep.subr.mxu0 0.0
        %1080 = vmatpush1.msra.mxu0 0.0
        %1081 = vmatprep.subr.mxu0 0.0
        %1082 = vmatpush1.msra.mxu0 0.0
        %1083 = vmatprep.subr.mxu0 0.0
        %1084 = vmatpush1.msra.mxu0 0.0
        %1085 = vmatprep.subr.mxu0 0.0
        %1086 = vmatpush1.msra.mxu0 0.0
        %1087 = vmatprep.subr.mxu0 0.0
        %1088 = vmatpush1.msra.mxu0 0.0
        %1089 = vmatprep.subr.mxu0 0.0
        %1090 = vmatpush1.msra.mxu0 0.0
        %1091 = vmatprep.subr.mxu0 0.0
        %1092 = vmatpush1.msra.mxu0 0.0
        %1093 = vmatprep.subr.mxu0 0.0
        %1094 = vmatpush1.msra.mxu0 0.0
        %1095 = vmatprep.subr.mxu0 0.0
        %1096 = vmatpush1.msra.mxu0 0.0
        %1097 = vmatprep.subr.mxu0 0.0
        %1098 = vmatpush1.msra.mxu0 0.0
        %1099 = vmatprep.subr.mxu0 0.0
        %1100 = vmatpush1.msra.mxu0 0.0
        %1101 = vmatprep.subr.mxu0 0.0
        %1102 = vmatpush1.msra.mxu0 0.0
        %1103 = vmatprep.mubr.f32.mxu0 0.0
        %1104 = vmatmul.mubr.f32.gmra.mrb[0].mxu0 %v1028
        %v1105 = vpop.f32.mrb[0].mxu0
        %v1106 = vadd.f32 %v1010, %v1105
        %v1107 = vpop.f32.mrb[0].mxu0
        %1108 = vmatprep.mubr.f32.mxu0 0.0
        %1109 = vmatmul.mubr.f32.gmra.mrb[0].mxu0 %v1031
        %v1110 = vpop.f32.mrb[0].mxu0
        %v1111 = vadd.f32 %v1015, %v1110
        %v1112 = vpop.f32.mrb[0].mxu0
        %1113 = vmatprep.mubr.f32.mxu0 0.0
        %1114 = vmatmul.mubr.f32.gmra.mrb[0].mxu0 %v1034
        %v1115 = vpop.f32.mrb[0].mxu0
        %v1116 = vadd.f32 %v1020, %v1115
        %v1117 = vpop.f32.mrb[0].mxu0
        %1118 = vmatprep.mubr.f32.mxu0 0.0
        %1119 = vmatmul.mubr.f32.gmra.mrb[0].mxu0 %v1037
        %v1120 = vpop.f32.mrb[0].mxu0
        %v1121 = vadd.f32 %v1025, %v1120
        %v1122 = vpop.f32.mrb[0].mxu0
        %1123 = vdwg.mxu0
        %v1124 = vadd.f32 %v1106, 1.0
        %v1125 = vadd.f32 %v1111, 1.0
        %v1126 = vadd.f32 %v1116, 1.0
        %v1127 = vadd.f32 %v1121, 1.0
        %v1128 = vmul.f32 %v1124, 0.5
        %v1129 = vmul.f32 %v1125, 0.5
        %v1130 = vmul.f32 %v1126, 0.5
        %v1131 = vmul.f32 %v1127, 0.5
        %v1132 = vfloor.f32 %v1128
        %v1133 = vfloor.f32 %v1129
        %v1134 = vfloor.f32 %v1130
        %v1135 = vfloor.f32 %v1131
        %v1136 = vmul.f32 %v1132, 2.0
        %v1137 = vmul.f32 %v1133, 2.0
        %v1138 = vmul.f32 %v1134, 2.0
        %v1139 = vmul.f32 %v1135, 2.0
        %v1140 = vsub.f32 %v1106, %v1136
        %v1141 = vsub.f32 %v1111, %v1137
        %v1142 = vsub.f32 %v1116, %v1138
        %v1143 = vsub.f32 %v1121, %v1139
        %v1144 = vand.u32 2147483647, %v1140
        %v1145 = vand.u32 2147483647, %v1141
        %v1146 = vand.u32 2147483647, %v1142
        %v1147 = vand.u32 2147483647, %v1143
        %v1148 = vand.u32 2147483647, %v1106
        %v1149 = vand.u32 2147483647, %v1111
        %v1150 = vand.u32 2147483647, %v1116
        %v1151 = vand.u32 2147483647, %v1121
        %v1152 = vadd.f32 %v1148, 1.0
        %v1153 = vadd.f32 %v1149, 1.0
        %v1154 = vadd.f32 %v1150, 1.0
        %v1155 = vadd.f32 %v1151, 1.0
        %v1156 = vrcp.pop %v1152
        %v1157 = vrcp.pop %v1153
        %v1158 = vrcp.pop %v1154
        %v1159 = vrcp.pop %v1155
        %v1160 = vmul.f32 %v1152, %v1156
        %v1161 = vmul.f32 %v1153, %v1157
        %v1162 = vmul.f32 %v1154, %v1158
        %v1163 = vmul.f32 %v1155, %v1159
        %v1164 = vsub.f32 2.0, %v1160
        %v1165 = vsub.f32 2.0, %v1161
        %v1166 = vsub.f32 2.0, %v1162
        %v1167 = vsub.f32 2.0, %v1163
        %v1168 = vmul.f32 %v1156, %v1164
        %v1169 = vmul.f32 %v1157, %v1165
        %v1170 = vmul.f32 %v1158, %v1166
        %v1171 = vmul.f32 %v1159, %v1167
        %vm1172 = vcmp.ge.f32.partialorder %v1106, 0.0
        %vm1173 = vcmp.ge.f32.partialorder %v1111, 0.0
        %vm1174 = vcmp.ge.f32.partialorder %v1116, 0.0
        %vm1175 = vcmp.ge.f32.partialorder %v1121, 0.0
        %v1176 = vmul.f32 %v1106, %v1168
        %v1177 = vmul.f32 %v1111, %v1169
        %v1178 = vmul.f32 %v1116, %v1170
        %v1179 = vmul.f32 %v1121, %v1171
        %v1180 = vsel %vm1172, %v1144, %v1176
        %v1181 = vsel %vm1173, %v1145, %v1177
        %v1182 = vsel %vm1174, %v1146, %v1178
        %v1183 = vsel %vm1175, %v1147, %v1179
        %s1184 = scalar_lea.vmem %s2, 128
        %v1185 = vld [vmem:[%s1184] sm:$0xff]
        %v1186 = vld [vmem:[%s1184 + $0x8] sm:$0xff]
        %v1187 = vld [vmem:[%s1184 + $0x10] sm:$0xff]
        %v1188 = vld [vmem:[%s1184 + $0x18] sm:$0xff]
        %s1189 = scalar_lea.vmem %s3, 128
        %v1190 = vld [vmem:[%s1189] sm:$0xff]
        %v1191 = vld [vmem:[%s1189 + $0x8] sm:$0xff]
        %v1192 = vld [vmem:[%s1189 + $0x10] sm:$0xff]
        %v1193 = vld [vmem:[%s1189 + $0x18] sm:$0xff]
        %1195 = vset.pattern.permute.xlu0 0
        %1196 = vperm.xlu0 %1195, %v1190
        %v1197 = vpop.permute.xlu0 %1196
        %1200 = vset.pattern.permute.xlu0 0
        %1201 = vperm.xlu0 %1200, %v1191
        %v1202 = vpop.permute.xlu0 %1201
        %1205 = vset.pattern.permute.xlu0 0
        %1206 = vperm.xlu0 %1205, %v1192
        %v1207 = vpop.permute.xlu0 %1206
        %1210 = vset.pattern.permute.xlu0 0
        %1211 = vperm.xlu0 %1210, %v1193
        %v1212 = vpop.permute.xlu0 %1211
        %v1215 = vsel %vm457, %v1185, 0
        %v1218 = vsel %vm457, %v1186, 0
        %v1221 = vsel %vm457, %v1187, 0
        %v1224 = vsel %vm457, %v1188, 0
        %1226 = vmatprep.subr.mxu0 0.0
        %1227 = vmatpush1.msra.mxu0 %v1180
        %1228 = vmatprep.subr.mxu0 0.0
        %1229 = vmatpush1.msra.mxu0 %v1181
        %1230 = vmatprep.subr.mxu0 0.0
        %1231 = vmatpush1.msra.mxu0 %v1182
        %1232 = vmatprep.subr.mxu0 0.0
        %1233 = vmatpush1.msra.mxu0 %v1183
        %1234 = vmatprep.subr.mxu0 0.0
        %1235 = vmatpush1.msra.mxu0 0.0
        %1236 = vmatprep.subr.mxu0 0.0
        %1237 = vmatpush1.msra.mxu0 0.0
        %1238 = vmatprep.subr.mxu0 0.0
        %1239 = vmatpush1.msra.mxu0 0.0
        %1240 = vmatprep.subr.mxu0 0.0
        %1241 = vmatpush1.msra.mxu0 0.0
        %1242 = vmatprep.subr.mxu0 0.0
        %1243 = vmatpush1.msra.mxu0 0.0
        %1244 = vmatprep.subr.mxu0 0.0
        %1245 = vmatpush1.msra.mxu0 0.0
        %1246 = vmatprep.subr.mxu0 0.0
        %1247 = vmatpush1.msra.mxu0 0.0
        %1248 = vmatprep.subr.mxu0 0.0
        %1249 = vmatpush1.msra.mxu0 0.0
        %1250 = vmatprep.subr.mxu0 0.0
        %1251 = vmatpush1.msra.mxu0 0.0
        %1252 = vmatprep.subr.mxu0 0.0
        %1253 = vmatpush1.msra.mxu0 0.0
        %1254 = vmatprep.subr.mxu0 0.0
        %1255 = vmatpush1.msra.mxu0 0.0
        %1256 = vmatprep.subr.mxu0 0.0
        %1257 = vmatpush1.msra.mxu0 0.0
        %1258 = vmatprep.subr.mxu0 0.0
        %1259 = vmatpush1.msra.mxu0 0.0
        %1260 = vmatprep.subr.mxu0 0.0
        %1261 = vmatpush1.msra.mxu0 0.0
        %1262 = vmatprep.subr.mxu0 0.0
        %1263 = vmatpush1.msra.mxu0 0.0
        %1264 = vmatprep.subr.mxu0 0.0
        %1265 = vmatpush1.msra.mxu0 0.0
        %1266 = vmatprep.subr.mxu0 0.0
        %1267 = vmatpush1.msra.mxu0 0.0
        %1268 = vmatprep.subr.mxu0 0.0
        %1269 = vmatpush1.msra.mxu0 0.0
        %1270 = vmatprep.subr.mxu0 0.0
        %1271 = vmatpush1.msra.mxu0 0.0
        %1272 = vmatprep.subr.mxu0 0.0
        %1273 = vmatpush1.msra.mxu0 0.0
        %1274 = vmatprep.subr.mxu0 0.0
        %1275 = vmatpush1.msra.mxu0 0.0
        %1276 = vmatprep.subr.mxu0 0.0
        %1277 = vmatpush1.msra.mxu0 0.0
        %1278 = vmatprep.subr.mxu0 0.0
        %1279 = vmatpush1.msra.mxu0 0.0
        %1280 = vmatprep.subr.mxu0 0.0
        %1281 = vmatpush1.msra.mxu0 0.0
        %1282 = vmatprep.subr.mxu0 0.0
        %1283 = vmatpush1.msra.mxu0 0.0
        %1284 = vmatprep.subr.mxu0 0.0
        %1285 = vmatpush1.msra.mxu0 0.0
        %1286 = vmatprep.subr.mxu0 0.0
        %1287 = vmatpush1.msra.mxu0 0.0
        %1288 = vmatprep.subr.mxu0 0.0
        %1289 = vmatpush1.msra.mxu0 0.0
        %1290 = vmatprep.mubr.f32.mxu0 0.0
        %1291 = vmatmul.mubr.f32.gmra.mrb[0].mxu0 %v1215
        %v1292 = vpop.f32.mrb[0].mxu0
        %v1293 = vadd.f32 %v1197, %v1292
        %v1294 = vpop.f32.mrb[0].mxu0
        %1295 = vmatprep.mubr.f32.mxu0 0.0
        %1296 = vmatmul.mubr.f32.gmra.mrb[0].mxu0 %v1218
        %v1297 = vpop.f32.mrb[0].mxu0
        %v1298 = vadd.f32 %v1202, %v1297
        %v1299 = vpop.f32.mrb[0].mxu0
        %1300 = vmatprep.mubr.f32.mxu0 0.0
        %1301 = vmatmul.mubr.f32.gmra.mrb[0].mxu0 %v1221
        %v1302 = vpop.f32.mrb[0].mxu0
        %v1303 = vadd.f32 %v1207, %v1302
        %v1304 = vpop.f32.mrb[0].mxu0
        %1305 = vmatprep.mubr.f32.mxu0 0.0
        %1306 = vmatmul.mubr.f32.gmra.mrb[0].mxu0 %v1224
        %v1307 = vpop.f32.mrb[0].mxu0
        %v1308 = vadd.f32 %v1212, %v1307
        %v1309 = vpop.f32.mrb[0].mxu0
        %1310 = vdwg.mxu0
        %v1311 = vadd.f32 %v1293, 1.0
        %v1312 = vadd.f32 %v1298, 1.0
        %v1313 = vadd.f32 %v1303, 1.0
        %v1314 = vadd.f32 %v1308, 1.0
        %v1315 = vmul.f32 %v1311, 0.5
        %v1316 = vmul.f32 %v1312, 0.5
        %v1317 = vmul.f32 %v1313, 0.5
        %v1318 = vmul.f32 %v1314, 0.5
        %v1319 = vfloor.f32 %v1315
        %v1320 = vfloor.f32 %v1316
        %v1321 = vfloor.f32 %v1317
        %v1322 = vfloor.f32 %v1318
        %v1323 = vmul.f32 %v1319, 2.0
        %v1324 = vmul.f32 %v1320, 2.0
        %v1325 = vmul.f32 %v1321, 2.0
        %v1326 = vmul.f32 %v1322, 2.0
        %v1327 = vsub.f32 %v1293, %v1323
        %v1328 = vsub.f32 %v1298, %v1324
        %v1329 = vsub.f32 %v1303, %v1325
        %v1330 = vsub.f32 %v1308, %v1326
        %v1331 = vand.u32 2147483647, %v1327
        %v1332 = vand.u32 2147483647, %v1328
        %v1333 = vand.u32 2147483647, %v1329
        %v1334 = vand.u32 2147483647, %v1330
        %v1335 = vand.u32 2147483647, %v1293
        %v1336 = vand.u32 2147483647, %v1298
        %v1337 = vand.u32 2147483647, %v1303
        %v1338 = vand.u32 2147483647, %v1308
        %v1339 = vadd.f32 %v1335, 1.0
        %v1340 = vadd.f32 %v1336, 1.0
        %v1341 = vadd.f32 %v1337, 1.0
        %v1342 = vadd.f32 %v1338, 1.0
        %v1343 = vrcp.pop %v1339
        %v1344 = vrcp.pop %v1340
        %v1345 = vrcp.pop %v1341
        %v1346 = vrcp.pop %v1342
        %v1347 = vmul.f32 %v1339, %v1343
        %v1348 = vmul.f32 %v1340, %v1344
        %v1349 = vmul.f32 %v1341, %v1345
        %v1350 = vmul.f32 %v1342, %v1346
        %v1351 = vsub.f32 2.0, %v1347
        %v1352 = vsub.f32 2.0, %v1348
        %v1353 = vsub.f32 2.0, %v1349
        %v1354 = vsub.f32 2.0, %v1350
        %v1355 = vmul.f32 %v1343, %v1351
        %v1356 = vmul.f32 %v1344, %v1352
        %v1357 = vmul.f32 %v1345, %v1353
        %v1358 = vmul.f32 %v1346, %v1354
        %vm1359 = vcmp.ge.f32.partialorder %v1293, 0.0
        %vm1360 = vcmp.ge.f32.partialorder %v1298, 0.0
        %vm1361 = vcmp.ge.f32.partialorder %v1303, 0.0
        %vm1362 = vcmp.ge.f32.partialorder %v1308, 0.0
        %v1363 = vmul.f32 %v1293, %v1355
        %v1364 = vmul.f32 %v1298, %v1356
        %v1365 = vmul.f32 %v1303, %v1357
        %v1366 = vmul.f32 %v1308, %v1358
        %v1367 = vsel %vm1359, %v1331, %v1363
        %v1368 = vsel %vm1360, %v1332, %v1364
        %v1369 = vsel %vm1361, %v1333, %v1365
        %v1370 = vsel %vm1362, %v1334, %v1366
        %v1371 = vadd.f32 %v1367, %v993
        %v1372 = vadd.f32 %v1368, %v994
        %v1373 = vadd.f32 %v1369, %v995
        %v1374 = vadd.f32 %v1370, %v996
        %v1375 = vld [vmem:[%s4] sm:$0x1]
        %v1377 = vsel %vm457, %v1375, 0
        %1379 = vmatprep.subr.mxu0 0.0
        %1380 = vmatpush1.msra.mxu0 %v1371
        %1381 = vmatprep.subr.mxu0 0.0
        %1382 = vmatpush1.msra.mxu0 %v1372
        %1383 = vmatprep.subr.mxu0 0.0
        %1384 = vmatpush1.msra.mxu0 %v1373
        %1385 = vmatprep.subr.mxu0 0.0
        %1386 = vmatpush1.msra.mxu0 %v1374
        %1387 = vmatprep.subr.mxu0 0.0
        %1388 = vmatpush1.msra.mxu0 0.0
        %1389 = vmatprep.subr.mxu0 0.0
        %1390 = vmatpush1.msra.mxu0 0.0
        %1391 = vmatprep.subr.mxu0 0.0
        %1392 = vmatpush1.msra.mxu0 0.0
        %1393 = vmatprep.subr.mxu0 0.0
        %1394 = vmatpush1.msra.mxu0 0.0
        %1395 = vmatprep.subr.mxu0 0.0
        %1396 = vmatpush1.msra.mxu0 0.0
        %1397 = vmatprep.subr.mxu0 0.0
        %1398 = vmatpush1.msra.mxu0 0.0
        %1399 = vmatprep.subr.mxu0 0.0
        %1400 = vmatpush1.msra.mxu0 0.0
        %1401 = vmatprep.subr.mxu0 0.0
        %1402 = vmatpush1.msra.mxu0 0.0
        %1403 = vmatprep.subr.mxu0 0.0
        %1404 = vmatpush1.msra.mxu0 0.0
        %1405 = vmatprep.subr.mxu0 0.0
        %1406 = vmatpush1.msra.mxu0 0.0
        %1407 = vmatprep.subr.mxu0 0.0
        %1408 = vmatpush1.msra.mxu0 0.0
        %1409 = vmatprep.subr.mxu0 0.0
        %1410 = vmatpush1.msra.mxu0 0.0
        %1411 = vmatprep.subr.mxu0 0.0
        %1412 = vmatpush1.msra.mxu0 0.0
        %1413 = vmatprep.subr.mxu0 0.0
        %1414 = vmatpush1.msra.mxu0 0.0
        %1415 = vmatprep.subr.mxu0 0.0
        %1416 = vmatpush1.msra.mxu0 0.0
        %1417 = vmatprep.subr.mxu0 0.0
        %1418 = vmatpush1.msra.mxu0 0.0
        %1419 = vmatprep.subr.mxu0 0.0
        %1420 = vmatpush1.msra.mxu0 0.0
        %1421 = vmatprep.subr.mxu0 0.0
        %1422 = vmatpush1.msra.mxu0 0.0
        %1423 = vmatprep.subr.mxu0 0.0
        %1424 = vmatpush1.msra.mxu0 0.0
        %1425 = vmatprep.subr.mxu0 0.0
        %1426 = vmatpush1.msra.mxu0 0.0
        %1427 = vmatprep.subr.mxu0 0.0
        %1428 = vmatpush1.msra.mxu0 0.0
        %1429 = vmatprep.subr.mxu0 0.0
        %1430 = vmatpush1.msra.mxu0 0.0
        %1431 = vmatprep.subr.mxu0 0.0
        %1432 = vmatpush1.msra.mxu0 0.0
        %1433 = vmatprep.subr.mxu0 0.0
        %1434 = vmatpush1.msra.mxu0 0.0
        %1435 = vmatprep.subr.mxu0 0.0
        %1436 = vmatpush1.msra.mxu0 0.0
        %1437 = vmatprep.subr.mxu0 0.0
        %1438 = vmatpush1.msra.mxu0 0.0
        %1439 = vmatprep.subr.mxu0 0.0
        %1440 = vmatpush1.msra.mxu0 0.0
        %1441 = vmatprep.subr.mxu0 0.0
        %1442 = vmatpush1.msra.mxu0 0.0
        %1443 = vmatprep.mubr.f32.mxu0 0.0
        %1444 = vmatmul.mubr.f32.gmra.mrb[0].mxu0 %v1377
        %v1445 = vpop.f32.mrb[0].mxu0
        %v1446 = vadd.f32 0.0, %v1445
        %v1447 = vpop.f32.mrb[0].mxu0
        %1448 = vdwg.mxu0
        %v1449 = vlaneseq
        %vm1450 = vcmp.ge.s32.totalorder %v1449, 0
        %vm1451 = vcmp.lt.s32.totalorder %v1449, 128
        %vm1452 = vmand %vm1450, %vm1451
        %1453 = vst.msk [vmem:[%s218] sm:$0x1] %vm1452, %v1446
        %s1454 = scalar_lea.vmem %s223, 4
        %v1455 = vld [vmem:[%s1454] sm:$0x7]
        %v1456 = vld [vmem:[%s1] sm:$0xff]
        %v1457 = vld [vmem:[%s1 + $0x8] sm:$0xff]
        %v1458 = vld [vmem:[%s1 + $0x10] sm:$0xff]
        %v1459 = vld [vmem:[%s1 + $0x18] sm:$0xff]
        %v1460 = vld [vmem:[%s1 + $0x20] sm:$0xff]
        %v1461 = vld [vmem:[%s1 + $0x28] sm:$0xff]
        %v1462 = vld [vmem:[%s1 + $0x30] sm:$0xff]
        %v1463 = vld [vmem:[%s1 + $0x38] sm:$0xff]
        %v1465 = vsel %vm235, %v1456, 0
        %v1468 = vsel %vm235, %v1457, 0
        %v1471 = vsel %vm235, %v1458, 0
        %v1474 = vsel %vm235, %v1459, 0
        %v1477 = vsel %vm235, %v1460, 0
        %v1480 = vsel %vm235, %v1461, 0
        %v1483 = vsel %vm235, %v1462, 0
        %v1486 = vsel %vm235, %v1463, 0
        %v1489 = vsel %vm260, %v1455, 0
        %1491 = vmatprep.subr.mxu0 0.0
        %1492 = vmatpush1.msra.mxu0 %v1489
        %1493 = vmatprep.subr.mxu0 0.0
        %1494 = vmatpush1.msra.mxu0 0.0
        %1495 = vmatprep.subr.mxu0 0.0
        %1496 = vmatpush1.msra.mxu0 0.0
        %1497 = vmatprep.subr.mxu0 0.0
        %1498 = vmatpush1.msra.mxu0 0.0
        %1499 = vmatprep.subr.mxu0 0.0
        %1500 = vmatpush1.msra.mxu0 0.0
        %1501 = vmatprep.subr.mxu0 0.0
        %1502 = vmatpush1.msra.mxu0 0.0
        %1503 = vmatprep.subr.mxu0 0.0
        %1504 = vmatpush1.msra.mxu0 0.0
        %1505 = vmatprep.subr.mxu0 0.0
        %1506 = vmatpush1.msra.mxu0 0.0
        %1507 = vmatprep.subr.mxu0 0.0
        %1508 = vmatpush1.msra.mxu0 0.0
        %1509 = vmatprep.subr.mxu0 0.0
        %1510 = vmatpush1.msra.mxu0 0.0
        %1511 = vmatprep.subr.mxu0 0.0
        %1512 = vmatpush1.msra.mxu0 0.0
        %1513 = vmatprep.subr.mxu0 0.0
        %1514 = vmatpush1.msra.mxu0 0.0
        %1515 = vmatprep.subr.mxu0 0.0
        %1516 = vmatpush1.msra.mxu0 0.0
        %1517 = vmatprep.subr.mxu0 0.0
        %1518 = vmatpush1.msra.mxu0 0.0
        %1519 = vmatprep.subr.mxu0 0.0
        %1520 = vmatpush1.msra.mxu0 0.0
        %1521 = vmatprep.subr.mxu0 0.0
        %1522 = vmatpush1.msra.mxu0 0.0
        %1523 = vmatprep.subr.mxu0 0.0
        %1524 = vmatpush1.msra.mxu0 0.0
        %1525 = vmatprep.subr.mxu0 0.0
        %1526 = vmatpush1.msra.mxu0 0.0
        %1527 = vmatprep.subr.mxu0 0.0
        %1528 = vmatpush1.msra.mxu0 0.0
        %1529 = vmatprep.subr.mxu0 0.0
        %1530 = vmatpush1.msra.mxu0 0.0
        %1531 = vmatprep.subr.mxu0 0.0
        %1532 = vmatpush1.msra.mxu0 0.0
        %1533 = vmatprep.subr.mxu0 0.0
        %1534 = vmatpush1.msra.mxu0 0.0
        %1535 = vmatprep.subr.mxu0 0.0
        %1536 = vmatpush1.msra.mxu0 0.0
        %1537 = vmatprep.subr.mxu0 0.0
        %1538 = vmatpush1.msra.mxu0 0.0
        %1539 = vmatprep.subr.mxu0 0.0
        %1540 = vmatpush1.msra.mxu0 0.0
        %1541 = vmatprep.subr.mxu0 0.0
        %1542 = vmatpush1.msra.mxu0 0.0
        %1543 = vmatprep.subr.mxu0 0.0
        %1544 = vmatpush1.msra.mxu0 0.0
        %1545 = vmatprep.subr.mxu0 0.0
        %1546 = vmatpush1.msra.mxu0 0.0
        %1547 = vmatprep.subr.mxu0 0.0
        %1548 = vmatpush1.msra.mxu0 0.0
        %1549 = vmatprep.subr.mxu0 0.0
        %1550 = vmatpush1.msra.mxu0 0.0
        %1551 = vmatprep.subr.mxu0 0.0
        %1552 = vmatpush1.msra.mxu0 0.0
        %1553 = vmatprep.subr.mxu0 0.0
        %1554 = vmatpush1.msra.mxu0 0.0
        %1555 = vmatprep.mubr.f32.mxu0 0.0
        %1556 = vmatmul.mubr.f32.gmra.mrb[0].mxu0 %v1465
        %v1557 = vpop.f32.mrb[0].mxu0
        %v1558 = vadd.f32 0.0, %v1557
        %v1559 = vpop.f32.mrb[0].mxu0
        %1560 = vmatprep.mubr.f32.mxu0 0.0
        %1561 = vmatmul.mubr.f32.gmra.mrb[0].mxu0 %v1468
        %v1562 = vpop.f32.mrb[0].mxu0
        %v1563 = vadd.f32 0.0, %v1562
        %v1564 = vpop.f32.mrb[0].mxu0
        %1565 = vmatprep.mubr.f32.mxu0 0.0
        %1566 = vmatmul.mubr.f32.gmra.mrb[0].mxu0 %v1471
        %v1567 = vpop.f32.mrb[0].mxu0
        %v1568 = vadd.f32 0.0, %v1567
        %v1569 = vpop.f32.mrb[0].mxu0
        %1570 = vmatprep.mubr.f32.mxu0 0.0
        %1571 = vmatmul.mubr.f32.gmra.mrb[0].mxu0 %v1474
        %v1572 = vpop.f32.mrb[0].mxu0
        %v1573 = vadd.f32 0.0, %v1572
        %v1574 = vpop.f32.mrb[0].mxu0
        %1575 = vmatprep.mubr.f32.mxu0 0.0
        %1576 = vmatmul.mubr.f32.gmra.mrb[0].mxu0 %v1477
        %v1577 = vpop.f32.mrb[0].mxu0
        %v1578 = vadd.f32 0.0, %v1577
        %v1579 = vpop.f32.mrb[0].mxu0
        %1580 = vmatprep.mubr.f32.mxu0 0.0
        %1581 = vmatmul.mubr.f32.gmra.mrb[0].mxu0 %v1480
        %v1582 = vpop.f32.mrb[0].mxu0
        %v1583 = vadd.f32 0.0, %v1582
        %v1584 = vpop.f32.mrb[0].mxu0
        %1585 = vmatprep.mubr.f32.mxu0 0.0
        %1586 = vmatmul.mubr.f32.gmra.mrb[0].mxu0 %v1483
        %v1587 = vpop.f32.mrb[0].mxu0
        %v1588 = vadd.f32 0.0, %v1587
        %v1589 = vpop.f32.mrb[0].mxu0
        %1590 = vmatprep.mubr.f32.mxu0 0.0
        %1591 = vmatmul.mubr.f32.gmra.mrb[0].mxu0 %v1486
        %v1592 = vpop.f32.mrb[0].mxu0
        %v1593 = vadd.f32 0.0, %v1592
        %v1594 = vpop.f32.mrb[0].mxu0
        %1595 = vdwg.mxu0
        %v1596 = vadd.f32 %v1578, 1.0
        %v1597 = vadd.f32 %v1583, 1.0
        %v1598 = vadd.f32 %v1588, 1.0
        %v1599 = vadd.f32 %v1593, 1.0
        %v1600 = vmul.f32 %v1596, 0.5
        %v1601 = vmul.f32 %v1597, 0.5
        %v1602 = vmul.f32 %v1598, 0.5
        %v1603 = vmul.f32 %v1599, 0.5
        %v1604 = vfloor.f32 %v1600
        %v1605 = vfloor.f32 %v1601
        %v1606 = vfloor.f32 %v1602
        %v1607 = vfloor.f32 %v1603
        %v1608 = vmul.f32 %v1604, 2.0
        %v1609 = vmul.f32 %v1605, 2.0
        %v1610 = vmul.f32 %v1606, 2.0
        %v1611 = vmul.f32 %v1607, 2.0
        %v1612 = vsub.f32 %v1578, %v1608
        %v1613 = vsub.f32 %v1583, %v1609
        %v1614 = vsub.f32 %v1588, %v1610
        %v1615 = vsub.f32 %v1593, %v1611
        %v1616 = vand.u32 2147483647, %v1612
        %v1617 = vand.u32 2147483647, %v1613
        %v1618 = vand.u32 2147483647, %v1614
        %v1619 = vand.u32 2147483647, %v1615
        %v1620 = vand.u32 2147483647, %v1578
        %v1621 = vand.u32 2147483647, %v1583
        %v1622 = vand.u32 2147483647, %v1588
        %v1623 = vand.u32 2147483647, %v1593
        %v1624 = vadd.f32 %v1620, 1.0
        %v1625 = vadd.f32 %v1621, 1.0
        %v1626 = vadd.f32 %v1622, 1.0
        %v1627 = vadd.f32 %v1623, 1.0
        %v1628 = vrcp.pop %v1624
        %v1629 = vrcp.pop %v1625
        %v1630 = vrcp.pop %v1626
        %v1631 = vrcp.pop %v1627
        %v1632 = vmul.f32 %v1624, %v1628
        %v1633 = vmul.f32 %v1625, %v1629
        %v1634 = vmul.f32 %v1626, %v1630
        %v1635 = vmul.f32 %v1627, %v1631
        %v1636 = vsub.f32 2.0, %v1632
        %v1637 = vsub.f32 2.0, %v1633
        %v1638 = vsub.f32 2.0, %v1634
        %v1639 = vsub.f32 2.0, %v1635
        %v1640 = vmul.f32 %v1628, %v1636
        %v1641 = vmul.f32 %v1629, %v1637
        %v1642 = vmul.f32 %v1630, %v1638
        %v1643 = vmul.f32 %v1631, %v1639
        %vm1644 = vcmp.ge.f32.partialorder %v1578, 0.0
        %vm1645 = vcmp.ge.f32.partialorder %v1583, 0.0
        %vm1646 = vcmp.ge.f32.partialorder %v1588, 0.0
        %vm1647 = vcmp.ge.f32.partialorder %v1593, 0.0
        %v1648 = vmul.f32 %v1578, %v1640
        %v1649 = vmul.f32 %v1583, %v1641
        %v1650 = vmul.f32 %v1588, %v1642
        %v1651 = vmul.f32 %v1593, %v1643
        %v1652 = vsel %vm1644, %v1616, %v1648
        %v1653 = vsel %vm1645, %v1617, %v1649
        %v1654 = vsel %vm1646, %v1618, %v1650
        %v1655 = vsel %vm1647, %v1619, %v1651
        %v1656 = vld [vmem:[%s2] sm:$0xff]
        %v1657 = vld [vmem:[%s2 + $0x8] sm:$0xff]
        %v1658 = vld [vmem:[%s2 + $0x10] sm:$0xff]
        %v1659 = vld [vmem:[%s2 + $0x18] sm:$0xff]
        %v1660 = vld [vmem:[%s3] sm:$0xff]
        %v1661 = vld [vmem:[%s3 + $0x8] sm:$0xff]
        %v1662 = vld [vmem:[%s3 + $0x10] sm:$0xff]
        %v1663 = vld [vmem:[%s3 + $0x18] sm:$0xff]
        %1665 = vset.pattern.permute.xlu0 0
        %1666 = vperm.xlu0 %1665, %v1660
        %v1667 = vpop.permute.xlu0 %1666
        %1670 = vset.pattern.permute.xlu0 0
        %1671 = vperm.xlu0 %1670, %v1661
        %v1672 = vpop.permute.xlu0 %1671
        %1675 = vset.pattern.permute.xlu0 0
        %1676 = vperm.xlu0 %1675, %v1662
        %v1677 = vpop.permute.xlu0 %1676
        %1680 = vset.pattern.permute.xlu0 0
        %1681 = vperm.xlu0 %1680, %v1663
        %v1682 = vpop.permute.xlu0 %1681
        %v1685 = vsel %vm457, %v1656, 0
        %v1688 = vsel %vm457, %v1657, 0
        %v1691 = vsel %vm457, %v1658, 0
        %v1694 = vsel %vm457, %v1659, 0
        %1696 = vmatprep.subr.mxu0 0.0
        %1697 = vmatpush1.msra.mxu0 %v1652
        %1698 = vmatprep.subr.mxu0 0.0
        %1699 = vmatpush1.msra.mxu0 %v1653
        %1700 = vmatprep.subr.mxu0 0.0
        %1701 = vmatpush1.msra.mxu0 %v1654
        %1702 = vmatprep.subr.mxu0 0.0
        %1703 = vmatpush1.msra.mxu0 %v1655
        %1704 = vmatprep.subr.mxu0 0.0
        %1705 = vmatpush1.msra.mxu0 0.0
        %1706 = vmatprep.subr.mxu0 0.0
        %1707 = vmatpush1.msra.mxu0 0.0
        %1708 = vmatprep.subr.mxu0 0.0
        %1709 = vmatpush1.msra.mxu0 0.0
        %1710 = vmatprep.subr.mxu0 0.0
        %1711 = vmatpush1.msra.mxu0 0.0
        %1712 = vmatprep.subr.mxu0 0.0
        %1713 = vmatpush1.msra.mxu0 0.0
        %1714 = vmatprep.subr.mxu0 0.0
        %1715 = vmatpush1.msra.mxu0 0.0
        %1716 = vmatprep.subr.mxu0 0.0
        %1717 = vmatpush1.msra.mxu0 0.0
        %1718 = vmatprep.subr.mxu0 0.0
        %1719 = vmatpush1.msra.mxu0 0.0
        %1720 = vmatprep.subr.mxu0 0.0
        %1721 = vmatpush1.msra.mxu0 0.0
        %1722 = vmatprep.subr.mxu0 0.0
        %1723 = vmatpush1.msra.mxu0 0.0
        %1724 = vmatprep.subr.mxu0 0.0
        %1725 = vmatpush1.msra.mxu0 0.0
        %1726 = vmatprep.subr.mxu0 0.0
        %1727 = vmatpush1.msra.mxu0 0.0
        %1728 = vmatprep.subr.mxu0 0.0
        %1729 = vmatpush1.msra.mxu0 0.0
        %1730 = vmatprep.subr.mxu0 0.0
        %1731 = vmatpush1.msra.mxu0 0.0
        %1732 = vmatprep.subr.mxu0 0.0
        %1733 = vmatpush1.msra.mxu0 0.0
        %1734 = vmatprep.subr.mxu0 0.0
        %1735 = vmatpush1.msra.mxu0 0.0
        %1736 = vmatprep.subr.mxu0 0.0
        %1737 = vmatpush1.msra.mxu0 0.0
        %1738 = vmatprep.subr.mxu0 0.0
        %1739 = vmatpush1.msra.mxu0 0.0
        %1740 = vmatprep.subr.mxu0 0.0
        %1741 = vmatpush1.msra.mxu0 0.0
        %1742 = vmatprep.subr.mxu0 0.0
        %1743 = vmatpush1.msra.mxu0 0.0
        %1744 = vmatprep.subr.mxu0 0.0
        %1745 = vmatpush1.msra.mxu0 0.0
        %1746 = vmatprep.subr.mxu0 0.0
        %1747 = vmatpush1.msra.mxu0 0.0
        %1748 = vmatprep.subr.mxu0 0.0
        %1749 = vmatpush1.msra.mxu0 0.0
        %1750 = vmatprep.subr.mxu0 0.0
        %1751 = vmatpush1.msra.mxu0 0.0
        %1752 = vmatprep.subr.mxu0 0.0
        %1753 = vmatpush1.msra.mxu0 0.0
        %1754 = vmatprep.subr.mxu0 0.0
        %1755 = vmatpush1.msra.mxu0 0.0
        %1756 = vmatprep.subr.mxu0 0.0
        %1757 = vmatpush1.msra.mxu0 0.0
        %1758 = vmatprep.subr.mxu0 0.0
        %1759 = vmatpush1.msra.mxu0 0.0
        %1760 = vmatprep.mubr.f32.mxu0 0.0
        %1761 = vmatmul.mubr.f32.gmra.mrb[0].mxu0 %v1685
        %v1762 = vpop.f32.mrb[0].mxu0
        %v1763 = vadd.f32 %v1667, %v1762
        %v1764 = vpop.f32.mrb[0].mxu0
        %1765 = vmatprep.mubr.f32.mxu0 0.0
        %1766 = vmatmul.mubr.f32.gmra.mrb[0].mxu0 %v1688
        %v1767 = vpop.f32.mrb[0].mxu0
        %v1768 = vadd.f32 %v1672, %v1767
        %v1769 = vpop.f32.mrb[0].mxu0
        %1770 = vmatprep.mubr.f32.mxu0 0.0
        %1771 = vmatmul.mubr.f32.gmra.mrb[0].mxu0 %v1691
        %v1772 = vpop.f32.mrb[0].mxu0
        %v1773 = vadd.f32 %v1677, %v1772
        %v1774 = vpop.f32.mrb[0].mxu0
        %1775 = vmatprep.mubr.f32.mxu0 0.0
        %1776 = vmatmul.mubr.f32.gmra.mrb[0].mxu0 %v1694
        %v1777 = vpop.f32.mrb[0].mxu0
        %v1778 = vadd.f32 %v1682, %v1777
        %v1779 = vpop.f32.mrb[0].mxu0
        %1780 = vdwg.mxu0
        %v1781 = vadd.f32 %v1763, 1.0
        %v1782 = vadd.f32 %v1768, 1.0
        %v1783 = vadd.f32 %v1773, 1.0
        %v1784 = vadd.f32 %v1778, 1.0
        %v1785 = vmul.f32 %v1781, 0.5
        %v1786 = vmul.f32 %v1782, 0.5
        %v1787 = vmul.f32 %v1783, 0.5
        %v1788 = vmul.f32 %v1784, 0.5
        %v1789 = vfloor.f32 %v1785
        %v1790 = vfloor.f32 %v1786
        %v1791 = vfloor.f32 %v1787
        %v1792 = vfloor.f32 %v1788
        %v1793 = vmul.f32 %v1789, 2.0
        %v1794 = vmul.f32 %v1790, 2.0
        %v1795 = vmul.f32 %v1791, 2.0
        %v1796 = vmul.f32 %v1792, 2.0
        %v1797 = vsub.f32 %v1763, %v1793
        %v1798 = vsub.f32 %v1768, %v1794
        %v1799 = vsub.f32 %v1773, %v1795
        %v1800 = vsub.f32 %v1778, %v1796
        %v1801 = vand.u32 2147483647, %v1797
        %v1802 = vand.u32 2147483647, %v1798
        %v1803 = vand.u32 2147483647, %v1799
        %v1804 = vand.u32 2147483647, %v1800
        %v1805 = vand.u32 2147483647, %v1763
        %v1806 = vand.u32 2147483647, %v1768
        %v1807 = vand.u32 2147483647, %v1773
        %v1808 = vand.u32 2147483647, %v1778
        %v1809 = vadd.f32 %v1805, 1.0
        %v1810 = vadd.f32 %v1806, 1.0
        %v1811 = vadd.f32 %v1807, 1.0
        %v1812 = vadd.f32 %v1808, 1.0
        %v1813 = vrcp.pop %v1809
        %v1814 = vrcp.pop %v1810
        %v1815 = vrcp.pop %v1811
        %v1816 = vrcp.pop %v1812
        %v1817 = vmul.f32 %v1809, %v1813
        %v1818 = vmul.f32 %v1810, %v1814
        %v1819 = vmul.f32 %v1811, %v1815
        %v1820 = vmul.f32 %v1812, %v1816
        %v1821 = vsub.f32 2.0, %v1817
        %v1822 = vsub.f32 2.0, %v1818
        %v1823 = vsub.f32 2.0, %v1819
        %v1824 = vsub.f32 2.0, %v1820
        %v1825 = vmul.f32 %v1813, %v1821
        %v1826 = vmul.f32 %v1814, %v1822
        %v1827 = vmul.f32 %v1815, %v1823
        %v1828 = vmul.f32 %v1816, %v1824
        %vm1829 = vcmp.ge.f32.partialorder %v1763, 0.0
        %vm1830 = vcmp.ge.f32.partialorder %v1768, 0.0
        %vm1831 = vcmp.ge.f32.partialorder %v1773, 0.0
        %vm1832 = vcmp.ge.f32.partialorder %v1778, 0.0
        %v1833 = vmul.f32 %v1763, %v1825
        %v1834 = vmul.f32 %v1768, %v1826
        %v1835 = vmul.f32 %v1773, %v1827
        %v1836 = vmul.f32 %v1778, %v1828
        %v1837 = vsel %vm1829, %v1801, %v1833
        %v1838 = vsel %vm1830, %v1802, %v1834
        %v1839 = vsel %vm1831, %v1803, %v1835
        %v1840 = vsel %vm1832, %v1804, %v1836
        %v1841 = vadd.f32 %v1837, %v1558
        %v1842 = vadd.f32 %v1838, %v1563
        %v1843 = vadd.f32 %v1839, %v1568
        %v1844 = vadd.f32 %v1840, %v1573
        %v1845 = vld [vmem:[%s619] sm:$0xff]
        %v1846 = vld [vmem:[%s619 + $0x8] sm:$0xff]
        %v1847 = vld [vmem:[%s619 + $0x10] sm:$0xff]
        %v1848 = vld [vmem:[%s619 + $0x18] sm:$0xff]
        %v1849 = vld [vmem:[%s624] sm:$0xff]
        %v1850 = vld [vmem:[%s624 + $0x8] sm:$0xff]
        %v1851 = vld [vmem:[%s624 + $0x10] sm:$0xff]
        %v1852 = vld [vmem:[%s624 + $0x18] sm:$0xff]
        %1854 = vset.pattern.permute.xlu0 0
        %1855 = vperm.xlu0 %1854, %v1849
        %v1856 = vpop.permute.xlu0 %1855
        %1859 = vset.pattern.permute.xlu0 0
        %1860 = vperm.xlu0 %1859, %v1850
        %v1861 = vpop.permute.xlu0 %1860
        %1864 = vset.pattern.permute.xlu0 0
        %1865 = vperm.xlu0 %1864, %v1851
        %v1866 = vpop.permute.xlu0 %1865
        %1869 = vset.pattern.permute.xlu0 0
        %1870 = vperm.xlu0 %1869, %v1852
        %v1871 = vpop.permute.xlu0 %1870
        %v1874 = vsel %vm457, %v1845, 0
        %v1877 = vsel %vm457, %v1846, 0
        %v1880 = vsel %vm457, %v1847, 0
        %v1883 = vsel %vm457, %v1848, 0
        %1885 = vmatprep.subr.mxu0 0.0
        %1886 = vmatpush1.msra.mxu0 %v1841
        %1887 = vmatprep.subr.mxu0 0.0
        %1888 = vmatpush1.msra.mxu0 %v1842
        %1889 = vmatprep.subr.mxu0 0.0
        %1890 = vmatpush1.msra.mxu0 %v1843
        %1891 = vmatprep.subr.mxu0 0.0
        %1892 = vmatpush1.msra.mxu0 %v1844
        %1893 = vmatprep.subr.mxu0 0.0
        %1894 = vmatpush1.msra.mxu0 0.0
        %1895 = vmatprep.subr.mxu0 0.0
        %1896 = vmatpush1.msra.mxu0 0.0
        %1897 = vmatprep.subr.mxu0 0.0
        %1898 = vmatpush1.msra.mxu0 0.0
        %1899 = vmatprep.subr.mxu0 0.0
        %1900 = vmatpush1.msra.mxu0 0.0
        %1901 = vmatprep.subr.mxu0 0.0
        %1902 = vmatpush1.msra.mxu0 0.0
        %1903 = vmatprep.subr.mxu0 0.0
        %1904 = vmatpush1.msra.mxu0 0.0
        %1905 = vmatprep.subr.mxu0 0.0
        %1906 = vmatpush1.msra.mxu0 0.0
        %1907 = vmatprep.subr.mxu0 0.0
        %1908 = vmatpush1.msra.mxu0 0.0
        %1909 = vmatprep.subr.mxu0 0.0
        %1910 = vmatpush1.msra.mxu0 0.0
        %1911 = vmatprep.subr.mxu0 0.0
        %1912 = vmatpush1.msra.mxu0 0.0
        %1913 = vmatprep.subr.mxu0 0.0
        %1914 = vmatpush1.msra.mxu0 0.0
        %1915 = vmatprep.subr.mxu0 0.0
        %1916 = vmatpush1.msra.mxu0 0.0
        %1917 = vmatprep.subr.mxu0 0.0
        %1918 = vmatpush1.msra.mxu0 0.0
        %1919 = vmatprep.subr.mxu0 0.0
        %1920 = vmatpush1.msra.mxu0 0.0
        %1921 = vmatprep.subr.mxu0 0.0
        %1922 = vmatpush1.msra.mxu0 0.0
        %1923 = vmatprep.subr.mxu0 0.0
        %1924 = vmatpush1.msra.mxu0 0.0
        %1925 = vmatprep.subr.mxu0 0.0
        %1926 = vmatpush1.msra.mxu0 0.0
        %1927 = vmatprep.subr.mxu0 0.0
        %1928 = vmatpush1.msra.mxu0 0.0
        %1929 = vmatprep.subr.mxu0 0.0
        %1930 = vmatpush1.msra.mxu0 0.0
        %1931 = vmatprep.subr.mxu0 0.0
        %1932 = vmatpush1.msra.mxu0 0.0
        %1933 = vmatprep.subr.mxu0 0.0
        %1934 = vmatpush1.msra.mxu0 0.0
        %1935 = vmatprep.subr.mxu0 0.0
        %1936 = vmatpush1.msra.mxu0 0.0
        %1937 = vmatprep.subr.mxu0 0.0
        %1938 = vmatpush1.msra.mxu0 0.0
        %1939 = vmatprep.subr.mxu0 0.0
        %1940 = vmatpush1.msra.mxu0 0.0
        %1941 = vmatprep.subr.mxu0 0.0
        %1942 = vmatpush1.msra.mxu0 0.0
        %1943 = vmatprep.subr.mxu0 0.0
        %1944 = vmatpush1.msra.mxu0 0.0
        %1945 = vmatprep.subr.mxu0 0.0
        %1946 = vmatpush1.msra.mxu0 0.0
        %1947 = vmatprep.subr.mxu0 0.0
        %1948 = vmatpush1.msra.mxu0 0.0
        %1949 = vmatprep.mubr.f32.mxu0 0.0
        %1950 = vmatmul.mubr.f32.gmra.mrb[0].mxu0 %v1874
        %v1951 = vpop.f32.mrb[0].mxu0
        %v1952 = vadd.f32 %v1856, %v1951
        %v1953 = vpop.f32.mrb[0].mxu0
        %1954 = vmatprep.mubr.f32.mxu0 0.0
        %1955 = vmatmul.mubr.f32.gmra.mrb[0].mxu0 %v1877
        %v1956 = vpop.f32.mrb[0].mxu0
        %v1957 = vadd.f32 %v1861, %v1956
        %v1958 = vpop.f32.mrb[0].mxu0
        %1959 = vmatprep.mubr.f32.mxu0 0.0
        %1960 = vmatmul.mubr.f32.gmra.mrb[0].mxu0 %v1880
        %v1961 = vpop.f32.mrb[0].mxu0
        %v1962 = vadd.f32 %v1866, %v1961
        %v1963 = vpop.f32.mrb[0].mxu0
        %1964 = vmatprep.mubr.f32.mxu0 0.0
        %1965 = vmatmul.mubr.f32.gmra.mrb[0].mxu0 %v1883
        %v1966 = vpop.f32.mrb[0].mxu0
        %v1967 = vadd.f32 %v1871, %v1966
        %v1968 = vpop.f32.mrb[0].mxu0
        %1969 = vdwg.mxu0
        %v1970 = vadd.f32 %v1952, 1.0
        %v1971 = vadd.f32 %v1957, 1.0
        %v1972 = vadd.f32 %v1962, 1.0
        %v1973 = vadd.f32 %v1967, 1.0
        %v1974 = vmul.f32 %v1970, 0.5
        %v1975 = vmul.f32 %v1971, 0.5
        %v1976 = vmul.f32 %v1972, 0.5
        %v1977 = vmul.f32 %v1973, 0.5
        %v1978 = vfloor.f32 %v1974
        %v1979 = vfloor.f32 %v1975
        %v1980 = vfloor.f32 %v1976
        %v1981 = vfloor.f32 %v1977
        %v1982 = vmul.f32 %v1978, 2.0
        %v1983 = vmul.f32 %v1979, 2.0
        %v1984 = vmul.f32 %v1980, 2.0
        %v1985 = vmul.f32 %v1981, 2.0
        %v1986 = vsub.f32 %v1952, %v1982
        %v1987 = vsub.f32 %v1957, %v1983
        %v1988 = vsub.f32 %v1962, %v1984
        %v1989 = vsub.f32 %v1967, %v1985
        %v1990 = vand.u32 2147483647, %v1986
        %v1991 = vand.u32 2147483647, %v1987
        %v1992 = vand.u32 2147483647, %v1988
        %v1993 = vand.u32 2147483647, %v1989
        %v1994 = vand.u32 2147483647, %v1952
        %v1995 = vand.u32 2147483647, %v1957
        %v1996 = vand.u32 2147483647, %v1962
        %v1997 = vand.u32 2147483647, %v1967
        %v1998 = vadd.f32 %v1994, 1.0
        %v1999 = vadd.f32 %v1995, 1.0
        %v2000 = vadd.f32 %v1996, 1.0
        %v2001 = vadd.f32 %v1997, 1.0
        %v2002 = vrcp.pop %v1998
        %v2003 = vrcp.pop %v1999
        %v2004 = vrcp.pop %v2000
        %v2005 = vrcp.pop %v2001
        %v2006 = vmul.f32 %v1998, %v2002
        %v2007 = vmul.f32 %v1999, %v2003
        %v2008 = vmul.f32 %v2000, %v2004
        %v2009 = vmul.f32 %v2001, %v2005
        %v2010 = vsub.f32 2.0, %v2006
        %v2011 = vsub.f32 2.0, %v2007
        %v2012 = vsub.f32 2.0, %v2008
        %v2013 = vsub.f32 2.0, %v2009
        %v2014 = vmul.f32 %v2002, %v2010
        %v2015 = vmul.f32 %v2003, %v2011
        %v2016 = vmul.f32 %v2004, %v2012
        %v2017 = vmul.f32 %v2005, %v2013
        %vm2018 = vcmp.ge.f32.partialorder %v1952, 0.0
        %vm2019 = vcmp.ge.f32.partialorder %v1957, 0.0
        %vm2020 = vcmp.ge.f32.partialorder %v1962, 0.0
        %vm2021 = vcmp.ge.f32.partialorder %v1967, 0.0
        %v2022 = vmul.f32 %v1952, %v2014
        %v2023 = vmul.f32 %v1957, %v2015
        %v2024 = vmul.f32 %v1962, %v2016
        %v2025 = vmul.f32 %v1967, %v2017
        %v2026 = vsel %vm2018, %v1990, %v2022
        %v2027 = vsel %vm2019, %v1991, %v2023
        %v2028 = vsel %vm2020, %v1992, %v2024
        %v2029 = vsel %vm2021, %v1993, %v2025
        %v2030 = vld [vmem:[%s806] sm:$0xff]
        %v2031 = vld [vmem:[%s806 + $0x8] sm:$0xff]
        %v2032 = vld [vmem:[%s806 + $0x10] sm:$0xff]
        %v2033 = vld [vmem:[%s806 + $0x18] sm:$0xff]
        %v2034 = vld [vmem:[%s811] sm:$0xff]
        %v2035 = vld [vmem:[%s811 + $0x8] sm:$0xff]
        %v2036 = vld [vmem:[%s811 + $0x10] sm:$0xff]
        %v2037 = vld [vmem:[%s811 + $0x18] sm:$0xff]
        %2039 = vset.pattern.permute.xlu0 0
        %2040 = vperm.xlu0 %2039, %v2034
        %v2041 = vpop.permute.xlu0 %2040
        %2044 = vset.pattern.permute.xlu0 0
        %2045 = vperm.xlu0 %2044, %v2035
        %v2046 = vpop.permute.xlu0 %2045
        %2049 = vset.pattern.permute.xlu0 0
        %2050 = vperm.xlu0 %2049, %v2036
        %v2051 = vpop.permute.xlu0 %2050
        %2054 = vset.pattern.permute.xlu0 0
        %2055 = vperm.xlu0 %2054, %v2037
        %v2056 = vpop.permute.xlu0 %2055
        %v2059 = vsel %vm457, %v2030, 0
        %v2062 = vsel %vm457, %v2031, 0
        %v2065 = vsel %vm457, %v2032, 0
        %v2068 = vsel %vm457, %v2033, 0
        %2070 = vmatprep.subr.mxu0 0.0
        %2071 = vmatpush1.msra.mxu0 %v2026
        %2072 = vmatprep.subr.mxu0 0.0
        %2073 = vmatpush1.msra.mxu0 %v2027
        %2074 = vmatprep.subr.mxu0 0.0
        %2075 = vmatpush1.msra.mxu0 %v2028
        %2076 = vmatprep.subr.mxu0 0.0
        %2077 = vmatpush1.msra.mxu0 %v2029
        %2078 = vmatprep.subr.mxu0 0.0
        %2079 = vmatpush1.msra.mxu0 0.0
        %2080 = vmatprep.subr.mxu0 0.0
        %2081 = vmatpush1.msra.mxu0 0.0
        %2082 = vmatprep.subr.mxu0 0.0
        %2083 = vmatpush1.msra.mxu0 0.0
        %2084 = vmatprep.subr.mxu0 0.0
        %2085 = vmatpush1.msra.mxu0 0.0
        %2086 = vmatprep.subr.mxu0 0.0
        %2087 = vmatpush1.msra.mxu0 0.0
        %2088 = vmatprep.subr.mxu0 0.0
        %2089 = vmatpush1.msra.mxu0 0.0
        %2090 = vmatprep.subr.mxu0 0.0
        %2091 = vmatpush1.msra.mxu0 0.0
        %2092 = vmatprep.subr.mxu0 0.0
        %2093 = vmatpush1.msra.mxu0 0.0
        %2094 = vmatprep.subr.mxu0 0.0
        %2095 = vmatpush1.msra.mxu0 0.0
        %2096 = vmatprep.subr.mxu0 0.0
        %2097 = vmatpush1.msra.mxu0 0.0
        %2098 = vmatprep.subr.mxu0 0.0
        %2099 = vmatpush1.msra.mxu0 0.0
        %2100 = vmatprep.subr.mxu0 0.0
        %2101 = vmatpush1.msra.mxu0 0.0
        %2102 = vmatprep.subr.mxu0 0.0
        %2103 = vmatpush1.msra.mxu0 0.0
        %2104 = vmatprep.subr.mxu0 0.0
        %2105 = vmatpush1.msra.mxu0 0.0
        %2106 = vmatprep.subr.mxu0 0.0
        %2107 = vmatpush1.msra.mxu0 0.0
        %2108 = vmatprep.subr.mxu0 0.0
        %2109 = vmatpush1.msra.mxu0 0.0
        %2110 = vmatprep.subr.mxu0 0.0
        %2111 = vmatpush1.msra.mxu0 0.0
        %2112 = vmatprep.subr.mxu0 0.0
        %2113 = vmatpush1.msra.mxu0 0.0
        %2114 = vmatprep.subr.mxu0 0.0
        %2115 = vmatpush1.msra.mxu0 0.0
        %2116 = vmatprep.subr.mxu0 0.0
        %2117 = vmatpush1.msra.mxu0 0.0
        %2118 = vmatprep.subr.mxu0 0.0
        %2119 = vmatpush1.msra.mxu0 0.0
        %2120 = vmatprep.subr.mxu0 0.0
        %2121 = vmatpush1.msra.mxu0 0.0
        %2122 = vmatprep.subr.mxu0 0.0
        %2123 = vmatpush1.msra.mxu0 0.0
        %2124 = vmatprep.subr.mxu0 0.0
        %2125 = vmatpush1.msra.mxu0 0.0
        %2126 = vmatprep.subr.mxu0 0.0
        %2127 = vmatpush1.msra.mxu0 0.0
        %2128 = vmatprep.subr.mxu0 0.0
        %2129 = vmatpush1.msra.mxu0 0.0
        %2130 = vmatprep.subr.mxu0 0.0
        %2131 = vmatpush1.msra.mxu0 0.0
        %2132 = vmatprep.subr.mxu0 0.0
        %2133 = vmatpush1.msra.mxu0 0.0
        %2134 = vmatprep.mubr.f32.mxu0 0.0
        %2135 = vmatmul.mubr.f32.gmra.mrb[0].mxu0 %v2059
        %v2136 = vpop.f32.mrb[0].mxu0
        %v2137 = vadd.f32 %v2041, %v2136
        %v2138 = vpop.f32.mrb[0].mxu0
        %2139 = vmatprep.mubr.f32.mxu0 0.0
        %2140 = vmatmul.mubr.f32.gmra.mrb[0].mxu0 %v2062
        %v2141 = vpop.f32.mrb[0].mxu0
        %v2142 = vadd.f32 %v2046, %v2141
        %v2143 = vpop.f32.mrb[0].mxu0
        %2144 = vmatprep.mubr.f32.mxu0 0.0
        %2145 = vmatmul.mubr.f32.gmra.mrb[0].mxu0 %v2065
        %v2146 = vpop.f32.mrb[0].mxu0
        %v2147 = vadd.f32 %v2051, %v2146
        %v2148 = vpop.f32.mrb[0].mxu0
        %2149 = vmatprep.mubr.f32.mxu0 0.0
        %2150 = vmatmul.mubr.f32.gmra.mrb[0].mxu0 %v2068
        %v2151 = vpop.f32.mrb[0].mxu0
        %v2152 = vadd.f32 %v2056, %v2151
        %v2153 = vpop.f32.mrb[0].mxu0
        %2154 = vdwg.mxu0
        %v2155 = vadd.f32 %v2137, 1.0
        %v2156 = vadd.f32 %v2142, 1.0
        %v2157 = vadd.f32 %v2147, 1.0
        %v2158 = vadd.f32 %v2152, 1.0
        %v2159 = vmul.f32 %v2155, 0.5
        %v2160 = vmul.f32 %v2156, 0.5
        %v2161 = vmul.f32 %v2157, 0.5
        %v2162 = vmul.f32 %v2158, 0.5
        %v2163 = vfloor.f32 %v2159
        %v2164 = vfloor.f32 %v2160
        %v2165 = vfloor.f32 %v2161
        %v2166 = vfloor.f32 %v2162
        %v2167 = vmul.f32 %v2163, 2.0
        %v2168 = vmul.f32 %v2164, 2.0
        %v2169 = vmul.f32 %v2165, 2.0
        %v2170 = vmul.f32 %v2166, 2.0
        %v2171 = vsub.f32 %v2137, %v2167
        %v2172 = vsub.f32 %v2142, %v2168
        %v2173 = vsub.f32 %v2147, %v2169
        %v2174 = vsub.f32 %v2152, %v2170
        %v2175 = vand.u32 2147483647, %v2171
        %v2176 = vand.u32 2147483647, %v2172
        %v2177 = vand.u32 2147483647, %v2173
        %v2178 = vand.u32 2147483647, %v2174
        %v2179 = vand.u32 2147483647, %v2137
        %v2180 = vand.u32 2147483647, %v2142
        %v2181 = vand.u32 2147483647, %v2147
        %v2182 = vand.u32 2147483647, %v2152
        %v2183 = vadd.f32 %v2179, 1.0
        %v2184 = vadd.f32 %v2180, 1.0
        %v2185 = vadd.f32 %v2181, 1.0
        %v2186 = vadd.f32 %v2182, 1.0
        %v2187 = vrcp.pop %v2183
        %v2188 = vrcp.pop %v2184
        %v2189 = vrcp.pop %v2185
        %v2190 = vrcp.pop %v2186
        %v2191 = vmul.f32 %v2183, %v2187
        %v2192 = vmul.f32 %v2184, %v2188
        %v2193 = vmul.f32 %v2185, %v2189
        %v2194 = vmul.f32 %v2186, %v2190
        %v2195 = vsub.f32 2.0, %v2191
        %v2196 = vsub.f32 2.0, %v2192
        %v2197 = vsub.f32 2.0, %v2193
        %v2198 = vsub.f32 2.0, %v2194
        %v2199 = vmul.f32 %v2187, %v2195
        %v2200 = vmul.f32 %v2188, %v2196
        %v2201 = vmul.f32 %v2189, %v2197
        %v2202 = vmul.f32 %v2190, %v2198
        %vm2203 = vcmp.ge.f32.partialorder %v2137, 0.0
        %vm2204 = vcmp.ge.f32.partialorder %v2142, 0.0
        %vm2205 = vcmp.ge.f32.partialorder %v2147, 0.0
        %vm2206 = vcmp.ge.f32.partialorder %v2152, 0.0
        %v2207 = vmul.f32 %v2137, %v2199
        %v2208 = vmul.f32 %v2142, %v2200
        %v2209 = vmul.f32 %v2147, %v2201
        %v2210 = vmul.f32 %v2152, %v2202
        %v2211 = vsel %vm2203, %v2175, %v2207
        %v2212 = vsel %vm2204, %v2176, %v2208
        %v2213 = vsel %vm2205, %v2177, %v2209
        %v2214 = vsel %vm2206, %v2178, %v2210
        %v2215 = vadd.f32 %v2211, %v1841
        %v2216 = vadd.f32 %v2212, %v1842
        %v2217 = vadd.f32 %v2213, %v1843
        %v2218 = vadd.f32 %v2214, %v1844
        %v2219 = vld [vmem:[%s997] sm:$0xff]
        %v2220 = vld [vmem:[%s997 + $0x8] sm:$0xff]
        %v2221 = vld [vmem:[%s997 + $0x10] sm:$0xff]
        %v2222 = vld [vmem:[%s997 + $0x18] sm:$0xff]
        %v2223 = vld [vmem:[%s1002] sm:$0xff]
        %v2224 = vld [vmem:[%s1002 + $0x8] sm:$0xff]
        %v2225 = vld [vmem:[%s1002 + $0x10] sm:$0xff]
        %v2226 = vld [vmem:[%s1002 + $0x18] sm:$0xff]
        %2228 = vset.pattern.permute.xlu0 0
        %2229 = vperm.xlu0 %2228, %v2223
        %v2230 = vpop.permute.xlu0 %2229
        %2233 = vset.pattern.permute.xlu0 0
        %2234 = vperm.xlu0 %2233, %v2224
        %v2235 = vpop.permute.xlu0 %2234
        %2238 = vset.pattern.permute.xlu0 0
        %2239 = vperm.xlu0 %2238, %v2225
        %v2240 = vpop.permute.xlu0 %2239
        %2243 = vset.pattern.permute.xlu0 0
        %2244 = vperm.xlu0 %2243, %v2226
        %v2245 = vpop.permute.xlu0 %2244
        %v2248 = vsel %vm457, %v2219, 0
        %v2251 = vsel %vm457, %v2220, 0
        %v2254 = vsel %vm457, %v2221, 0
        %v2257 = vsel %vm457, %v2222, 0
        %2259 = vmatprep.subr.mxu0 0.0
        %2260 = vmatpush1.msra.mxu0 %v2215
        %2261 = vmatprep.subr.mxu0 0.0
        %2262 = vmatpush1.msra.mxu0 %v2216
        %2263 = vmatprep.subr.mxu0 0.0
        %2264 = vmatpush1.msra.mxu0 %v2217
        %2265 = vmatprep.subr.mxu0 0.0
        %2266 = vmatpush1.msra.mxu0 %v2218
        %2267 = vmatprep.subr.mxu0 0.0
        %2268 = vmatpush1.msra.mxu0 0.0
        %2269 = vmatprep.subr.mxu0 0.0
        %2270 = vmatpush1.msra.mxu0 0.0
        %2271 = vmatprep.subr.mxu0 0.0
        %2272 = vmatpush1.msra.mxu0 0.0
        %2273 = vmatprep.subr.mxu0 0.0
        %2274 = vmatpush1.msra.mxu0 0.0
        %2275 = vmatprep.subr.mxu0 0.0
        %2276 = vmatpush1.msra.mxu0 0.0
        %2277 = vmatprep.subr.mxu0 0.0
        %2278 = vmatpush1.msra.mxu0 0.0
        %2279 = vmatprep.subr.mxu0 0.0
        %2280 = vmatpush1.msra.mxu0 0.0
        %2281 = vmatprep.subr.mxu0 0.0
        %2282 = vmatpush1.msra.mxu0 0.0
        %2283 = vmatprep.subr.mxu0 0.0
        %2284 = vmatpush1.msra.mxu0 0.0
        %2285 = vmatprep.subr.mxu0 0.0
        %2286 = vmatpush1.msra.mxu0 0.0
        %2287 = vmatprep.subr.mxu0 0.0
        %2288 = vmatpush1.msra.mxu0 0.0
        %2289 = vmatprep.subr.mxu0 0.0
        %2290 = vmatpush1.msra.mxu0 0.0
        %2291 = vmatprep.subr.mxu0 0.0
        %2292 = vmatpush1.msra.mxu0 0.0
        %2293 = vmatprep.subr.mxu0 0.0
        %2294 = vmatpush1.msra.mxu0 0.0
        %2295 = vmatprep.subr.mxu0 0.0
        %2296 = vmatpush1.msra.mxu0 0.0
        %2297 = vmatprep.subr.mxu0 0.0
        %2298 = vmatpush1.msra.mxu0 0.0
        %2299 = vmatprep.subr.mxu0 0.0
        %2300 = vmatpush1.msra.mxu0 0.0
        %2301 = vmatprep.subr.mxu0 0.0
        %2302 = vmatpush1.msra.mxu0 0.0
        %2303 = vmatprep.subr.mxu0 0.0
        %2304 = vmatpush1.msra.mxu0 0.0
        %2305 = vmatprep.subr.mxu0 0.0
        %2306 = vmatpush1.msra.mxu0 0.0
        %2307 = vmatprep.subr.mxu0 0.0
        %2308 = vmatpush1.msra.mxu0 0.0
        %2309 = vmatprep.subr.mxu0 0.0
        %2310 = vmatpush1.msra.mxu0 0.0
        %2311 = vmatprep.subr.mxu0 0.0
        %2312 = vmatpush1.msra.mxu0 0.0
        %2313 = vmatprep.subr.mxu0 0.0
        %2314 = vmatpush1.msra.mxu0 0.0
        %2315 = vmatprep.subr.mxu0 0.0
        %2316 = vmatpush1.msra.mxu0 0.0
        %2317 = vmatprep.subr.mxu0 0.0
        %2318 = vmatpush1.msra.mxu0 0.0
        %2319 = vmatprep.subr.mxu0 0.0
        %2320 = vmatpush1.msra.mxu0 0.0
        %2321 = vmatprep.subr.mxu0 0.0
        %2322 = vmatpush1.msra.mxu0 0.0
        %2323 = vmatprep.mubr.f32.mxu0 0.0
        %2324 = vmatmul.mubr.f32.gmra.mrb[0].mxu0 %v2248
        %v2325 = vpop.f32.mrb[0].mxu0
        %v2326 = vadd.f32 %v2230, %v2325
        %v2327 = vpop.f32.mrb[0].mxu0
        %2328 = vmatprep.mubr.f32.mxu0 0.0
        %2329 = vmatmul.mubr.f32.gmra.mrb[0].mxu0 %v2251
        %v2330 = vpop.f32.mrb[0].mxu0
        %v2331 = vadd.f32 %v2235, %v2330
        %v2332 = vpop.f32.mrb[0].mxu0
        %2333 = vmatprep.mubr.f32.mxu0 0.0
        %2334 = vmatmul.mubr.f32.gmra.mrb[0].mxu0 %v2254
        %v2335 = vpop.f32.mrb[0].mxu0
        %v2336 = vadd.f32 %v2240, %v2335
        %v2337 = vpop.f32.mrb[0].mxu0
        %2338 = vmatprep.mubr.f32.mxu0 0.0
        %2339 = vmatmul.mubr.f32.gmra.mrb[0].mxu0 %v2257
        %v2340 = vpop.f32.mrb[0].mxu0
        %v2341 = vadd.f32 %v2245, %v2340
        %v2342 = vpop.f32.mrb[0].mxu0
        %2343 = vdwg.mxu0
        %v2344 = vadd.f32 %v2326, 1.0
        %v2345 = vadd.f32 %v2331, 1.0
        %v2346 = vadd.f32 %v2336, 1.0
        %v2347 = vadd.f32 %v2341, 1.0
        %v2348 = vmul.f32 %v2344, 0.5
        %v2349 = vmul.f32 %v2345, 0.5
        %v2350 = vmul.f32 %v2346, 0.5
        %v2351 = vmul.f32 %v2347, 0.5
        %v2352 = vfloor.f32 %v2348
        %v2353 = vfloor.f32 %v2349
        %v2354 = vfloor.f32 %v2350
        %v2355 = vfloor.f32 %v2351
        %v2356 = vmul.f32 %v2352, 2.0
        %v2357 = vmul.f32 %v2353, 2.0
        %v2358 = vmul.f32 %v2354, 2.0
        %v2359 = vmul.f32 %v2355, 2.0
        %v2360 = vsub.f32 %v2326, %v2356
        %v2361 = vsub.f32 %v2331, %v2357
        %v2362 = vsub.f32 %v2336, %v2358
        %v2363 = vsub.f32 %v2341, %v2359
        %v2364 = vand.u32 2147483647, %v2360
        %v2365 = vand.u32 2147483647, %v2361
        %v2366 = vand.u32 2147483647, %v2362
        %v2367 = vand.u32 2147483647, %v2363
        %v2368 = vand.u32 2147483647, %v2326
        %v2369 = vand.u32 2147483647, %v2331
        %v2370 = vand.u32 2147483647, %v2336
        %v2371 = vand.u32 2147483647, %v2341
        %v2372 = vadd.f32 %v2368, 1.0
        %v2373 = vadd.f32 %v2369, 1.0
        %v2374 = vadd.f32 %v2370, 1.0
        %v2375 = vadd.f32 %v2371, 1.0
        %v2376 = vrcp.pop %v2372
        %v2377 = vrcp.pop %v2373
        %v2378 = vrcp.pop %v2374
        %v2379 = vrcp.pop %v2375
        %v2380 = vmul.f32 %v2372, %v2376
        %v2381 = vmul.f32 %v2373, %v2377
        %v2382 = vmul.f32 %v2374, %v2378
        %v2383 = vmul.f32 %v2375, %v2379
        %v2384 = vsub.f32 2.0, %v2380
        %v2385 = vsub.f32 2.0, %v2381
        %v2386 = vsub.f32 2.0, %v2382
        %v2387 = vsub.f32 2.0, %v2383
        %v2388 = vmul.f32 %v2376, %v2384
        %v2389 = vmul.f32 %v2377, %v2385
        %v2390 = vmul.f32 %v2378, %v2386
        %v2391 = vmul.f32 %v2379, %v2387
        %vm2392 = vcmp.ge.f32.partialorder %v2326, 0.0
        %vm2393 = vcmp.ge.f32.partialorder %v2331, 0.0
        %vm2394 = vcmp.ge.f32.partialorder %v2336, 0.0
        %vm2395 = vcmp.ge.f32.partialorder %v2341, 0.0
        %v2396 = vmul.f32 %v2326, %v2388
        %v2397 = vmul.f32 %v2331, %v2389
        %v2398 = vmul.f32 %v2336, %v2390
        %v2399 = vmul.f32 %v2341, %v2391
        %v2400 = vsel %vm2392, %v2364, %v2396
        %v2401 = vsel %vm2393, %v2365, %v2397
        %v2402 = vsel %vm2394, %v2366, %v2398
        %v2403 = vsel %vm2395, %v2367, %v2399
        %v2404 = vld [vmem:[%s1184] sm:$0xff]
        %v2405 = vld [vmem:[%s1184 + $0x8] sm:$0xff]
        %v2406 = vld [vmem:[%s1184 + $0x10] sm:$0xff]
        %v2407 = vld [vmem:[%s1184 + $0x18] sm:$0xff]
        %v2408 = vld [vmem:[%s1189] sm:$0xff]
        %v2409 = vld [vmem:[%s1189 + $0x8] sm:$0xff]
        %v2410 = vld [vmem:[%s1189 + $0x10] sm:$0xff]
        %v2411 = vld [vmem:[%s1189 + $0x18] sm:$0xff]
        %2413 = vset.pattern.permute.xlu0 0
        %2414 = vperm.xlu0 %2413, %v2408
        %v2415 = vpop.permute.xlu0 %2414
        %2418 = vset.pattern.permute.xlu0 0
        %2419 = vperm.xlu0 %2418, %v2409
        %v2420 = vpop.permute.xlu0 %2419
        %2423 = vset.pattern.permute.xlu0 0
        %2424 = vperm.xlu0 %2423, %v2410
        %v2425 = vpop.permute.xlu0 %2424
        %2428 = vset.pattern.permute.xlu0 0
        %2429 = vperm.xlu0 %2428, %v2411
        %v2430 = vpop.permute.xlu0 %2429
        %v2433 = vsel %vm457, %v2404, 0
        %v2436 = vsel %vm457, %v2405, 0
        %v2439 = vsel %vm457, %v2406, 0
        %v2442 = vsel %vm457, %v2407, 0
        %2444 = vmatprep.subr.mxu0 0.0
        %2445 = vmatpush1.msra.mxu0 %v2400
        %2446 = vmatprep.subr.mxu0 0.0
        %2447 = vmatpush1.msra.mxu0 %v2401
        %2448 = vmatprep.subr.mxu0 0.0
        %2449 = vmatpush1.msra.mxu0 %v2402
        %2450 = vmatprep.subr.mxu0 0.0
        %2451 = vmatpush1.msra.mxu0 %v2403
        %2452 = vmatprep.subr.mxu0 0.0
        %2453 = vmatpush1.msra.mxu0 0.0
        %2454 = vmatprep.subr.mxu0 0.0
        %2455 = vmatpush1.msra.mxu0 0.0
        %2456 = vmatprep.subr.mxu0 0.0
        %2457 = vmatpush1.msra.mxu0 0.0
        %2458 = vmatprep.subr.mxu0 0.0
        %2459 = vmatpush1.msra.mxu0 0.0
        %2460 = vmatprep.subr.mxu0 0.0
        %2461 = vmatpush1.msra.mxu0 0.0
        %2462 = vmatprep.subr.mxu0 0.0
        %2463 = vmatpush1.msra.mxu0 0.0
        %2464 = vmatprep.subr.mxu0 0.0
        %2465 = vmatpush1.msra.mxu0 0.0
        %2466 = vmatprep.subr.mxu0 0.0
        %2467 = vmatpush1.msra.mxu0 0.0
        %2468 = vmatprep.subr.mxu0 0.0
        %2469 = vmatpush1.msra.mxu0 0.0
        %2470 = vmatprep.subr.mxu0 0.0
        %2471 = vmatpush1.msra.mxu0 0.0
        %2472 = vmatprep.subr.mxu0 0.0
        %2473 = vmatpush1.msra.mxu0 0.0
        %2474 = vmatprep.subr.mxu0 0.0
        %2475 = vmatpush1.msra.mxu0 0.0
        %2476 = vmatprep.subr.mxu0 0.0
        %2477 = vmatpush1.msra.mxu0 0.0
        %2478 = vmatprep.subr.mxu0 0.0
        %2479 = vmatpush1.msra.mxu0 0.0
        %2480 = vmatprep.subr.mxu0 0.0
        %2481 = vmatpush1.msra.mxu0 0.0
        %2482 = vmatprep.subr.mxu0 0.0
        %2483 = vmatpush1.msra.mxu0 0.0
        %2484 = vmatprep.subr.mxu0 0.0
        %2485 = vmatpush1.msra.mxu0 0.0
        %2486 = vmatprep.subr.mxu0 0.0
        %2487 = vmatpush1.msra.mxu0 0.0
        %2488 = vmatprep.subr.mxu0 0.0
        %2489 = vmatpush1.msra.mxu0 0.0
        %2490 = vmatprep.subr.mxu0 0.0
        %2491 = vmatpush1.msra.mxu0 0.0
        %2492 = vmatprep.subr.mxu0 0.0
        %2493 = vmatpush1.msra.mxu0 0.0
        %2494 = vmatprep.subr.mxu0 0.0
        %2495 = vmatpush1.msra.mxu0 0.0
        %2496 = vmatprep.subr.mxu0 0.0
        %2497 = vmatpush1.msra.mxu0 0.0
        %2498 = vmatprep.subr.mxu0 0.0
        %2499 = vmatpush1.msra.mxu0 0.0
        %2500 = vmatprep.subr.mxu0 0.0
        %2501 = vmatpush1.msra.mxu0 0.0
        %2502 = vmatprep.subr.mxu0 0.0
        %2503 = vmatpush1.msra.mxu0 0.0
        %2504 = vmatprep.subr.mxu0 0.0
        %2505 = vmatpush1.msra.mxu0 0.0
        %2506 = vmatprep.subr.mxu0 0.0
        %2507 = vmatpush1.msra.mxu0 0.0
        %2508 = vmatprep.mubr.f32.mxu0 0.0
        %2509 = vmatmul.mubr.f32.gmra.mrb[0].mxu0 %v2433
        %v2510 = vpop.f32.mrb[0].mxu0
        %v2511 = vadd.f32 %v2415, %v2510
        %v2512 = vpop.f32.mrb[0].mxu0
        %2513 = vmatprep.mubr.f32.mxu0 0.0
        %2514 = vmatmul.mubr.f32.gmra.mrb[0].mxu0 %v2436
        %v2515 = vpop.f32.mrb[0].mxu0
        %v2516 = vadd.f32 %v2420, %v2515
        %v2517 = vpop.f32.mrb[0].mxu0
        %2518 = vmatprep.mubr.f32.mxu0 0.0
        %2519 = vmatmul.mubr.f32.gmra.mrb[0].mxu0 %v2439
        %v2520 = vpop.f32.mrb[0].mxu0
        %v2521 = vadd.f32 %v2425, %v2520
        %v2522 = vpop.f32.mrb[0].mxu0
        %2523 = vmatprep.mubr.f32.mxu0 0.0
        %2524 = vmatmul.mubr.f32.gmra.mrb[0].mxu0 %v2442
        %v2525 = vpop.f32.mrb[0].mxu0
        %v2526 = vadd.f32 %v2430, %v2525
        %v2527 = vpop.f32.mrb[0].mxu0
        %2528 = vdwg.mxu0
        %v2529 = vadd.f32 %v2511, 1.0
        %v2530 = vadd.f32 %v2516, 1.0
        %v2531 = vadd.f32 %v2521, 1.0
        %v2532 = vadd.f32 %v2526, 1.0
        %v2533 = vmul.f32 %v2529, 0.5
        %v2534 = vmul.f32 %v2530, 0.5
        %v2535 = vmul.f32 %v2531, 0.5
        %v2536 = vmul.f32 %v2532, 0.5
        %v2537 = vfloor.f32 %v2533
        %v2538 = vfloor.f32 %v2534
        %v2539 = vfloor.f32 %v2535
        %v2540 = vfloor.f32 %v2536
        %v2541 = vmul.f32 %v2537, 2.0
        %v2542 = vmul.f32 %v2538, 2.0
        %v2543 = vmul.f32 %v2539, 2.0
        %v2544 = vmul.f32 %v2540, 2.0
        %v2545 = vsub.f32 %v2511, %v2541
        %v2546 = vsub.f32 %v2516, %v2542
        %v2547 = vsub.f32 %v2521, %v2543
        %v2548 = vsub.f32 %v2526, %v2544
        %v2549 = vand.u32 2147483647, %v2545
        %v2550 = vand.u32 2147483647, %v2546
        %v2551 = vand.u32 2147483647, %v2547
        %v2552 = vand.u32 2147483647, %v2548
        %v2553 = vand.u32 2147483647, %v2511
        %v2554 = vand.u32 2147483647, %v2516
        %v2555 = vand.u32 2147483647, %v2521
        %v2556 = vand.u32 2147483647, %v2526
        %v2557 = vadd.f32 %v2553, 1.0
        %v2558 = vadd.f32 %v2554, 1.0
        %v2559 = vadd.f32 %v2555, 1.0
        %v2560 = vadd.f32 %v2556, 1.0
        %v2561 = vrcp.pop %v2557
        %v2562 = vrcp.pop %v2558
        %v2563 = vrcp.pop %v2559
        %v2564 = vrcp.pop %v2560
        %v2565 = vmul.f32 %v2557, %v2561
        %v2566 = vmul.f32 %v2558, %v2562
        %v2567 = vmul.f32 %v2559, %v2563
        %v2568 = vmul.f32 %v2560, %v2564
        %v2569 = vsub.f32 2.0, %v2565
        %v2570 = vsub.f32 2.0, %v2566
        %v2571 = vsub.f32 2.0, %v2567
        %v2572 = vsub.f32 2.0, %v2568
        %v2573 = vmul.f32 %v2561, %v2569
        %v2574 = vmul.f32 %v2562, %v2570
        %v2575 = vmul.f32 %v2563, %v2571
        %v2576 = vmul.f32 %v2564, %v2572
        %vm2577 = vcmp.ge.f32.partialorder %v2511, 0.0
        %vm2578 = vcmp.ge.f32.partialorder %v2516, 0.0
        %vm2579 = vcmp.ge.f32.partialorder %v2521, 0.0
        %vm2580 = vcmp.ge.f32.partialorder %v2526, 0.0
        %v2581 = vmul.f32 %v2511, %v2573
        %v2582 = vmul.f32 %v2516, %v2574
        %v2583 = vmul.f32 %v2521, %v2575
        %v2584 = vmul.f32 %v2526, %v2576
        %v2585 = vsel %vm2577, %v2549, %v2581
        %v2586 = vsel %vm2578, %v2550, %v2582
        %v2587 = vsel %vm2579, %v2551, %v2583
        %v2588 = vsel %vm2580, %v2552, %v2584
        %v2589 = vadd.f32 %v2585, %v2215
        %v2590 = vadd.f32 %v2586, %v2216
        %v2591 = vadd.f32 %v2587, %v2217
        %v2592 = vadd.f32 %v2588, %v2218
        %v2593 = vld [vmem:[%s4] sm:$0x1]
        %v2595 = vsel %vm457, %v2593, 0
        %2597 = vmatprep.subr.mxu0 0.0
        %2598 = vmatpush1.msra.mxu0 %v2589
        %2599 = vmatprep.subr.mxu0 0.0
        %2600 = vmatpush1.msra.mxu0 %v2590
        %2601 = vmatprep.subr.mxu0 0.0
        %2602 = vmatpush1.msra.mxu0 %v2591
        %2603 = vmatprep.subr.mxu0 0.0
        %2604 = vmatpush1.msra.mxu0 %v2592
        %2605 = vmatprep.subr.mxu0 0.0
        %2606 = vmatpush1.msra.mxu0 0.0
        %2607 = vmatprep.subr.mxu0 0.0
        %2608 = vmatpush1.msra.mxu0 0.0
        %2609 = vmatprep.subr.mxu0 0.0
        %2610 = vmatpush1.msra.mxu0 0.0
        %2611 = vmatprep.subr.mxu0 0.0
        %2612 = vmatpush1.msra.mxu0 0.0
        %2613 = vmatprep.subr.mxu0 0.0
        %2614 = vmatpush1.msra.mxu0 0.0
        %2615 = vmatprep.subr.mxu0 0.0
        %2616 = vmatpush1.msra.mxu0 0.0
        %2617 = vmatprep.subr.mxu0 0.0
        %2618 = vmatpush1.msra.mxu0 0.0
        %2619 = vmatprep.subr.mxu0 0.0
        %2620 = vmatpush1.msra.mxu0 0.0
        %2621 = vmatprep.subr.mxu0 0.0
        %2622 = vmatpush1.msra.mxu0 0.0
        %2623 = vmatprep.subr.mxu0 0.0
        %2624 = vmatpush1.msra.mxu0 0.0
        %2625 = vmatprep.subr.mxu0 0.0
        %2626 = vmatpush1.msra.mxu0 0.0
        %2627 = vmatprep.subr.mxu0 0.0
        %2628 = vmatpush1.msra.mxu0 0.0
        %2629 = vmatprep.subr.mxu0 0.0
        %2630 = vmatpush1.msra.mxu0 0.0
        %2631 = vmatprep.subr.mxu0 0.0
        %2632 = vmatpush1.msra.mxu0 0.0
        %2633 = vmatprep.subr.mxu0 0.0
        %2634 = vmatpush1.msra.mxu0 0.0
        %2635 = vmatprep.subr.mxu0 0.0
        %2636 = vmatpush1.msra.mxu0 0.0
        %2637 = vmatprep.subr.mxu0 0.0
        %2638 = vmatpush1.msra.mxu0 0.0
        %2639 = vmatprep.subr.mxu0 0.0
        %2640 = vmatpush1.msra.mxu0 0.0
        %2641 = vmatprep.subr.mxu0 0.0
        %2642 = vmatpush1.msra.mxu0 0.0
        %2643 = vmatprep.subr.mxu0 0.0
        %2644 = vmatpush1.msra.mxu0 0.0
        %2645 = vmatprep.subr.mxu0 0.0
        %2646 = vmatpush1.msra.mxu0 0.0
        %2647 = vmatprep.subr.mxu0 0.0
        %2648 = vmatpush1.msra.mxu0 0.0
        %2649 = vmatprep.subr.mxu0 0.0
        %2650 = vmatpush1.msra.mxu0 0.0
        %2651 = vmatprep.subr.mxu0 0.0
        %2652 = vmatpush1.msra.mxu0 0.0
        %2653 = vmatprep.subr.mxu0 0.0
        %2654 = vmatpush1.msra.mxu0 0.0
        %2655 = vmatprep.subr.mxu0 0.0
        %2656 = vmatpush1.msra.mxu0 0.0
        %2657 = vmatprep.subr.mxu0 0.0
        %2658 = vmatpush1.msra.mxu0 0.0
        %2659 = vmatprep.subr.mxu0 0.0
        %2660 = vmatpush1.msra.mxu0 0.0
        %2661 = vmatprep.mubr.f32.mxu0 0.0
        %2662 = vmatmul.mubr.f32.gmra.mrb[0].mxu0 %v2595
        %v2663 = vpop.f32.mrb[0].mxu0
        %v2664 = vadd.f32 0.0, %v2663
        %v2665 = vpop.f32.mrb[0].mxu0
        %2666 = vdwg.mxu0
        %s2667 = scalar_lea.vmem %s218, 1 [#allocation2]
        %2668 = vst.msk [vmem:[%s2667] sm:$0x1] %vm1452, %v2664
        %s2669 = sand.u32 %s137, 1
        %s2670 = scalar_lea.sflag [#allocation3], %s2669
        %s2671 = sand.u32 %s137, 1
        %s2672 = smul.addr %s2671, 2
        %s2673 = scalar_lea.vmem [#allocation2], %s2672
        // Predicated region
        $region41: #{tpu_custom_call.1} parent=39 // pred_check
          %p2674 = pneg %p147
        $region42: #{tpu_custom_call.1} parent=39 // pred_check_branch
          %2676 = sbr.rel (%p2674) target = $region44
        $region43: #{tpu_custom_call.1} parent=39 // pred_region
          %s2677 = smul.u32 2, %s19
          %s2679 = ssub.s32 32, 32
          %2680 = vsyncadd %s2670, %s2679
          %s2681 = smul.addr %s2677, 16
          %s2682 = scalar_lea.hbm %s5, %s2681
          %s2684 = sshll.u32 %s2673, 4
          %s2685 = int_to_ptr.vmem [resolvable:$true] %s2684
          %2687 = dma.vmem_to_hbm [thread:$0]  %s2685, 32, %s2682, %s2670
        $region44: #{tpu_custom_call.1} parent=39 // pred_fallthru
          _
      $region40: #{tpu_custom_call.1} parent=5 // pred_fallthru
        _
      %p2688 = scmp.le.s32.totalorder 2, %s14
      // Predicated region
      $region45: #{tpu_custom_call.1} parent=5 // pred_check
        %p2689 = pneg %p2688
      $region46: #{tpu_custom_call.1} parent=5 // pred_check_branch
        %2691 = sbr.rel (%p2689) target = $region48
      $region47: #{tpu_custom_call.1} parent=5 // pred_region
        %s2692 = ssub.s32 %s14, 2
        // Predicated region
        $region49: #{tpu_custom_call.1} parent=47 // pred_check
          %p2693 = pneg %p153
        $region50: #{tpu_custom_call.1} parent=47 // pred_check_branch
          %2695 = sbr.rel (%p2693) target = $region52
        $region51: #{tpu_custom_call.1} parent=47 // pred_region
          %s2696 = sand.u32 %s138, 1
          %s2697 = scalar_lea.sflag [#allocation3], %s2696
          %s2698 = sand.u32 %s138, 1
          %s2699 = smul.addr %s2698, 2
          %s2700 = scalar_lea.vmem [#allocation2], %s2699
          %2701 = dma.done %s2697, 32
        $region52: #{tpu_custom_call.1} parent=47 // pred_fallthru
          _
      $region48: #{tpu_custom_call.1} parent=5 // pred_fallthru
        _
    $region6: #{tpu_custom_call.1} parent=1 // loop_footer
      %s18 = sadd.s32 1, %s14
    $region7: #{tpu_custom_call.1} parent=1 // loop_footer_branch
      %13 = sbr.rel target = $region3
    $region8: #{tpu_custom_call.1} parent=1 // loop_exit
      _
    %2702 = vsyncpa [#allocation3], 1
    %s2703 = scalar_lea.sflag [#allocation3], 1
    %2704 = vsyncpa %s2703, 1

</llo_original>
